<compile_context>
chip_gen: v7x
topology: tpu7x:2x2x1
jax: 0.10.0
libtpu: 0.0.40
codegen_flags: <defaults>
</compile_context>

<pallas_src>
import functools
import math

import jax
import jax.numpy as jnp
from jax.experimental import pallas as pl
from jax.experimental.pallas import tpu as pltpu

# ---------------- small synthetic configuration (AVES-base scaled down, lane-dense) ---
B = 2                                      # batch
T_AUDIO = 160                              # raw audio samples
CONV_LAYERS = [(128, 10, 5), (128, 4, 2)]  # (out_channels, kernel, stride) -- frozen
D = 128                                    # embedding dim (multiple of 128 -> lane dense)
H = 4                                      # attention heads
HEAD_DIM = D // H
FFN = 256                                  # feed-forward inner dim (multiple of 128)
NUM_ENC_LAYERS = 2                         # transformer encoder layers
EPS = 1e-5


# ================================ in-kernel helpers ==================================
def _ln(x, g, b, eps):
    """LayerNorm on an f32 value (statistics in f32)."""
    mu = jnp.mean(x, axis=-1, keepdims=True)
    var = jnp.mean(jnp.square(x - mu), axis=-1, keepdims=True)
    return (x - mu) * jax.lax.rsqrt(var + eps) * g + b


def _gelu(x):
    # TODO(synk): PyTorch/fairseq use erf-exact GELU; tanh approximation used here.
    return jax.nn.gelu(x, approximate=True)


# ============================ conv (fused window-gather + matmul + GELU) =============
def _conv_gelu_kernel(x_ref, w_ref, b_ref, o_ref, *, q_taps, k_cin):
    """Input block is the audio viewed as (Tout+Q-1, stride*Cin); the overlapping
    window gather is Q shifted row-slices concatenated along lanes (all in VMEM)."""
    xv = x_ref[0]                                   # (Tout+Q-1, s*Cin)
    t_out = o_ref.shape[1]
    cols = [xv[i:i + t_out, :] for i in range(q_taps)]
    patch = cols[0] if q_taps == 1 else jnp.concatenate(cols, axis=-1)
    if patch.shape[1] != k_cin:                     # only when kernel % stride != 0
        patch = patch[:, :k_cin]
    y = jnp.dot(patch.astype(jnp.bfloat16), w_ref[...],
                preferred_element_type=jnp.float32) + b_ref[...]
    o_ref[0] = _gelu(y).astype(o_ref.dtype)


def pallas_conv_gelu(x_btc, w_flat, bias, kernel, stride):
    """Conv1d (frozen wav2vec2 extractor) + GELU, channel-last, one kernel per layer.
    The only host-side op is a metadata reshape of the input to (T/stride, stride*Cin)
    rows (plus a tiny row trim when needed); no K-times im2col copy ever hits HBM."""
    Bn, Tin, Cin = x_btc.shape
    Cout = w_flat.shape[1]
    Tout = (Tin - kernel) // stride + 1
    q_taps = -(-kernel // stride)                   # ceil(kernel / stride)
    rows = (Tout + q_taps - 1) * stride             # samples needed for the view
    if rows > Tin:                                  # not hit for this config
        x_btc = jnp.pad(x_btc, ((0, 0), (0, rows - Tin), (0, 0)))
    xw = x_btc[:, :rows, :].reshape(Bn, Tout + q_taps - 1, stride * Cin)

    kern = functools.partial(_conv_gelu_kernel, q_taps=q_taps, k_cin=kernel * Cin)
    return pl.pallas_call(
        kern,
        out_shape=jax.ShapeDtypeStruct((Bn, Tout, Cout), jnp.bfloat16),
        grid=(Bn,),
        in_specs=[
            pl.BlockSpec((1, Tout + q_taps - 1, stride * Cin), lambda b: (b, 0, 0)),
            pl.BlockSpec((kernel * Cin, Cout), lambda b: (0, 0)),
            pl.BlockSpec((1, Cout), lambda b: (0, 0)),
        ],
        out_specs=pl.BlockSpec((1, Tout, Cout), lambda b: (b, 0, 0)),
        compiler_params=pltpu.CompilerParams(dimension_semantics=("parallel",)),
    )(xw, w_flat, bias)


# ==================== feature-LN + post_extract_proj + encoder pre-LN ================
def _featproj_kernel(f_ref, fg_ref, fb_ref, w_ref, pb_ref, eg_ref, eb_ref,
                     emb_ref, xenc_ref, *, eps):
    """Fused: feature-LN -> post_extract_proj ('embedding_layer' hook, f32)
    -> encoder pre-LN (encoder input, bf16)."""
    f = _ln(f_ref[0].astype(jnp.float32), fg_ref[...], fb_ref[...], eps)
    emb = jnp.dot(f.astype(jnp.bfloat16), w_ref[...],
                  preferred_element_type=jnp.float32) + pb_ref[...]
    emb_ref[0] = emb
    xenc_ref[0] = _ln(emb, eg_ref[...], eb_ref[...], eps).astype(xenc_ref.dtype)


def pallas_featproj(feats, fg, fb, w_bf16, pb, eg, eb):
    Bn, Tf, Cf = feats.shape
    N = w_bf16.shape[1]
    emb, xenc = pl.pallas_call(
        functools.partial(_featproj_kernel, eps=EPS),
        out_shape=(jax.ShapeDtypeStruct((Bn, Tf, N), jnp.float32),
                   jax.ShapeDtypeStruct((Bn, Tf, N), jnp.bfloat16)),
        grid=(Bn,),
        in_specs=[
            pl.BlockSpec((1, Tf, Cf), lambda b: (b, 0, 0)),
            pl.BlockSpec((1, Cf), lambda b: (0, 0)),
            pl.BlockSpec((1, Cf), lambda b: (0, 0)),
            pl.BlockSpec((Cf, N), lambda b: (0, 0)),
            pl.BlockSpec((1, N), lambda b: (0, 0)),
            pl.BlockSpec((1, N), lambda b: (0, 0)),
            pl.BlockSpec((1, N), lambda b: (0, 0)),
        ],
        out_specs=[pl.BlockSpec((1, Tf, N), lambda b: (b, 0, 0)),
                   pl.BlockSpec((1, Tf, N), lambda b: (b, 0, 0))],
        compiler_params=pltpu.CompilerParams(dimension_semantics=("parallel",)),
    )(feats, fg, fb, w_bf16, pb, eg, eb)
    return emb, xenc


# ================================ fused encoder layer ================================
def _encoder_layer_kernel(x_ref, wqkv_ref, bqkv_ref, wo_ref, bo_ref,
                          ln1_g_ref, ln1_b_ref, w1_ref, b1_ref,
                          w2_ref, b2_ref, ln2_g_ref, ln2_b_ref,
                          o_ref, *, eps, num_heads, head_dim):
    """Whole wav2vec2-base (post-LN) encoder layer for one batch element, fused:
    QKV proj + batched multi-head attention + out proj + residual/LN + FFN + residual/LN."""
    x_bf = x_ref[0]                                       # (T, D) bf16
    seq = x_bf.shape[0]
    d_model = num_heads * head_dim

    # ---- fused QKV projection (1/sqrt(head_dim) folded into the Q weights) ----
    qkv = jnp.dot(x_bf, wqkv_ref[...],
                  preferred_element_type=jnp.float32) + bqkv_ref[...]   # (T, 3D) f32

    def to_heads(z):                                      # (T, D) f32 -> (H, T, hd) bf16
        return z.reshape(seq, num_heads, head_dim).transpose(1, 0, 2).astype(jnp.bfloat16)

    q = to_heads(qkv[:, :d_model])
    k = to_heads(qkv[:, d_model:2 * d_model])
    v = to_heads(qkv[:, 2 * d_model:])

    # ---- all heads in one pair of batched matmuls (lane-dense, no per-head slices) ----
    s = jnp.einsum('hqd,hkd->hqk', q, k,
                   preferred_element_type=jnp.float32)    # (H, T, T) f32
    m = jnp.max(s, axis=-1, keepdims=True)
    p = jnp.exp(s - m)
    p = p * pl.reciprocal(jnp.sum(p, axis=-1, keepdims=True), approx=True)
    ctx = jnp.einsum('hqk,hkd->hqd', p.astype(jnp.bfloat16), v,
                     preferred_element_type=jnp.float32)  # (H, T, hd) f32
    ctx = ctx.transpose(1, 0, 2).reshape(seq, d_model)    # (T, D) f32, one relayout

    attn = jnp.dot(ctx.astype(jnp.bfloat16), wo_ref[...],
                   preferred_element_type=jnp.float32) + bo_ref[...]

    # ---- residual + LN1 (f32) ----
    y = _ln(x_bf.astype(jnp.float32) + attn, ln1_g_ref[...], ln1_b_ref[...], eps)

    # ---- feed-forward + residual + LN2 (f32 epilogues, bf16 MXU operands) ----
    h1 = jnp.dot(y.astype(jnp.bfloat16), w1_ref[...],
                 preferred_element_type=jnp.float32) + b1_ref[...]
    h1 = _gelu(h1)
    ffn = jnp.dot(h1.astype(jnp.bfloat16), w2_ref[...],
                  preferred_element_type=jnp.float32) + b2_ref[...]
    o_ref[0] = _ln(y + ffn, ln2_g_ref[...], ln2_b_ref[...], eps).astype(o_ref.dtype)


def pallas_encoder_layer(x_btd, lp):
    """One fused pallas_call per encoder layer; grid over batch (parallel -> megacore).
    Activations are bf16 in HBM; weights bf16; biases/LN params f32 (1, N).
    TODO(synk): add a query-block grid axis + K/FFN tiling for real T / v7x VMEM."""
    Bn, T, Dm = x_btd.shape
    kern = functools.partial(_encoder_layer_kernel, eps=EPS,
                             num_heads=H, head_dim=HEAD_DIM)
    return pl.pallas_call(
        kern,
        out_shape=jax.ShapeDtypeStruct((Bn, T, Dm), jnp.bfloat16),
        grid=(Bn,),
        in_specs=[
            pl.BlockSpec((1, T, Dm), lambda b: (b, 0, 0)),
            pl.BlockSpec((Dm, 3 * Dm), lambda b: (0, 0)),
            pl.BlockSpec((1, 3 * Dm), lambda b: (0, 0)),
            pl.BlockSpec((Dm, Dm), lambda b: (0, 0)),
            pl.BlockSpec((1, Dm), lambda b: (0, 0)),
            pl.BlockSpec((1, Dm), lambda b: (0, 0)),
            pl.BlockSpec((1, Dm), lambda b: (0, 0)),
            pl.BlockSpec((Dm, FFN), lambda b: (0, 0)),
            pl.BlockSpec((1, FFN), lambda b: (0, 0)),
            pl.BlockSpec((FFN, Dm), lambda b: (0, 0)),
            pl.BlockSpec((1, Dm), lambda b: (0, 0)),
            pl.BlockSpec((1, Dm), lambda b: (0, 0)),
            pl.BlockSpec((1, Dm), lambda b: (0, 0)),
        ],
        out_specs=pl.BlockSpec((1, T, Dm), lambda b: (b, 0, 0)),
        compiler_params=pltpu.CompilerParams(dimension_semantics=("parallel",)),
    )(x_btd,
      lp["wqkv"], lp["bqkv"], lp["wo"], lp["bo"],
      lp["ln1_g"], lp["ln1_b"], lp["w1"], lp["b1"],
      lp["w2"], lp["b2"], lp["ln2_g"], lp["ln2_b"])


# ================================ full forward =======================================
def aves_forward(params, x):
    """Mirrors AvesClassifier.forward: embedding hook + per-encoder-layer hooks."""
    Bn = x.shape[0]

    # --- frozen conv feature extractor (requires_grad_(False) in the original) ---
    # Channel-last [B, T, C] end-to-end; conv activations stored bf16.
    # TODO(synk): group-norm on the first wav2vec2 conv layer omitted.
    feats = x[:, :, None].astype(jnp.float32)              # [B, T_audio, 1]
    for (cout, k, s), cp in zip(CONV_LAYERS, params["conv"]):
        feats = pallas_conv_gelu(feats, cp["w"], cp["b"], k, s)

    # Fused: feature-LN + post_extract_proj ('embedding_layer' hook, f32) + encoder
    # pre-LN (bf16 encoder input).
    emb, x_btd = pallas_featproj(feats, params["feat_ln_g"], params["feat_ln_b"],
                                 params["proj_w"], params["proj_b"],
                                 params["enc_ln_g"], params["enc_ln_b"])

    # Hooks kept in [B, T, D]; the PyTorch [T,B,D]-stack-then-permute(2,0,1,3) pipeline
    # is reproduced exactly by stacking along axis=1 at the end.
    layer_outputs = [emb]                                   # 'embedding_layer' hook

    # --- transformer encoder: one fused Pallas kernel per layer ---
    # TODO(synk): wav2vec2 positional convolution (pos_conv) and dropout omitted.
    for lp in params["layers"]:
        x_btd = pallas_encoder_layer(x_btd, lp)
        layer_outputs.append(x_btd)                         # 'encoder_layer_i' hook

    # --- hook post-processing (mirrors the PyTorch forward) ---
    # (the 2-D unsqueeze branch never triggers: every hook tensor is 3-D here)
    min_seq_len = min(t.shape[1] for t in layer_outputs)    # == tensor.size(0) in [T,B,D]
    layer_outputs = [t[:, :min_seq_len, :].astype(jnp.float32) for t in layer_outputs]
    return jnp.stack(layer_outputs, axis=1)                 # [B, num_layers, T, D]


# ================================ parameter init =====================================
def init_params(key):
    keys = iter(jax.random.split(key, 128))

    def dense(kin, kout):
        w = jax.random.normal(next(keys), (kin, kout), jnp.float32) * 0.02
        return w, jnp.zeros((1, kout), jnp.float32)

    def ones(n):
        return jnp.ones((1, n), jnp.float32)

    def zeros(n):
        return jnp.zeros((1, n), jnp.float32)

    params = {}
    conv = []
    cin = 1
    for (cout, k, s) in CONV_LAYERS:
        w = jax.random.normal(next(keys), (cout, cin, k), jnp.float32) * 0.02
        # pre-flatten to (K*Cin, Cout) matching the in-kernel window layout; bf16 for MXU
        w_flat = w.transpose(2, 1, 0).reshape(k * cin, cout).astype(jnp.bfloat16)
        conv.append({"w": w_flat, "b": zeros(cout)})
        cin = cout
    params["conv"] = conv
    params["feat_ln_g"] = ones(cin)
    params["feat_ln_b"] = zeros(cin)
    pw, pb = dense(cin, D)
    params["proj_w"] = pw.astype(jnp.bfloat16)
    params["proj_b"] = pb
    params["enc_ln_g"] = ones(D)
    params["enc_ln_b"] = zeros(D)

    scale = 1.0 / math.sqrt(HEAD_DIM)
    layers = []
    for _ in range(NUM_ENC_LAYERS):
        wq, bq = dense(D, D)
        wk, bk = dense(D, D)
        wv, bv = dense(D, D)
        wo, bo = dense(D, D)
        w1, b1 = dense(D, FFN)
        w2, b2 = dense(FFN, D)
        lp = {
            # fused QKV weight, 1/sqrt(head_dim) folded into the Q columns
            "wqkv": jnp.concatenate([wq * scale, wk, wv], axis=1).astype(jnp.bfloat16),
            "bqkv": jnp.concatenate([bq * scale, bk, bv], axis=1),
            "wo": wo.astype(jnp.bfloat16), "bo": bo,
            "ln1_g": ones(D), "ln1_b": zeros(D),
            "w1": w1.astype(jnp.bfloat16), "b1": b1,
            "w2": w2.astype(jnp.bfloat16), "b2": b2,
            "ln2_g": ones(D), "ln2_b": zeros(D),
        }
        layers.append(lp)
    params["layers"] = layers
    return params


if __name__ == "__main__":
    key = jax.random.PRNGKey(0)
    pkey, xkey = jax.random.split(key)
    params = init_params(pkey)
    x = jax.random.normal(xkey, (B, T_AUDIO), jnp.float32)

    fwd = jax.jit(aves_forward)
    out = fwd(params, x)
    out = jax.block_until_ready(out)

    # expected frame count after the conv stack
    t = T_AUDIO
    for (_, k, s) in CONV_LAYERS:
        t = (t - k) // s + 1
    assert out.shape == (B, NUM_ENC_LAYERS + 1, t, D), out.shape
    assert bool(jnp.all(jnp.isfinite(out)))
    print("KERNEL_OK")
</pallas_src>

<mosaic_0001>
module attributes {stable_mosaic.version = 11 : i64} {
  func.func @_conv_gelu_kernel(%arg0: i32, %arg1: memref<1x15x256xbf16, #tpu.memory_space<vmem>>, %arg2: memref<512x128xbf16, #tpu.memory_space<vmem>>, %arg3: memref<1x128xf32, #tpu.memory_space<vmem>>, %arg4: memref<1x14x128xbf16, #tpu.memory_space<vmem>>) attributes {dimension_semantics = [#tpu.dimension_semantics<parallel>], iteration_bounds = array<i64: 2>, scalar_prefetch = 0 : i64, scratch_operands = 0 : i64, tpu.core_type = #tpu.core_type<tc>, window_params = [{transform_indices = @transform_0, window_bounds = array<i64: 1, 15, 256>}, {pipeline_mode = #tpu.pipeline_mode<synchronous>, transform_indices = @transform_1, window_bounds = array<i64: 512, 128>}, {pipeline_mode = #tpu.pipeline_mode<synchronous>, transform_indices = @transform_2, window_bounds = array<i64: 1, 128>}, {transform_indices = @transform_3, window_bounds = array<i64: 1, 14, 128>}]} {
    %c0 = arith.constant 0 : index
    %c0_0 = arith.constant 0 : index
    %c0_1 = arith.constant 0 : index
    %0 = vector.load %arg1[%c0, %c0_0, %c0_1] : memref<1x15x256xbf16, #tpu.memory_space<vmem>>, vector<1x15x256xbf16>
    %1 = vector.shape_cast %0 : vector<1x15x256xbf16> to vector<15x256xbf16>
    %2 = vector.extract_strided_slice %1 {offsets = [0, 0], sizes = [14, 256], strides = [1, 1]} : vector<15x256xbf16> to vector<14x256xbf16>
    %3 = vector.extract_strided_slice %1 {offsets = [1, 0], sizes = [14, 256], strides = [1, 1]} : vector<15x256xbf16> to vector<14x256xbf16>
    %4 = tpu.concatenate %2, %3 in 1 : vector<14x256xbf16>, vector<14x256xbf16> -> vector<14x512xbf16>
    %c0_2 = arith.constant 0 : index
    %c0_3 = arith.constant 0 : index
    %5 = vector.load %arg2[%c0_2, %c0_3] : memref<512x128xbf16, #tpu.memory_space<vmem>>, vector<512x128xbf16>
    %cst = arith.constant dense<0.000000e+00> : vector<14x128xf32>
    %6 = tpu.matmul %4, %5, %cst {dimension_numbers = #tpu.dot_dimension_numbers<[1], [0], [0], [1], [0, 0, 1, 1], [], []>} : vector<14x512xbf16>, vector<512x128xbf16>, vector<14x128xf32> -> vector<14x128xf32>
    %c0_4 = arith.constant 0 : index
    %c0_5 = arith.constant 0 : index
    %7 = vector.load %arg3[%c0_4, %c0_5] : memref<1x128xf32, #tpu.memory_space<vmem>>, vector<1x128xf32>
    %8 = vector.broadcast %7 : vector<1x128xf32> to vector<14x128xf32>
    %9 = arith.addf %6, %8 : vector<14x128xf32>
    %10 = arith.mulf %9, %9 : vector<14x128xf32>
    %11 = arith.mulf %9, %10 : vector<14x128xf32>
    %cst_6 = arith.constant 4.471500e-02 : f32
    %12 = vector.broadcast %cst_6 : f32 to vector<14x128xf32>
    %13 = arith.mulf %12, %11 : vector<14x128xf32>
    %14 = arith.addf %9, %13 : vector<14x128xf32>
    %cst_7 = arith.constant 0.797884583 : f32
    %15 = vector.broadcast %cst_7 : f32 to vector<14x128xf32>
    %16 = arith.mulf %15, %14 : vector<14x128xf32>
    %17 = math.tanh %16 : vector<14x128xf32>
    %cst_8 = arith.constant 1.000000e+00 : f32
    %18 = vector.broadcast %cst_8 : f32 to vector<14x128xf32>
    %19 = arith.addf %18, %17 : vector<14x128xf32>
    %cst_9 = arith.constant 5.000000e-01 : f32
    %20 = vector.broadcast %cst_9 : f32 to vector<14x128xf32>
    %21 = arith.mulf %20, %19 : vector<14x128xf32>
    %22 = arith.mulf %9, %21 : vector<14x128xf32>
    %23 = arith.truncf %22 : vector<14x128xf32> to vector<14x128xbf16>
    %c0_10 = arith.constant 0 : index
    %c0_11 = arith.constant 0 : index
    %c0_12 = arith.constant 0 : index
    %24 = vector.load %arg4[%c0_10, %c0_11, %c0_12] : memref<1x14x128xbf16, #tpu.memory_space<vmem>>, vector<1x14x128xbf16>
    %25 = vector.shape_cast %24 : vector<1x14x128xbf16> to vector<14x128xbf16>
    %26 = vector.shape_cast %23 : vector<14x128xbf16> to vector<1x14x128xbf16>
    tpu.vector_store %arg4[%c0_10, %c0_11, %c0_12], %26 {strides = array<i32>} : memref<1x14x128xbf16, #tpu.memory_space<vmem>>, vector<1x14x128xbf16>,
    return
  }
  func.func @transform_0(%arg0: i32) -> (i32, i32, i32) {
    %c0_i32 = arith.constant 0 : i32
    %c0_i32_0 = arith.constant 0 : i32
    %c0_i32_1 = arith.constant 0 : i32
    return %arg0, %c0_i32, %c0_i32_0 : i32, i32, i32
  }
  func.func @transform_1(%arg0: i32) -> (i32, i32) {
    %c0_i32 = arith.constant 0 : i32
    %c0_i32_0 = arith.constant 0 : i32
    %c0_i32_1 = arith.constant 0 : i32
    return %c0_i32, %c0_i32_0 : i32, i32
  }
  func.func @transform_2(%arg0: i32) -> (i32, i32) {
    %c0_i32 = arith.constant 0 : i32
    %c0_i32_0 = arith.constant 0 : i32
    %c0_i32_1 = arith.constant 0 : i32
    return %c0_i32, %c0_i32_0 : i32, i32
  }
  func.func @transform_3(%arg0: i32) -> (i32, i32, i32) {
    %c0_i32 = arith.constant 0 : i32
    %c0_i32_0 = arith.constant 0 : i32
    %c0_i32_1 = arith.constant 0 : i32
    return %arg0, %c0_i32, %c0_i32_0 : i32, i32, i32
  }
}

module attributes {stable_mosaic.version = 11 : i64} {
  func.func @_conv_gelu_kernel(%arg0: i32, %arg1: memref<1x32x5xf32, #tpu.memory_space<vmem>>, %arg2: memref<10x128xbf16, #tpu.memory_space<vmem>>, %arg3: memref<1x128xf32, #tpu.memory_space<vmem>>, %arg4: memref<1x31x128xbf16, #tpu.memory_space<vmem>>) attributes {dimension_semantics = [#tpu.dimension_semantics<parallel>], iteration_bounds = array<i64: 2>, scalar_prefetch = 0 : i64, scratch_operands = 0 : i64, tpu.core_type = #tpu.core_type<tc>, window_params = [{transform_indices = @transform_0, window_bounds = array<i64: 1, 32, 5>}, {pipeline_mode = #tpu.pipeline_mode<synchronous>, transform_indices = @transform_1, window_bounds = array<i64: 10, 128>}, {pipeline_mode = #tpu.pipeline_mode<synchronous>, transform_indices = @transform_2, window_bounds = array<i64: 1, 128>}, {transform_indices = @transform_3, window_bounds = array<i64: 1, 31, 128>}]} {
    %c0 = arith.constant 0 : index
    %c0_0 = arith.constant 0 : index
    %c0_1 = arith.constant 0 : index
    %0 = vector.load %arg1[%c0, %c0_0, %c0_1] : memref<1x32x5xf32, #tpu.memory_space<vmem>>, vector<1x32x5xf32>
    %1 = vector.shape_cast %0 : vector<1x32x5xf32> to vector<32x5xf32>
    %2 = vector.extract_strided_slice %1 {offsets = [0, 0], sizes = [31, 5], strides = [1, 1]} : vector<32x5xf32> to vector<31x5xf32>
    %3 = vector.extract_strided_slice %1 {offsets = [1, 0], sizes = [31, 5], strides = [1, 1]} : vector<32x5xf32> to vector<31x5xf32>
    %4 = tpu.concatenate %2, %3 in 1 : vector<31x5xf32>, vector<31x5xf32> -> vector<31x10xf32>
    %5 = arith.truncf %4 : vector<31x10xf32> to vector<31x10xbf16>
    %c0_2 = arith.constant 0 : index
    %c0_3 = arith.constant 0 : index
    %6 = vector.load %arg2[%c0_2, %c0_3] : memref<10x128xbf16, #tpu.memory_space<vmem>>, vector<10x128xbf16>
    %cst = arith.constant dense<0.000000e+00> : vector<31x128xf32>
    %7 = tpu.matmul %5, %6, %cst {dimension_numbers = #tpu.dot_dimension_numbers<[1], [0], [0], [1], [0, 0, 1, 1], [], []>} : vector<31x10xbf16>, vector<10x128xbf16>, vector<31x128xf32> -> vector<31x128xf32>
    %c0_4 = arith.constant 0 : index
    %c0_5 = arith.constant 0 : index
    %8 = vector.load %arg3[%c0_4, %c0_5] : memref<1x128xf32, #tpu.memory_space<vmem>>, vector<1x128xf32>
    %9 = vector.broadcast %8 : vector<1x128xf32> to vector<31x128xf32>
    %10 = arith.addf %7, %9 : vector<31x128xf32>
    %11 = arith.mulf %10, %10 : vector<31x128xf32>
    %12 = arith.mulf %10, %11 : vector<31x128xf32>
    %cst_6 = arith.constant 4.471500e-02 : f32
    %13 = vector.broadcast %cst_6 : f32 to vector<31x128xf32>
    %14 = arith.mulf %13, %12 : vector<31x128xf32>
    %15 = arith.addf %10, %14 : vector<31x128xf32>
    %cst_7 = arith.constant 0.797884583 : f32
    %16 = vector.broadcast %cst_7 : f32 to vector<31x128xf32>
    %17 = arith.mulf %16, %15 : vector<31x128xf32>
    %18 = math.tanh %17 : vector<31x128xf32>
    %cst_8 = arith.constant 1.000000e+00 : f32
    %19 = vector.broadcast %cst_8 : f32 to vector<31x128xf32>
    %20 = arith.addf %19, %18 : vector<31x128xf32>
    %cst_9 = arith.constant 5.000000e-01 : f32
    %21 = vector.broadcast %cst_9 : f32 to vector<31x128xf32>
    %22 = arith.mulf %21, %20 : vector<31x128xf32>
    %23 = arith.mulf %10, %22 : vector<31x128xf32>
    %24 = arith.truncf %23 : vector<31x128xf32> to vector<31x128xbf16>
    %c0_10 = arith.constant 0 : index
    %c0_11 = arith.constant 0 : index
    %c0_12 = arith.constant 0 : index
    %25 = vector.load %arg4[%c0_10, %c0_11, %c0_12] : memref<1x31x128xbf16, #tpu.memory_space<vmem>>, vector<1x31x128xbf16>
    %26 = vector.shape_cast %25 : vector<1x31x128xbf16> to vector<31x128xbf16>
    %27 = vector.shape_cast %24 : vector<31x128xbf16> to vector<1x31x128xbf16>
    tpu.vector_store %arg4[%c0_10, %c0_11, %c0_12], %27 {strides = array<i32>} : memref<1x31x128xbf16, #tpu.memory_space<vmem>>, vector<1x31x128xbf16>,
    return
  }
  func.func @transform_0(%arg0: i32) -> (i32, i32, i32) {
    %c0_i32 = arith.constant 0 : i32
    %c0_i32_0 = arith.constant 0 : i32
    %c0_i32_1 = arith.constant 0 : i32
    return %arg0, %c0_i32, %c0_i32_0 : i32, i32, i32
  }
  func.func @transform_1(%arg0: i32) -> (i32, i32) {
    %c0_i32 = arith.constant 0 : i32
    %c0_i32_0 = arith.constant 0 : i32
    %c0_i32_1 = arith.constant 0 : i32
    return %c0_i32, %c0_i32_0 : i32, i32
  }
  func.func @transform_2(%arg0: i32) -> (i32, i32) {
    %c0_i32 = arith.constant 0 : i32
    %c0_i32_0 = arith.constant 0 : i32
    %c0_i32_1 = arith.constant 0 : i32
    return %c0_i32, %c0_i32_0 : i32, i32
  }
  func.func @transform_3(%arg0: i32) -> (i32, i32, i32) {
    %c0_i32 = arith.constant 0 : i32
    %c0_i32_0 = arith.constant 0 : i32
    %c0_i32_1 = arith.constant 0 : i32
    return %arg0, %c0_i32, %c0_i32_0 : i32, i32, i32
  }
}

module attributes {stable_mosaic.version = 11 : i64} {
  func.func @_featproj_kernel(%arg0: i32, %arg1: memref<1x14x128xbf16, #tpu.memory_space<vmem>>, %arg2: memref<1x128xf32, #tpu.memory_space<vmem>>, %arg3: memref<1x128xf32, #tpu.memory_space<vmem>>, %arg4: memref<128x128xbf16, #tpu.memory_space<vmem>>, %arg5: memref<1x128xf32, #tpu.memory_space<vmem>>, %arg6: memref<1x128xf32, #tpu.memory_space<vmem>>, %arg7: memref<1x128xf32, #tpu.memory_space<vmem>>, %arg8: memref<1x14x128xf32, #tpu.memory_space<vmem>>, %arg9: memref<1x14x128xbf16, #tpu.memory_space<vmem>>) attributes {dimension_semantics = [#tpu.dimension_semantics<parallel>], iteration_bounds = array<i64: 2>, scalar_prefetch = 0 : i64, scratch_operands = 0 : i64, tpu.core_type = #tpu.core_type<tc>, window_params = [{transform_indices = @transform_0, window_bounds = array<i64: 1, 14, 128>}, {pipeline_mode = #tpu.pipeline_mode<synchronous>, transform_indices = @transform_1, window_bounds = array<i64: 1, 128>}, {pipeline_mode = #tpu.pipeline_mode<synchronous>, transform_indices = @transform_2, window_bounds = array<i64: 1, 128>}, {pipeline_mode = #tpu.pipeline_mode<synchronous>, transform_indices = @transform_3, window_bounds = array<i64: 128, 128>}, {pipeline_mode = #tpu.pipeline_mode<synchronous>, transform_indices = @transform_4, window_bounds = array<i64: 1, 128>}, {pipeline_mode = #tpu.pipeline_mode<synchronous>, transform_indices = @transform_5, window_bounds = array<i64: 1, 128>}, {pipeline_mode = #tpu.pipeline_mode<synchronous>, transform_indices = @transform_6, window_bounds = array<i64: 1, 128>}, {transform_indices = @transform_7, window_bounds = array<i64: 1, 14, 128>}, {transform_indices = @transform_8, window_bounds = array<i64: 1, 14, 128>}]} {
    %c0 = arith.constant 0 : index
    %c0_0 = arith.constant 0 : index
    %c0_1 = arith.constant 0 : index
    %0 = vector.load %arg1[%c0, %c0_0, %c0_1] : memref<1x14x128xbf16, #tpu.memory_space<vmem>>, vector<1x14x128xbf16>
    %1 = vector.shape_cast %0 : vector<1x14x128xbf16> to vector<14x128xbf16>
    %2 = arith.extf %1 : vector<14x128xbf16> to vector<14x128xf32>
    %c0_2 = arith.constant 0 : index
    %c0_3 = arith.constant 0 : index
    %3 = vector.load %arg2[%c0_2, %c0_3] : memref<1x128xf32, #tpu.memory_space<vmem>>, vector<1x128xf32>
    %c0_4 = arith.constant 0 : index
    %c0_5 = arith.constant 0 : index
    %4 = vector.load %arg3[%c0_4, %c0_5] : memref<1x128xf32, #tpu.memory_space<vmem>>, vector<1x128xf32>
    %cst = arith.constant dense<0.000000e+00> : vector<14xf32>
    %5 = vector.multi_reduction <add>, %2, %cst [1] : vector<14x128xf32> to vector<14xf32>
    %6 = vector.shape_cast %5 : vector<14xf32> to vector<14x1xf32>
    %cst_6 = arith.constant 1.280000e+02 : f32
    %7 = vector.broadcast %cst_6 : f32 to vector<14x1xf32>
    %8 = arith.divf %6, %7 : vector<14x1xf32>
    %9 = vector.broadcast %8 : vector<14x1xf32> to vector<14x128xf32>
    %10 = arith.subf %2, %9 : vector<14x128xf32>
    %11 = arith.mulf %10, %10 : vector<14x128xf32>
    %cst_7 = arith.constant dense<0.000000e+00> : vector<14xf32>
    %12 = vector.multi_reduction <add>, %11, %cst_7 [1] : vector<14x128xf32> to vector<14xf32>
    %13 = vector.shape_cast %12 : vector<14xf32> to vector<14x1xf32>
    %cst_8 = arith.constant 1.280000e+02 : f32
    %14 = vector.broadcast %cst_8 : f32 to vector<14x1xf32>
    %15 = arith.divf %13, %14 : vector<14x1xf32>
    %16 = vector.broadcast %8 : vector<14x1xf32> to vector<14x128xf32>
    %17 = arith.subf %2, %16 : vector<14x128xf32>
    %cst_9 = arith.constant 9.99999974E-6 : f32
    %18 = vector.broadcast %cst_9 : f32 to vector<14x1xf32>
    %19 = arith.addf %15, %18 : vector<14x1xf32>
    %20 = math.rsqrt %19 : vector<14x1xf32>
    %21 = vector.broadcast %20 : vector<14x1xf32> to vector<14x128xf32>
    %22 = arith.mulf %17, %21 : vector<14x128xf32>
    %23 = vector.broadcast %3 : vector<1x128xf32> to vector<14x128xf32>
    %24 = arith.mulf %22, %23 : vector<14x128xf32>
    %25 = vector.broadcast %4 : vector<1x128xf32> to vector<14x128xf32>
    %26 = arith.addf %24, %25 : vector<14x128xf32>
    %27 = arith.truncf %26 : vector<14x128xf32> to vector<14x128xbf16>
    %c0_10 = arith.constant 0 : index
    %c0_11 = arith.constant 0 : index
    %28 = vector.load %arg4[%c0_10, %c0_11] : memref<128x128xbf16, #tpu.memory_space<vmem>>, vector<128x128xbf16>
    %cst_12 = arith.constant dense<0.000000e+00> : vector<14x128xf32>
    %29 = tpu.matmul %27, %28, %cst_12 {dimension_numbers = #tpu.dot_dimension_numbers<[1], [0], [0], [1], [0, 0, 1, 1], [], []>} : vector<14x128xbf16>, vector<128x128xbf16>, vector<14x128xf32> -> vector<14x128xf32>
    %c0_13 = arith.constant 0 : index
    %c0_14 = arith.constant 0 : index
    %30 = vector.load %arg5[%c0_13, %c0_14] : memref<1x128xf32, #tpu.memory_space<vmem>>, vector<1x128xf32>
    %31 = vector.broadcast %30 : vector<1x128xf32> to vector<14x128xf32>
    %32 = arith.addf %29, %31 : vector<14x128xf32>
    %c0_15 = arith.constant 0 : index
    %c0_16 = arith.constant 0 : index
    %c0_17 = arith.constant 0 : index
    %33 = vector.load %arg8[%c0_15, %c0_16, %c0_17] : memref<1x14x128xf32, #tpu.memory_space<vmem>>, vector<1x14x128xf32>
    %34 = vector.shape_cast %33 : vector<1x14x128xf32> to vector<14x128xf32>
    %35 = vector.shape_cast %32 : vector<14x128xf32> to vector<1x14x128xf32>
    tpu.vector_store %arg8[%c0_15, %c0_16, %c0_17], %35 {strides = array<i32>} : memref<1x14x128xf32, #tpu.memory_space<vmem>>, vector<1x14x128xf32>,
    %c0_18 = arith.constant 0 : index
    %c0_19 = arith.constant 0 : index
    %36 = vector.load %arg6[%c0_18, %c0_19] : memref<1x128xf32, #tpu.memory_space<vmem>>, vector<1x128xf32>
    %c0_20 = arith.constant 0 : index
    %c0_21 = arith.constant 0 : index
    %37 = vector.load %arg7[%c0_20, %c0_21] : memref<1x128xf32, #tpu.memory_space<vmem>>, vector<1x128xf32>
    %cst_22 = arith.constant dense<0.000000e+00> : vector<14xf32>
    %38 = vector.multi_reduction <add>, %32, %cst_22 [1] : vector<14x128xf32> to vector<14xf32>
    %39 = vector.shape_cast %38 : vector<14xf32> to vector<14x1xf32>
    %cst_23 = arith.constant 1.280000e+02 : f32
    %40 = vector.broadcast %cst_23 : f32 to vector<14x1xf32>
    %41 = arith.divf %39, %40 : vector<14x1xf32>
    %42 = vector.broadcast %41 : vector<14x1xf32> to vector<14x128xf32>
    %43 = arith.subf %32, %42 : vector<14x128xf32>
    %44 = arith.mulf %43, %43 : vector<14x128xf32>
    %cst_24 = arith.constant dense<0.000000e+00> : vector<14xf32>
    %45 = vector.multi_reduction <add>, %44, %cst_24 [1] : vector<14x128xf32> to vector<14xf32>
    %46 = vector.shape_cast %45 : vector<14xf32> to vector<14x1xf32>
    %cst_25 = arith.constant 1.280000e+02 : f32
    %47 = vector.broadcast %cst_25 : f32 to vector<14x1xf32>
    %48 = arith.divf %46, %47 : vector<14x1xf32>
    %49 = vector.broadcast %41 : vector<14x1xf32> to vector<14x128xf32>
    %50 = arith.subf %32, %49 : vector<14x128xf32>
    %cst_26 = arith.constant 9.99999974E-6 : f32
    %51 = vector.broadcast %cst_26 : f32 to vector<14x1xf32>
    %52 = arith.addf %48, %51 : vector<14x1xf32>
    %53 = math.rsqrt %52 : vector<14x1xf32>
    %54 = vector.broadcast %53 : vector<14x1xf32> to vector<14x128xf32>
    %55 = arith.mulf %50, %54 : vector<14x128xf32>
    %56 = vector.broadcast %36 : vector<1x128xf32> to vector<14x128xf32>
    %57 = arith.mulf %55, %56 : vector<14x128xf32>
    %58 = vector.broadcast %37 : vector<1x128xf32> to vector<14x128xf32>
    %59 = arith.addf %57, %58 : vector<14x128xf32>
    %60 = arith.truncf %59 : vector<14x128xf32> to vector<14x128xbf16>
    %c0_27 = arith.constant 0 : index
    %c0_28 = arith.constant 0 : index
    %c0_29 = arith.constant 0 : index
    %61 = vector.load %arg9[%c0_27, %c0_28, %c0_29] : memref<1x14x128xbf16, #tpu.memory_space<vmem>>, vector<1x14x128xbf16>
    %62 = vector.shape_cast %61 : vector<1x14x128xbf16> to vector<14x128xbf16>
    %63 = vector.shape_cast %60 : vector<14x128xbf16> to vector<1x14x128xbf16>
    tpu.vector_store %arg9[%c0_27, %c0_28, %c0_29], %63 {strides = array<i32>} : memref<1x14x128xbf16, #tpu.memory_space<vmem>>, vector<1x14x128xbf16>,
    return
  }
  func.func @transform_0(%arg0: i32) -> (i32, i32, i32) {
    %c0_i32 = arith.constant 0 : i32
    %c0_i32_0 = arith.constant 0 : i32
    %c0_i32_1 = arith.constant 0 : i32
    return %arg0, %c0_i32, %c0_i32_0 : i32, i32, i32
  }
  func.func @transform_1(%arg0: i32) -> (i32, i32) {
    %c0_i32 = arith.constant 0 : i32
    %c0_i32_0 = arith.constant 0 : i32
    %c0_i32_1 = arith.constant 0 : i32
    return %c0_i32, %c0_i32_0 : i32, i32
  }
  func.func @transform_2(%arg0: i32) -> (i32, i32) {
    %c0_i32 = arith.constant 0 : i32
    %c0_i32_0 = arith.constant 0 : i32
    %c0_i32_1 = arith.constant 0 : i32
    return %c0_i32, %c0_i32_0 : i32, i32
  }
  func.func @transform_3(%arg0: i32) -> (i32, i32) {
    %c0_i32 = arith.constant 0 : i32
    %c0_i32_0 = arith.constant 0 : i32
    %c0_i32_1 = arith.constant 0 : i32
    return %c0_i32, %c0_i32_0 : i32, i32
  }
  func.func @transform_4(%arg0: i32) -> (i32, i32) {
    %c0_i32 = arith.constant 0 : i32
    %c0_i32_0 = arith.constant 0 : i32
    %c0_i32_1 = arith.constant 0 : i32
    return %c0_i32, %c0_i32_0 : i32, i32
  }
  func.func @transform_5(%arg0: i32) -> (i32, i32) {
    %c0_i32 = arith.constant 0 : i32
    %c0_i32_0 = arith.constant 0 : i32
    %c0_i32_1 = arith.constant 0 : i32
    return %c0_i32, %c0_i32_0 : i32, i32
  }
  func.func @transform_6(%arg0: i32) -> (i32, i32) {
    %c0_i32 = arith.constant 0 : i32
    %c0_i32_0 = arith.constant 0 : i32
    %c0_i32_1 = arith.constant 0 : i32
    return %c0_i32, %c0_i32_0 : i32, i32
  }
  func.func @transform_7(%arg0: i32) -> (i32, i32, i32) {
    %c0_i32 = arith.constant 0 : i32
    %c0_i32_0 = arith.constant 0 : i32
    %c0_i32_1 = arith.constant 0 : i32
    return %arg0, %c0_i32, %c0_i32_0 : i32, i32, i32
  }
  func.func @transform_8(%arg0: i32) -> (i32, i32, i32) {
    %c0_i32 = arith.constant 0 : i32
    %c0_i32_0 = arith.constant 0 : i32
    %c0_i32_1 = arith.constant 0 : i32
    return %arg0, %c0_i32, %c0_i32_0 : i32, i32, i32
  }
}

module attributes {stable_mosaic.version = 11 : i64} {
  func.func @_encoder_layer_kernel(%arg0: i32, %arg1: memref<1x14x128xbf16, #tpu.memory_space<vmem>>, %arg2: memref<128x384xbf16, #tpu.memory_space<vmem>>, %arg3: memref<1x384xf32, #tpu.memory_space<vmem>>, %arg4: memref<128x128xbf16, #tpu.memory_space<vmem>>, %arg5: memref<1x128xf32, #tpu.memory_space<vmem>>, %arg6: memref<1x128xf32, #tpu.memory_space<vmem>>, %arg7: memref<1x128xf32, #tpu.memory_space<vmem>>, %arg8: memref<128x256xbf16, #tpu.memory_space<vmem>>, %arg9: memref<1x256xf32, #tpu.memory_space<vmem>>, %arg10: memref<256x128xbf16, #tpu.memory_space<vmem>>, %arg11: memref<1x128xf32, #tpu.memory_space<vmem>>, %arg12: memref<1x128xf32, #tpu.memory_space<vmem>>, %arg13: memref<1x128xf32, #tpu.memory_space<vmem>>, %arg14: memref<1x14x128xbf16, #tpu.memory_space<vmem>>) attributes {dimension_semantics = [#tpu.dimension_semantics<parallel>], iteration_bounds = array<i64: 2>, scalar_prefetch = 0 : i64, scratch_operands = 0 : i64, tpu.core_type = #tpu.core_type<tc>, window_params = [{transform_indices = @transform_0, window_bounds = array<i64: 1, 14, 128>}, {pipeline_mode = #tpu.pipeline_mode<synchronous>, transform_indices = @transform_1, window_bounds = array<i64: 128, 384>}, {pipeline_mode = #tpu.pipeline_mode<synchronous>, transform_indices = @transform_2, window_bounds = array<i64: 1, 384>}, {pipeline_mode = #tpu.pipeline_mode<synchronous>, transform_indices = @transform_3, window_bounds = array<i64: 128, 128>}, {pipeline_mode = #tpu.pipeline_mode<synchronous>, transform_indices = @transform_4, window_bounds = array<i64: 1, 128>}, {pipeline_mode = #tpu.pipeline_mode<synchronous>, transform_indices = @transform_5, window_bounds = array<i64: 1, 128>}, {pipeline_mode = #tpu.pipeline_mode<synchronous>, transform_indices = @transform_6, window_bounds = array<i64: 1, 128>}, {pipeline_mode = #tpu.pipeline_mode<synchronous>, transform_indices = @transform_7, window_bounds = array<i64: 128, 256>}, {pipeline_mode = #tpu.pipeline_mode<synchronous>, transform_indices = @transform_8, window_bounds = array<i64: 1, 256>}, {pipeline_mode = #tpu.pipeline_mode<synchronous>, transform_indices = @transform_9, window_bounds = array<i64: 256, 128>}, {pipeline_mode = #tpu.pipeline_mode<synchronous>, transform_indices = @transform_10, window_bounds = array<i64: 1, 128>}, {pipeline_mode = #tpu.pipeline_mode<synchronous>, transform_indices = @transform_11, window_bounds = array<i64: 1, 128>}, {pipeline_mode = #tpu.pipeline_mode<synchronous>, transform_indices = @transform_12, window_bounds = array<i64: 1, 128>}, {transform_indices = @transform_13, window_bounds = array<i64: 1, 14, 128>}]} {
    %c0 = arith.constant 0 : index
    %c0_0 = arith.constant 0 : index
    %c0_1 = arith.constant 0 : index
    %0 = vector.load %arg1[%c0, %c0_0, %c0_1] : memref<1x14x128xbf16, #tpu.memory_space<vmem>>, vector<1x14x128xbf16>
    %1 = vector.shape_cast %0 : vector<1x14x128xbf16> to vector<14x128xbf16>
    %c0_2 = arith.constant 0 : index
    %c0_3 = arith.constant 0 : index
    %2 = vector.load %arg2[%c0_2, %c0_3] : memref<128x384xbf16, #tpu.memory_space<vmem>>, vector<128x384xbf16>
    %cst = arith.constant dense<0.000000e+00> : vector<14x384xf32>
    %3 = tpu.matmul %1, %2, %cst {dimension_numbers = #tpu.dot_dimension_numbers<[1], [0], [0], [1], [0, 0, 1, 1], [], []>} : vector<14x128xbf16>, vector<128x384xbf16>, vector<14x384xf32> -> vector<14x384xf32>
    %c0_4 = arith.constant 0 : index
    %c0_5 = arith.constant 0 : index
    %4 = vector.load %arg3[%c0_4, %c0_5] : memref<1x384xf32, #tpu.memory_space<vmem>>, vector<1x384xf32>
    %5 = vector.broadcast %4 : vector<1x384xf32> to vector<14x384xf32>
    %6 = arith.addf %3, %5 : vector<14x384xf32>
    %7 = vector.extract_strided_slice %6 {offsets = [0, 0], sizes = [14, 128], strides = [1, 1]} : vector<14x384xf32> to vector<14x128xf32>
    %8 = vector.shape_cast %7 : vector<14x128xf32> to vector<14x4x32xf32>
    %9 = tpu.transpose %8, [1, 0, 2] : vector<14x4x32xf32> -> vector<4x14x32xf32>
    %10 = arith.truncf %9 : vector<4x14x32xf32> to vector<4x14x32xbf16>
    %11 = vector.extract_strided_slice %6 {offsets = [0, 128], sizes = [14, 128], strides = [1, 1]} : vector<14x384xf32> to vector<14x128xf32>
    %12 = vector.shape_cast %11 : vector<14x128xf32> to vector<14x4x32xf32>
    %13 = tpu.transpose %12, [1, 0, 2] : vector<14x4x32xf32> -> vector<4x14x32xf32>
    %14 = arith.truncf %13 : vector<4x14x32xf32> to vector<4x14x32xbf16>
    %15 = vector.extract_strided_slice %6 {offsets = [0, 256], sizes = [14, 128], strides = [1, 1]} : vector<14x384xf32> to vector<14x128xf32>
    %16 = vector.shape_cast %15 : vector<14x128xf32> to vector<14x4x32xf32>
    %17 = tpu.transpose %16, [1, 0, 2] : vector<14x4x32xf32> -> vector<4x14x32xf32>
    %18 = arith.truncf %17 : vector<4x14x32xf32> to vector<4x14x32xbf16>
    "tpu.trace_start"() <{level = 10 : i32, message = "hqd,hkd->hqk"}> : () -> ()
    %cst_6 = arith.constant dense<0.000000e+00> : vector<4x14x14xf32>
    %19 = tpu.matmul %10, %14, %cst_6 {dimension_numbers = #tpu.dot_dimension_numbers<[2], [2], [1], [1], [0, 0, 0, 1, 1, 1], [0], [0]>} : vector<4x14x32xbf16>, vector<4x14x32xbf16>, vector<4x14x14xf32> -> vector<4x14x14xf32>
    "tpu.trace_stop"() : () -> ()
    %cst_7 = arith.constant dense<0xFF800000> : vector<4x14xf32>
    %20 = vector.multi_reduction <maximumf>, %19, %cst_7 [2] : vector<4x14x14xf32> to vector<4x14xf32>
    %21 = vector.shape_cast %20 : vector<4x14xf32> to vector<4x14x1xf32>
    %22 = vector.broadcast %21 : vector<4x14x1xf32> to vector<4x14x14xf32>
    %23 = arith.subf %19, %22 : vector<4x14x14xf32>
    %24 = math.exp %23 : vector<4x14x14xf32>
    %cst_8 = arith.constant dense<0.000000e+00> : vector<4x14xf32>
    %25 = vector.multi_reduction <add>, %24, %cst_8 [2] : vector<4x14x14xf32> to vector<4x14xf32>
    %26 = vector.shape_cast %25 : vector<4x14xf32> to vector<4x14x1xf32>
    %27 = tpu.reciprocal %26 {approx = true} : vector<4x14x1xf32> -> vector<4x14x1xf32>
    %28 = vector.broadcast %27 : vector<4x14x1xf32> to vector<4x14x14xf32>
    %29 = arith.mulf %24, %28 : vector<4x14x14xf32>
    %30 = arith.truncf %29 : vector<4x14x14xf32> to vector<4x14x14xbf16>
    "tpu.trace_start"() <{level = 10 : i32, message = "hqk,hkd->hqd"}> : () -> ()
    %cst_9 = arith.constant dense<0.000000e+00> : vector<4x14x32xf32>
    %31 = tpu.matmul %30, %18, %cst_9 {dimension_numbers = #tpu.dot_dimension_numbers<[2], [1], [1], [2], [0, 0, 0, 1, 1, 2], [0], [0]>} : vector<4x14x14xbf16>, vector<4x14x32xbf16>, vector<4x14x32xf32> -> vector<4x14x32xf32>
    "tpu.trace_stop"() : () -> ()
    %32 = tpu.transpose %31, [1, 0, 2] : vector<4x14x32xf32> -> vector<14x4x32xf32>
    %33 = vector.shape_cast %32 : vector<14x4x32xf32> to vector<14x128xf32>
    %34 = arith.truncf %33 : vector<14x128xf32> to vector<14x128xbf16>
    %c0_10 = arith.constant 0 : index
    %c0_11 = arith.constant 0 : index
    %35 = vector.load %arg4[%c0_10, %c0_11] : memref<128x128xbf16, #tpu.memory_space<vmem>>, vector<128x128xbf16>
    %cst_12 = arith.constant dense<0.000000e+00> : vector<14x128xf32>
    %36 = tpu.matmul %34, %35, %cst_12 {dimension_numbers = #tpu.dot_dimension_numbers<[1], [0], [0], [1], [0, 0, 1, 1], [], []>} : vector<14x128xbf16>, vector<128x128xbf16>, vector<14x128xf32> -> vector<14x128xf32>
    %c0_13 = arith.constant 0 : index
    %c0_14 = arith.constant 0 : index
    %37 = vector.load %arg5[%c0_13, %c0_14] : memref<1x128xf32, #tpu.memory_space<vmem>>, vector<1x128xf32>
    %38 = vector.broadcast %37 : vector<1x128xf32> to vector<14x128xf32>
    %39 = arith.addf %36, %38 : vector<14x128xf32>
    %40 = arith.extf %1 : vector<14x128xbf16> to vector<14x128xf32>
    %41 = arith.addf %40, %39 : vector<14x128xf32>
    %c0_15 = arith.constant 0 : index
    %c0_16 = arith.constant 0 : index
    %42 = vector.load %arg6[%c0_15, %c0_16] : memref<1x128xf32, #tpu.memory_space<vmem>>, vector<1x128xf32>
    %c0_17 = arith.constant 0 : index
    %c0_18 = arith.constant 0 : index
    %43 = vector.load %arg7[%c0_17, %c0_18] : memref<1x128xf32, #tpu.memory_space<vmem>>, vector<1x128xf32>
    %cst_19 = arith.constant dense<0.000000e+00> : vector<14xf32>
    %44 = vector.multi_reduction <add>, %41, %cst_19 [1] : vector<14x128xf32> to vector<14xf32>
    %45 = vector.shape_cast %44 : vector<14xf32> to vector<14x1xf32>
    %cst_20 = arith.constant 1.280000e+02 : f32
    %46 = vector.broadcast %cst_20 : f32 to vector<14x1xf32>
    %47 = arith.divf %45, %46 : vector<14x1xf32>
    %48 = vector.broadcast %47 : vector<14x1xf32> to vector<14x128xf32>
    %49 = arith.subf %41, %48 : vector<14x128xf32>
    %50 = arith.mulf %49, %49 : vector<14x128xf32>
    %cst_21 = arith.constant dense<0.000000e+00> : vector<14xf32>
    %51 = vector.multi_reduction <add>, %50, %cst_21 [1] : vector<14x128xf32> to vector<14xf32>
    %52 = vector.shape_cast %51 : vector<14xf32> to vector<14x1xf32>
    %cst_22 = arith.constant 1.280000e+02 : f32
    %53 = vector.broadcast %cst_22 : f32 to vector<14x1xf32>
    %54 = arith.divf %52, %53 : vector<14x1xf32>
    %55 = vector.broadcast %47 : vector<14x1xf32> to vector<14x128xf32>
    %56 = arith.subf %41, %55 : vector<14x128xf32>
    %cst_23 = arith.constant 9.99999974E-6 : f32
    %57 = vector.broadcast %cst_23 : f32 to vector<14x1xf32>
    %58 = arith.addf %54, %57 : vector<14x1xf32>
    %59 = math.rsqrt %58 : vector<14x1xf32>
    %60 = vector.broadcast %59 : vector<14x1xf32> to vector<14x128xf32>
    %61 = arith.mulf %56, %60 : vector<14x128xf32>
    %62 = vector.broadcast %42 : vector<1x128xf32> to vector<14x128xf32>
    %63 = arith.mulf %61, %62 : vector<14x128xf32>
    %64 = vector.broadcast %43 : vector<1x128xf32> to vector<14x128xf32>
    %65 = arith.addf %63, %64 : vector<14x128xf32>
    %66 = arith.truncf %65 : vector<14x128xf32> to vector<14x128xbf16>
    %c0_24 = arith.constant 0 : index
    %c0_25 = arith.constant 0 : index
    %67 = vector.load %arg8[%c0_24, %c0_25] : memref<128x256xbf16, #tpu.memory_space<vmem>>, vector<128x256xbf16>
    %cst_26 = arith.constant dense<0.000000e+00> : vector<14x256xf32>
    %68 = tpu.matmul %66, %67, %cst_26 {dimension_numbers = #tpu.dot_dimension_numbers<[1], [0], [0], [1], [0, 0, 1, 1], [], []>} : vector<14x128xbf16>, vector<128x256xbf16>, vector<14x256xf32> -> vector<14x256xf32>
    %c0_27 = arith.constant 0 : index
    %c0_28 = arith.constant 0 : index
    %69 = vector.load %arg9[%c0_27, %c0_28] : memref<1x256xf32, #tpu.memory_space<vmem>>, vector<1x256xf32>
    %70 = vector.broadcast %69 : vector<1x256xf32> to vector<14x256xf32>
    %71 = arith.addf %68, %70 : vector<14x256xf32>
    %72 = arith.mulf %71, %71 : vector<14x256xf32>
    %73 = arith.mulf %71, %72 : vector<14x256xf32>
    %cst_29 = arith.constant 4.471500e-02 : f32
    %74 = vector.broadcast %cst_29 : f32 to vector<14x256xf32>
    %75 = arith.mulf %74, %73 : vector<14x256xf32>
    %76 = arith.addf %71, %75 : vector<14x256xf32>
    %cst_30 = arith.constant 0.797884583 : f32
    %77 = vector.broadcast %cst_30 : f32 to vector<14x256xf32>
    %78 = arith.mulf %77, %76 : vector<14x256xf32>
    %79 = math.tanh %78 : vector<14x256xf32>
    %cst_31 = arith.constant 1.000000e+00 : f32
    %80 = vector.broadcast %cst_31 : f32 to vector<14x256xf32>
    %81 = arith.addf %80, %79 : vector<14x256xf32>
    %cst_32 = arith.constant 5.000000e-01 : f32
    %82 = vector.broadcast %cst_32 : f32 to vector<14x256xf32>
    %83 = arith.mulf %82, %81 : vector<14x256xf32>
    %84 = arith.mulf %71, %83 : vector<14x256xf32>
    %85 = arith.truncf %84 : vector<14x256xf32> to vector<14x256xbf16>
    %c0_33 = arith.constant 0 : index
    %c0_34 = arith.constant 0 : index
    %86 = vector.load %arg10[%c0_33, %c0_34] : memref<256x128xbf16, #tpu.memory_space<vmem>>, vector<256x128xbf16>
    %cst_35 = arith.constant dense<0.000000e+00> : vector<14x128xf32>
    %87 = tpu.matmul %85, %86, %cst_35 {dimension_numbers = #tpu.dot_dimension_numbers<[1], [0], [0], [1], [0, 0, 1, 1], [], []>} : vector<14x256xbf16>, vector<256x128xbf16>, vector<14x128xf32> -> vector<14x128xf32>
    %c0_36 = arith.constant 0 : index
    %c0_37 = arith.constant 0 : index
    %88 = vector.load %arg11[%c0_36, %c0_37] : memref<1x128xf32, #tpu.memory_space<vmem>>, vector<1x128xf32>
    %89 = vector.broadcast %88 : vector<1x128xf32> to vector<14x128xf32>
    %90 = arith.addf %87, %89 : vector<14x128xf32>
    %91 = arith.addf %65, %90 : vector<14x128xf32>
    %c0_38 = arith.constant 0 : index
    %c0_39 = arith.constant 0 : index
    %92 = vector.load %arg12[%c0_38, %c0_39] : memref<1x128xf32, #tpu.memory_space<vmem>>, vector<1x128xf32>
    %c0_40 = arith.constant 0 : index
    %c0_41 = arith.constant 0 : index
    %93 = vector.load %arg13[%c0_40, %c0_41] : memref<1x128xf32, #tpu.memory_space<vmem>>, vector<1x128xf32>
    %cst_42 = arith.constant dense<0.000000e+00> : vector<14xf32>
    %94 = vector.multi_reduction <add>, %91, %cst_42 [1] : vector<14x128xf32> to vector<14xf32>
    %95 = vector.shape_cast %94 : vector<14xf32> to vector<14x1xf32>
    %cst_43 = arith.constant 1.280000e+02 : f32
    %96 = vector.broadcast %cst_43 : f32 to vector<14x1xf32>
    %97 = arith.divf %95, %96 : vector<14x1xf32>
    %98 = vector.broadcast %97 : vector<14x1xf32> to vector<14x128xf32>
    %99 = arith.subf %91, %98 : vector<14x128xf32>
    %100 = arith.mulf %99, %99 : vector<14x128xf32>
    %cst_44 = arith.constant dense<0.000000e+00> : vector<14xf32>
    %101 = vector.multi_reduction <add>, %100, %cst_44 [1] : vector<14x128xf32> to vector<14xf32>
    %102 = vector.shape_cast %101 : vector<14xf32> to vector<14x1xf32>
    %cst_45 = arith.constant 1.280000e+02 : f32
    %103 = vector.broadcast %cst_45 : f32 to vector<14x1xf32>
    %104 = arith.divf %102, %103 : vector<14x1xf32>
    %105 = vector.broadcast %97 : vector<14x1xf32> to vector<14x128xf32>
    %106 = arith.subf %91, %105 : vector<14x128xf32>
    %cst_46 = arith.constant 9.99999974E-6 : f32
    %107 = vector.broadcast %cst_46 : f32 to vector<14x1xf32>
    %108 = arith.addf %104, %107 : vector<14x1xf32>
    %109 = math.rsqrt %108 : vector<14x1xf32>
    %110 = vector.broadcast %109 : vector<14x1xf32> to vector<14x128xf32>
    %111 = arith.mulf %106, %110 : vector<14x128xf32>
    %112 = vector.broadcast %92 : vector<1x128xf32> to vector<14x128xf32>
    %113 = arith.mulf %111, %112 : vector<14x128xf32>
    %114 = vector.broadcast %93 : vector<1x128xf32> to vector<14x128xf32>
    %115 = arith.addf %113, %114 : vector<14x128xf32>
    %116 = arith.truncf %115 : vector<14x128xf32> to vector<14x128xbf16>
    %c0_47 = arith.constant 0 : index
    %c0_48 = arith.constant 0 : index
    %c0_49 = arith.constant 0 : index
    %117 = vector.load %arg14[%c0_47, %c0_48, %c0_49] : memref<1x14x128xbf16, #tpu.memory_space<vmem>>, vector<1x14x128xbf16>
    %118 = vector.shape_cast %117 : vector<1x14x128xbf16> to vector<14x128xbf16>
    %119 = vector.shape_cast %116 : vector<14x128xbf16> to vector<1x14x128xbf16>
    tpu.vector_store %arg14[%c0_47, %c0_48, %c0_49], %119 {strides = array<i32>} : memref<1x14x128xbf16, #tpu.memory_space<vmem>>, vector<1x14x128xbf16>,
    return
  }
  func.func @transform_0(%arg0: i32) -> (i32, i32, i32) {
    %c0_i32 = arith.constant 0 : i32
    %c0_i32_0 = arith.constant 0 : i32
    %c0_i32_1 = arith.constant 0 : i32
    return %arg0, %c0_i32, %c0_i32_0 : i32, i32, i32
  }
  func.func @transform_1(%arg0: i32) -> (i32, i32) {
    %c0_i32 = arith.constant 0 : i32
    %c0_i32_0 = arith.constant 0 : i32
    %c0_i32_1 = arith.constant 0 : i32
    return %c0_i32, %c0_i32_0 : i32, i32
  }
  func.func @transform_2(%arg0: i32) -> (i32, i32) {
    %c0_i32 = arith.constant 0 : i32
    %c0_i32_0 = arith.constant 0 : i32
    %c0_i32_1 = arith.constant 0 : i32
    return %c0_i32, %c0_i32_0 : i32, i32
  }
  func.func @transform_3(%arg0: i32) -> (i32, i32) {
    %c0_i32 = arith.constant 0 : i32
    %c0_i32_0 = arith.constant 0 : i32
    %c0_i32_1 = arith.constant 0 : i32
    return %c0_i32, %c0_i32_0 : i32, i32
  }
  func.func @transform_4(%arg0: i32) -> (i32, i32) {
    %c0_i32 = arith.constant 0 : i32
    %c0_i32_0 = arith.constant 0 : i32
    %c0_i32_1 = arith.constant 0 : i32
    return %c0_i32, %c0_i32_0 : i32, i32
  }
  func.func @transform_5(%arg0: i32) -> (i32, i32) {
    %c0_i32 = arith.constant 0 : i32
    %c0_i32_0 = arith.constant 0 : i32
    %c0_i32_1 = arith.constant 0 : i32
    return %c0_i32, %c0_i32_0 : i32, i32
  }
  func.func @transform_6(%arg0: i32) -> (i32, i32) {
    %c0_i32 = arith.constant 0 : i32
    %c0_i32_0 = arith.constant 0 : i32
    %c0_i32_1 = arith.constant 0 : i32
    return %c0_i32, %c0_i32_0 : i32, i32
  }
  func.func @transform_7(%arg0: i32) -> (i32, i32) {
    %c0_i32 = arith.constant 0 : i32
    %c0_i32_0 = arith.constant 0 : i32
    %c0_i32_1 = arith.constant 0 : i32
    return %c0_i32, %c0_i32_0 : i32, i32
  }
  func.func @transform_8(%arg0: i32) -> (i32, i32) {
    %c0_i32 = arith.constant 0 : i32
    %c0_i32_0 = arith.constant 0 : i32
    %c0_i32_1 = arith.constant 0 : i32
    return %c0_i32, %c0_i32_0 : i32, i32
  }
  func.func @transform_9(%arg0: i32) -> (i32, i32) {
    %c0_i32 = arith.constant 0 : i32
    %c0_i32_0 = arith.constant 0 : i32
    %c0_i32_1 = arith.constant 0 : i32
    return %c0_i32, %c0_i32_0 : i32, i32
  }
  func.func @transform_10(%arg0: i32) -> (i32, i32) {
    %c0_i32 = arith.constant 0 : i32
    %c0_i32_0 = arith.constant 0 : i32
    %c0_i32_1 = arith.constant 0 : i32
    return %c0_i32, %c0_i32_0 : i32, i32
  }
  func.func @transform_11(%arg0: i32) -> (i32, i32) {
    %c0_i32 = arith.constant 0 : i32
    %c0_i32_0 = arith.constant 0 : i32
    %c0_i32_1 = arith.constant 0 : i32
    return %c0_i32, %c0_i32_0 : i32, i32
  }
  func.func @transform_12(%arg0: i32) -> (i32, i32) {
    %c0_i32 = arith.constant 0 : i32
    %c0_i32_0 = arith.constant 0 : i32
    %c0_i32_1 = arith.constant 0 : i32
    return %c0_i32, %c0_i32_0 : i32, i32
  }
  func.func @transform_13(%arg0: i32) -> (i32, i32, i32) {
    %c0_i32 = arith.constant 0 : i32
    %c0_i32_0 = arith.constant 0 : i32
    %c0_i32_1 = arith.constant 0 : i32
    return %arg0, %c0_i32, %c0_i32_0 : i32, i32, i32
  }
}

</mosaic_0001>

<llo_original>
// kernel: aves_forward.5
$region0: #{aves_forward.5}
  #allocation0 [shape = 'u32[]', space=smem, size = 0x4, offset = 0x4, fixed_abs, tag = 'smem constant byte address 0x4 - core index']
  #allocation1 [shape = 'u32[144,128]{1,0:T(1,128)}', space=vmem, size = 0x12000, scoped, tag = 'internal scratch']
  %s0 = inlined_call_operand.vmem [shape: f32[2,32,5], index: 0, kind: input, shape index: {}]
  %s1 = inlined_call_operand.vmem [shape: bf16[10,128], index: 1, kind: input, shape index: {}]
  %s2 = inlined_call_operand.hbm [shape: f32[1,128], index: 2, kind: input, shape index: {}]
  %s3 = inlined_call_operand.vmem [shape: bf16[2,31,128], index: 3, kind: output, shape index: {}]
  %s4 = sld [smem:[#allocation0]]
  $region49: #{aves_forward.5} parent=0
    _
  %s6 = ssub.s32 1, %s4
  %s7 = scalar_select 0, %s6, %s4
  $region1: #{aves_forward.5} parent=0
    #allocation2 [shape = 'u8[512]{0}', space=vmem, size = 0x400, scoped, tag = 'input window, operand 2, single buffered']
    #allocation3 [shape = 's32[2]{0}', space=sflag, size = 0x8, scoped, tag = 'scoped memory for aves_forward.5']
    %8 = vsyncpa [#allocation3], 0
    loop: start=0, step=1, limit=4
    $region2: #{aves_forward.5} parent=1 // loop_pre_header
      _
    $region3: #{aves_forward.5} parent=1 // loop_header
      %s10 = sphi 0, %s14
      %p11 = scmp.ge.s32.totalorder %s10, 4
      %s20 = sphi 0, %s22
      %s23 = sphi 0, %s20
      %s24 = sphi 0, %s23
      %s40 = sphi 0, %s24
      %s44 = sphi 0, %s44
      %s46 = sphi 0, %s44
      %s47 = sphi 0, %s46
      %s61 = sphi 0, %s47
      %s65 = sphi 0, %s65
      %s67 = sphi 0, %s65
      %s68 = sphi 0, %s67
      %s82 = sphi 0, %s68
      %s88 = sphi 0, %s90
      %s91 = sphi 0, %s88
      %s92 = sphi 0, %s91
      %s108 = sphi 0, %s92
    $region4: #{aves_forward.5} parent=1 // loop_header_branch
      %13 = sbr.rel (%p11) target = $region8
    $region5: #{aves_forward.5} parent=1 // loop_body
      %s15 = ssub.s32 %s10, 1
      %s16 = ssub.s32 %s10, 2
      %s17 = sadd.s32 %s10, 1
      %s18 = ssub.s32 %s10, %s17
      %p19 = scmp.eq.s32.totalorder %s18, 0
      %s21 = sadd.s32 %s20, 1
      %s22 = scalar_select %p19, %s20, %s21
      %p25 = pneg %p19
      %p26 = scmp.eq.s32.totalorder %s10, 1
      %p27 = por %p25, %p26
      %p28 = scmp.ne.s32.totalorder %s20, %s23
      %p29 = scmp.eq.s32.totalorder %s10, 0
      %p30 = por %p28, %p29
      %p31 = scmp.ne.s32.totalorder %s20, %s23
      %p32 = scmp.eq.s32.totalorder %s15, 1
      %p33 = por %p31, %p32
      %p34 = scmp.ne.s32.totalorder %s23, %s24
      %p35 = scmp.eq.s32.totalorder %s15, 0
      %p36 = por %p34, %p35
      %p37 = scmp.ne.s32.totalorder %s23, %s24
      %p38 = scmp.eq.s32.totalorder %s16, 1
      %p39 = por %p37, %p38
      %p41 = scmp.ne.s32.totalorder %s24, %s40
      %p42 = scmp.eq.s32.totalorder %s16, 0
      %p43 = por %p41, %p42
      %s45 = sadd.s32 %s44, 1
      %p48 = scmp.eq.s32.totalorder %s10, 1
      %p49 = scmp.ne.s32.totalorder %s44, %s46
      %p50 = scmp.eq.s32.totalorder %s10, 0
      %p51 = por %p49, %p50
      %p52 = scmp.ne.s32.totalorder %s44, %s46
      %p53 = scmp.eq.s32.totalorder %s15, 1
      %p54 = por %p52, %p53
      %p55 = scmp.ne.s32.totalorder %s46, %s47
      %p56 = scmp.eq.s32.totalorder %s15, 0
      %p57 = por %p55, %p56
      %p58 = scmp.ne.s32.totalorder %s46, %s47
      %p59 = scmp.eq.s32.totalorder %s16, 1
      %p60 = por %p58, %p59
      %p62 = scmp.ne.s32.totalorder %s47, %s61
      %p63 = scmp.eq.s32.totalorder %s16, 0
      %p64 = por %p62, %p63
      %s66 = sadd.s32 %s65, 1
      %p69 = scmp.eq.s32.totalorder %s10, 1
      %p70 = scmp.ne.s32.totalorder %s65, %s67
      %p71 = scmp.eq.s32.totalorder %s10, 0
      %p72 = por %p70, %p71
      %p73 = scmp.ne.s32.totalorder %s65, %s67
      %p74 = scmp.eq.s32.totalorder %s15, 1
      %p75 = por %p73, %p74
      %p76 = scmp.ne.s32.totalorder %s67, %s68
      %p77 = scmp.eq.s32.totalorder %s15, 0
      %p78 = por %p76, %p77
      %p79 = scmp.ne.s32.totalorder %s67, %s68
      %p80 = scmp.eq.s32.totalorder %s16, 1
      %p81 = por %p79, %p80
      %p83 = scmp.ne.s32.totalorder %s68, %s82
      %p84 = scmp.eq.s32.totalorder %s16, 0
      %p85 = por %p83, %p84
      %s86 = ssub.s32 %s10, %s17
      %p87 = scmp.eq.s32.totalorder %s86, 0
      %s89 = sadd.s32 %s88, 1
      %s90 = scalar_select %p87, %s88, %s89
      %p93 = pneg %p87
      %p94 = scmp.eq.s32.totalorder %s10, 1
      %p95 = por %p93, %p94
      %p96 = scmp.ne.s32.totalorder %s88, %s91
      %p97 = scmp.eq.s32.totalorder %s10, 0
      %p98 = por %p96, %p97
      %p99 = scmp.ne.s32.totalorder %s88, %s91
      %p100 = scmp.eq.s32.totalorder %s15, 1
      %p101 = por %p99, %p100
      %p102 = scmp.ne.s32.totalorder %s91, %s92
      %p103 = scmp.eq.s32.totalorder %s15, 0
      %p104 = por %p102, %p103
      %p105 = scmp.ne.s32.totalorder %s91, %s92
      %p106 = scmp.eq.s32.totalorder %s16, 1
      %p107 = por %p105, %p106
      %p109 = scmp.ne.s32.totalorder %s92, %s108
      %p110 = scmp.eq.s32.totalorder %s16, 0
      %p111 = por %p109, %p110
      %p112 = scmp.le.s32.totalorder 1, %s10
      %p113 = scmp.lt.s32.totalorder %s10, 3
      %p114 = pnand %p112, %p113
      %p115 = pneg %p114
      // Predicated region
      $region9: #{aves_forward.5} parent=5 // pred_check
        _
      $region10: #{aves_forward.5} parent=5 // pred_check_branch
        %117 = sbr.rel (%p114) target = $region12
      $region11: #{aves_forward.5} parent=5 // pred_region
        %s118 = ssub.s32 %s10, 1
        // Predicated region
        $region13: #{aves_forward.5} parent=11 // pred_check
          %p119 = pneg %p57
        $region14: #{aves_forward.5} parent=11 // pred_check_branch
          %121 = sbr.rel (%p119) target = $region16
        $region15: #{aves_forward.5} parent=11 // pred_region
          _
        $region16: #{aves_forward.5} parent=11 // pred_fallthru
          _
        // Predicated region
        $region17: #{aves_forward.5} parent=11 // pred_check
          %p122 = pneg %p78
        $region18: #{aves_forward.5} parent=11 // pred_check_branch
          %124 = sbr.rel (%p122) target = $region20
        $region19: #{aves_forward.5} parent=11 // pred_region
          %s126 = ssub.s32 16, 16
          %127 = vsyncadd [#allocation3], %s126
          %s129 = sshll.u32 [#allocation2], 4
          %s130 = int_to_ptr.vmem [resolvable:$true] %s129
          %132 = dma.hbm_to_vmem [thread:$0]  %s2, 16, %s130, [#allocation3]
        $region20: #{aves_forward.5} parent=11 // pred_fallthru
          _
      $region12: #{aves_forward.5} parent=5 // pred_fallthru
        _
      %p133 = scmp.lt.s32.totalorder %s10, 2
      // Predicated region
      $region21: #{aves_forward.5} parent=5 // pred_check
        %p134 = pneg %p133
      $region22: #{aves_forward.5} parent=5 // pred_check_branch
        %136 = sbr.rel (%p134) target = $region24
      $region23: #{aves_forward.5} parent=5 // pred_region
        // Predicated region
        $region25: #{aves_forward.5} parent=23 // pred_check
          %p137 = pneg %p30
        $region26: #{aves_forward.5} parent=23 // pred_check_branch
          %139 = sbr.rel (%p137) target = $region28
        $region27: #{aves_forward.5} parent=23 // pred_region
          %p140 = scmp.lt.s32.totalorder %s10, 1
          %s141 = scalar_select %p140, %s10, 1
          %s142 = smul.addr %s141, 4
          %s143 = smul.addr %s142, 8
          %s144 = scalar_lea.vmem %s0, %s143
        $region28: #{aves_forward.5} parent=23 // pred_fallthru
          _
      $region24: #{aves_forward.5} parent=5 // pred_fallthru
        _
      %p145 = scmp.le.s32.totalorder 1, %s10
      %p146 = scmp.lt.s32.totalorder %s10, 3
      %p147 = pnand %p145, %p146
      %p148 = pneg %p147
      // Predicated region
      $region29: #{aves_forward.5} parent=5 // pred_check
        _
      $region30: #{aves_forward.5} parent=5 // pred_check_branch
        %150 = sbr.rel (%p147) target = $region32
      $region31: #{aves_forward.5} parent=5 // pred_region
        %s151 = ssub.s32 %s10, 1
        // Predicated region
        $region33: #{aves_forward.5} parent=31 // pred_check
          %p152 = pneg %p78
        $region34: #{aves_forward.5} parent=31 // pred_check_branch
          %154 = sbr.rel (%p152) target = $region36
        $region35: #{aves_forward.5} parent=31 // pred_region
          %155 = dma.done [#allocation3], 16
        $region36: #{aves_forward.5} parent=31 // pred_fallthru
          _
        %p156 = scmp.lt.s32.totalorder %s15, 1
        %s157 = scalar_select %p156, %s15, 1
        %s158 = smul.addr %s157, 4
        %s159 = smul.addr %s158, 8
        %s160 = scalar_lea.vmem %s0, %s159
        %p161 = pneg %p36
        %p162 = pneg %p33
        %p163 = pneg %p57
        %p164 = pneg %p54
        %p165 = pneg %p78
        %p166 = pneg %p75
        %p167 = pneg %p104
        %p168 = pneg %p101
        %p169 = scmp.lt.s32.totalorder %s15, 1
        %s170 = scalar_select %p169, %s15, 1
        %s171 = smul.addr %s170, 4
        %s172 = smul.addr %s171, 4
        %s173 = scalar_lea.vmem %s3, %s172
        %p174 = scmp.lt.s32.totalorder %s15, 1
        %s175 = scalar_select %p174, %s15, 1
        %s176 = smul.addr %s175, 4
        %s177 = smul.addr %s176, 8
        %s178 = scalar_lea.vmem %s0, %s177
        %p179 = scmp.lt.s32.totalorder %s15, 1
        %s180 = scalar_select %p179, %s15, 1
        %s181 = smul.addr %s180, 4
        %s182 = smul.addr %s181, 4
        %s183 = scalar_lea.vmem %s3, %s182
        %v185 = vld [vmem:[%s178] sm:$0xff]
        %v186 = vld [vmem:[%s178 + $0x8] sm:$0xff]
        %v187 = vld [vmem:[%s178 + $0x10] sm:$0xff]
        %v188 = vld [vmem:[%s178 + $0x18] sm:$0xff]
        %vm193 = vcmask 1046528
        %v194 = vrot.slane %v185, 1
        %v195 = vrot.slane %v186, 1
        %v196 = vsel %vm193, %v194, %v195
        %v197 = vrot.slane %v187, 1
        %v198 = vsel %vm193, %v195, %v197
        %v199 = vrot.slane %v188, 1
        %v200 = vsel %vm193, %v197, %v199
        %201 = vrot.lane.b32.xlu0 %v196, 5
        %v202 = vpop.permute.xlu0 %201
        %203 = vrot.lane.b32.xlu0 %v198, 5
        %v204 = vpop.permute.xlu0 %203
        %205 = vrot.lane.b32.xlu0 %v200, 5
        %v206 = vpop.permute.xlu0 %205
        %207 = vrot.lane.b32.xlu0 %v199, 5
        %v208 = vpop.permute.xlu0 %207
        %vm213 = vcmask 39936
        %v214 = vsel %vm213, %v185, %v202
        %v215 = vsel %vm213, %v186, %v204
        %v216 = vsel %vm213, %v187, %v206
        %v217 = vsel %vm213, %v188, %v208
        %v218 = vpack.c.bf16 %v215, %v214
        %v219 = vpack.c.bf16 %v217, %v216
        %v220 = vld [vmem:[%s1] sm:$0xf]
        %v221 = vld [vmem:[%s1 + $0x4] sm:$0x1]
        %v222 = vld [vmem:[#allocation2] sm:$0x1]
        %v224 = vlaneseq
        %v225 = vshrl.u32 %v224, 7
        %v226 = vsub.s32 0, %v225
        %v227 = vrot.slane %v222, %v226
        %v231 = vunpack.c.l.b16 %v220
        %v232 = vunpack.c.l.b16 %v221
        %v233 = vpack.c.b16 %v232, %v231
        %vm234 = vcmask 80896
        %v236 = vsel %vm234, %v218, 0
        %v239 = vsel %vm234, %v219, 0
        %vm241 = vcmask 1044480
        %v243 = vsel %vm241, %v233, 0
        %245 = vmatprep.subr.bf16.mxu0 0
        %246 = vmatpush1.bf16.msra.mxu0 %v243
        %247 = vmatprep.subr.bf16.mxu0 0
        %248 = vmatpush1.bf16.msra.mxu0 0
        %249 = vmatprep.subr.bf16.mxu0 0
        %250 = vmatpush1.bf16.msra.mxu0 0
        %251 = vmatprep.subr.bf16.mxu0 0
        %252 = vmatpush1.bf16.msra.mxu0 0
        %253 = vmatprep.subr.bf16.mxu0 0
        %254 = vmatpush1.bf16.msra.mxu0 0
        %255 = vmatprep.subr.bf16.mxu0 0
        %256 = vmatpush1.bf16.msra.mxu0 0
        %257 = vmatprep.subr.bf16.mxu0 0
        %258 = vmatpush1.bf16.msra.mxu0 0
        %259 = vmatprep.subr.bf16.mxu0 0
        %260 = vmatpush1.bf16.msra.mxu0 0
        %261 = vmatprep.subr.bf16.mxu0 0
        %262 = vmatpush1.bf16.msra.mxu0 0
        %263 = vmatprep.subr.bf16.mxu0 0
        %264 = vmatpush1.bf16.msra.mxu0 0
        %265 = vmatprep.subr.bf16.mxu0 0
        %266 = vmatpush1.bf16.msra.mxu0 0
        %267 = vmatprep.subr.bf16.mxu0 0
        %268 = vmatpush1.bf16.msra.mxu0 0
        %269 = vmatprep.subr.bf16.mxu0 0
        %270 = vmatpush1.bf16.msra.mxu0 0
        %271 = vmatprep.subr.bf16.mxu0 0
        %272 = vmatpush1.bf16.msra.mxu0 0
        %273 = vmatprep.subr.bf16.mxu0 0
        %274 = vmatpush1.bf16.msra.mxu0 0
        %275 = vmatprep.subr.bf16.mxu0 0
        %276 = vmatpush1.bf16.msra.mxu0 0
        %277 = vmatprep.mubr.bf16.mxu0 0
        %278 = vmatmul.mubr.bf16.gmra.mrb[0].mxu0 %v236
        %v279 = vpop.f32.mrb[0].mxu0
        %v280 = vadd.f32 %v227, %v279
        %v281 = vpop.f32.mrb[0].mxu0
        %v282 = vpop.f32.mrb[0].mxu0
        %v283 = vadd.f32 %v227, %v282
        %v284 = vpop.f32.mrb[0].mxu0
        %285 = vmatprep.mubr.bf16.mxu0 0
        %286 = vmatmul.mubr.bf16.gmra.mrb[0].mxu0 %v239
        %v287 = vpop.f32.mrb[0].mxu0
        %v288 = vadd.f32 %v227, %v287
        %v289 = vpop.f32.mrb[0].mxu0
        %v290 = vpop.f32.mrb[0].mxu0
        %v291 = vadd.f32 %v227, %v290
        %v292 = vpop.f32.mrb[0].mxu0
        %293 = vdwg.mxu0
        %v294 = vmul.f32 %v280, %v280
        %v295 = vmul.f32 %v283, %v283
        %v296 = vmul.f32 %v288, %v288
        %v297 = vmul.f32 %v291, %v291
        %v298 = vmul.f32 %v280, %v294
        %v299 = vmul.f32 %v283, %v295
        %v300 = vmul.f32 %v288, %v296
        %v301 = vmul.f32 %v291, %v297
        %v302 = vmul.f32 %v298, 0.044715
        %v303 = vmul.f32 %v299, 0.044715
        %v304 = vmul.f32 %v300, 0.044715
        %v305 = vmul.f32 %v301, 0.044715
        %v306 = vadd.f32 %v280, %v302
        %v307 = vadd.f32 %v283, %v303
        %v308 = vadd.f32 %v288, %v304
        %v309 = vadd.f32 %v291, %v305
        %v310 = vmul.f32 %v306, 0.7978846
        %v311 = vmul.f32 %v307, 0.7978846
        %v312 = vmul.f32 %v308, 0.7978846
        %v313 = vmul.f32 %v309, 0.7978846
        %v314 = vtanh.pop %v310
        %v315 = vtanh.pop %v311
        %v316 = vtanh.pop %v312
        %v317 = vtanh.pop %v313
        %v318 = vadd.f32 %v314, 1.0
        %v319 = vadd.f32 %v315, 1.0
        %v320 = vadd.f32 %v316, 1.0
        %v321 = vadd.f32 %v317, 1.0
        %v322 = vmul.f32 %v318, 0.5
        %v323 = vmul.f32 %v319, 0.5
        %v324 = vmul.f32 %v320, 0.5
        %v325 = vmul.f32 %v321, 0.5
        %v326 = vmul.f32 %v280, %v322
        %v327 = vmul.f32 %v283, %v323
        %v328 = vmul.f32 %v288, %v324
        %v329 = vmul.f32 %v291, %v325
        %v330 = vpack.c.bf16 %v327, %v326
        %v331 = vpack.c.bf16 %v329, %v328
        %v334 = vunpack.c.l.b16 %v330
        %v335 = vunpack.c.h.b16 %v330
        %v336 = vunpack.c.l.b16 %v331
        %v337 = vunpack.c.h.b16 %v331
        %v338 = vpack.c.b16 %v334, %v334
        %v339 = vpack.c.b16 %v335, %v335
        %v340 = vpack.c.b16 %v336, %v336
        %v341 = vpack.c.b16 %v337, %v337
        %346 = vst [vmem:[%s183] sm:$0xf] %v338
        %347 = vst [vmem:[%s183 + $0x4] sm:$0xf] %v339
        %348 = vst [vmem:[%s183 + $0x8] sm:$0xf] %v340
        %vm349 = vcmask 1043456
        %vm350 = vsmask.f32 3328
        %vm351 = vmand %vm349, %vm350
        %v352 = vld [vmem:[%s183 + $0xc] sm:$0xf]
        %v353 = vsel %vm351, %v341, %v352
        %354 = vst [vmem:[%s183 + $0xc] sm:$0xf] %v353
        %p355 = scmp.lt.s32.totalorder %s15, 1
        %s356 = scalar_select %p355, %s15, 1
        %s357 = smul.addr %s356, 4
        %s358 = smul.addr %s357, 4
        %s359 = scalar_lea.vmem %s3, %s358
        // Predicated region
        $region37: #{aves_forward.5} parent=31 // pred_check
          %p360 = pneg %p101
        $region38: #{aves_forward.5} parent=31 // pred_check_branch
          %362 = sbr.rel (%p360) target = $region40
        $region39: #{aves_forward.5} parent=31 // pred_region
          _
        $region40: #{aves_forward.5} parent=31 // pred_fallthru
          _
      $region32: #{aves_forward.5} parent=5 // pred_fallthru
        _
      %p363 = scmp.le.s32.totalorder 2, %s10
      // Predicated region
      $region41: #{aves_forward.5} parent=5 // pred_check
        %p364 = pneg %p363
      $region42: #{aves_forward.5} parent=5 // pred_check_branch
        %366 = sbr.rel (%p364) target = $region44
      $region43: #{aves_forward.5} parent=5 // pred_region
        %s367 = ssub.s32 %s10, 2
        // Predicated region
        $region45: #{aves_forward.5} parent=43 // pred_check
          %p368 = pneg %p107
        $region46: #{aves_forward.5} parent=43 // pred_check_branch
          %370 = sbr.rel (%p368) target = $region48
        $region47: #{aves_forward.5} parent=43 // pred_region
          %p371 = scmp.lt.s32.totalorder %s16, 1
          %s372 = scalar_select %p371, %s16, 1
          %s373 = smul.addr %s372, 4
          %s374 = smul.addr %s373, 4
          %s375 = scalar_lea.vmem %s3, %s374
        $region48: #{aves_forward.5} parent=43 // pred_fallthru
          _
      $region44: #{aves_forward.5} parent=5 // pred_fallthru
        _
    $region6: #{aves_forward.5} parent=1 // loop_footer
      %s14 = sadd.s32 1, %s10
    $region7: #{aves_forward.5} parent=1 // loop_footer_branch
      %9 = sbr.rel target = $region3
    $region8: #{aves_forward.5} parent=1 // loop_exit
      _
    %376 = vsyncpa [#allocation3], 1
    %s377 = scalar_lea.sflag [#allocation3], 1
    %378 = vsyncpa %s377, 1

// kernel: aves_forward.6
$region0: #{aves_forward.6}
  #allocation0 [shape = 'u32[]', space=smem, size = 0x4, offset = 0x4, fixed_abs, tag = 'smem constant byte address 0x4 - core index']
  #allocation1 [shape = 'u32[144,128]{1,0:T(1,128)}', space=vmem, size = 0x12000, scoped, tag = 'internal scratch']
  %s0 = inlined_call_operand.vmem [shape: bf16[2,15,256], index: 0, kind: input, shape index: {}]
  %s1 = inlined_call_operand.hbm [shape: bf16[512,128], index: 1, kind: input, shape index: {}]
  %s2 = inlined_call_operand.vmem [shape: f32[1,128], index: 2, kind: input, shape index: {}]
  %s3 = inlined_call_operand.vmem [shape: bf16[2,14,128], index: 3, kind: output, shape index: {}]
  %s4 = sld [smem:[#allocation0]]
  $region49: #{aves_forward.6} parent=0
    _
  %s6 = ssub.s32 1, %s4
  %s7 = scalar_select 0, %s6, %s4
  $region1: #{aves_forward.6} parent=0
    #allocation2 [shape = 'u8[131072]{0}', space=vmem, size = 0x20000, scoped, tag = 'input window, operand 1, single buffered']
    #allocation3 [shape = 's32[2]{0}', space=sflag, size = 0x8, scoped, tag = 'scoped memory for aves_forward.6']
    %8 = vsyncpa [#allocation3], 0
    loop: start=0, step=1, limit=4
    $region2: #{aves_forward.6} parent=1 // loop_pre_header
      _
    $region3: #{aves_forward.6} parent=1 // loop_header
      %s10 = sphi 0, %s14
      %p11 = scmp.ge.s32.totalorder %s10, 4
      %s20 = sphi 0, %s22
      %s23 = sphi 0, %s20
      %s24 = sphi 0, %s23
      %s40 = sphi 0, %s24
      %s44 = sphi 0, %s44
      %s46 = sphi 0, %s44
      %s47 = sphi 0, %s46
      %s61 = sphi 0, %s47
      %s65 = sphi 0, %s65
      %s67 = sphi 0, %s65
      %s68 = sphi 0, %s67
      %s82 = sphi 0, %s68
      %s88 = sphi 0, %s90
      %s91 = sphi 0, %s88
      %s92 = sphi 0, %s91
      %s108 = sphi 0, %s92
    $region4: #{aves_forward.6} parent=1 // loop_header_branch
      %13 = sbr.rel (%p11) target = $region8
    $region5: #{aves_forward.6} parent=1 // loop_body
      %s15 = ssub.s32 %s10, 1
      %s16 = ssub.s32 %s10, 2
      %s17 = sadd.s32 %s10, 1
      %s18 = ssub.s32 %s10, %s17
      %p19 = scmp.eq.s32.totalorder %s18, 0
      %s21 = sadd.s32 %s20, 1
      %s22 = scalar_select %p19, %s20, %s21
      %p25 = pneg %p19
      %p26 = scmp.eq.s32.totalorder %s10, 1
      %p27 = por %p25, %p26
      %p28 = scmp.ne.s32.totalorder %s20, %s23
      %p29 = scmp.eq.s32.totalorder %s10, 0
      %p30 = por %p28, %p29
      %p31 = scmp.ne.s32.totalorder %s20, %s23
      %p32 = scmp.eq.s32.totalorder %s15, 1
      %p33 = por %p31, %p32
      %p34 = scmp.ne.s32.totalorder %s23, %s24
      %p35 = scmp.eq.s32.totalorder %s15, 0
      %p36 = por %p34, %p35
      %p37 = scmp.ne.s32.totalorder %s23, %s24
      %p38 = scmp.eq.s32.totalorder %s16, 1
      %p39 = por %p37, %p38
      %p41 = scmp.ne.s32.totalorder %s24, %s40
      %p42 = scmp.eq.s32.totalorder %s16, 0
      %p43 = por %p41, %p42
      %s45 = sadd.s32 %s44, 1
      %p48 = scmp.eq.s32.totalorder %s10, 1
      %p49 = scmp.ne.s32.totalorder %s44, %s46
      %p50 = scmp.eq.s32.totalorder %s10, 0
      %p51 = por %p49, %p50
      %p52 = scmp.ne.s32.totalorder %s44, %s46
      %p53 = scmp.eq.s32.totalorder %s15, 1
      %p54 = por %p52, %p53
      %p55 = scmp.ne.s32.totalorder %s46, %s47
      %p56 = scmp.eq.s32.totalorder %s15, 0
      %p57 = por %p55, %p56
      %p58 = scmp.ne.s32.totalorder %s46, %s47
      %p59 = scmp.eq.s32.totalorder %s16, 1
      %p60 = por %p58, %p59
      %p62 = scmp.ne.s32.totalorder %s47, %s61
      %p63 = scmp.eq.s32.totalorder %s16, 0
      %p64 = por %p62, %p63
      %s66 = sadd.s32 %s65, 1
      %p69 = scmp.eq.s32.totalorder %s10, 1
      %p70 = scmp.ne.s32.totalorder %s65, %s67
      %p71 = scmp.eq.s32.totalorder %s10, 0
      %p72 = por %p70, %p71
      %p73 = scmp.ne.s32.totalorder %s65, %s67
      %p74 = scmp.eq.s32.totalorder %s15, 1
      %p75 = por %p73, %p74
      %p76 = scmp.ne.s32.totalorder %s67, %s68
      %p77 = scmp.eq.s32.totalorder %s15, 0
      %p78 = por %p76, %p77
      %p79 = scmp.ne.s32.totalorder %s67, %s68
      %p80 = scmp.eq.s32.totalorder %s16, 1
      %p81 = por %p79, %p80
      %p83 = scmp.ne.s32.totalorder %s68, %s82
      %p84 = scmp.eq.s32.totalorder %s16, 0
      %p85 = por %p83, %p84
      %s86 = ssub.s32 %s10, %s17
      %p87 = scmp.eq.s32.totalorder %s86, 0
      %s89 = sadd.s32 %s88, 1
      %s90 = scalar_select %p87, %s88, %s89
      %p93 = pneg %p87
      %p94 = scmp.eq.s32.totalorder %s10, 1
      %p95 = por %p93, %p94
      %p96 = scmp.ne.s32.totalorder %s88, %s91
      %p97 = scmp.eq.s32.totalorder %s10, 0
      %p98 = por %p96, %p97
      %p99 = scmp.ne.s32.totalorder %s88, %s91
      %p100 = scmp.eq.s32.totalorder %s15, 1
      %p101 = por %p99, %p100
      %p102 = scmp.ne.s32.totalorder %s91, %s92
      %p103 = scmp.eq.s32.totalorder %s15, 0
      %p104 = por %p102, %p103
      %p105 = scmp.ne.s32.totalorder %s91, %s92
      %p106 = scmp.eq.s32.totalorder %s16, 1
      %p107 = por %p105, %p106
      %p109 = scmp.ne.s32.totalorder %s92, %s108
      %p110 = scmp.eq.s32.totalorder %s16, 0
      %p111 = por %p109, %p110
      %p112 = scmp.le.s32.totalorder 1, %s10
      %p113 = scmp.lt.s32.totalorder %s10, 3
      %p114 = pnand %p112, %p113
      %p115 = pneg %p114
      // Predicated region
      $region9: #{aves_forward.6} parent=5 // pred_check
        _
      $region10: #{aves_forward.6} parent=5 // pred_check_branch
        %117 = sbr.rel (%p114) target = $region12
      $region11: #{aves_forward.6} parent=5 // pred_region
        %s118 = ssub.s32 %s10, 1
        // Predicated region
        $region13: #{aves_forward.6} parent=11 // pred_check
          %p119 = pneg %p57
        $region14: #{aves_forward.6} parent=11 // pred_check_branch
          %121 = sbr.rel (%p119) target = $region16
        $region15: #{aves_forward.6} parent=11 // pred_region
          %s123 = ssub.s32 4096, 4096
          %124 = vsyncadd [#allocation3], %s123
          %s125 = sshll.u32 [#allocation2], 4
          %s126 = int_to_ptr.vmem [resolvable:$true] %s125
          %131 = dma.hbm_to_vmem [thread:$0]  %s1, 4096, %s126, [#allocation3], 64, 64, 4
        $region16: #{aves_forward.6} parent=11 // pred_fallthru
          _
        // Predicated region
        $region17: #{aves_forward.6} parent=11 // pred_check
          %p132 = pneg %p78
        $region18: #{aves_forward.6} parent=11 // pred_check_branch
          %134 = sbr.rel (%p132) target = $region20
        $region19: #{aves_forward.6} parent=11 // pred_region
          _
        $region20: #{aves_forward.6} parent=11 // pred_fallthru
          _
      $region12: #{aves_forward.6} parent=5 // pred_fallthru
        _
      %p135 = scmp.lt.s32.totalorder %s10, 2
      // Predicated region
      $region21: #{aves_forward.6} parent=5 // pred_check
        %p136 = pneg %p135
      $region22: #{aves_forward.6} parent=5 // pred_check_branch
        %138 = sbr.rel (%p136) target = $region24
      $region23: #{aves_forward.6} parent=5 // pred_region
        // Predicated region
        $region25: #{aves_forward.6} parent=23 // pred_check
          %p139 = pneg %p30
        $region26: #{aves_forward.6} parent=23 // pred_check_branch
          %141 = sbr.rel (%p139) target = $region28
        $region27: #{aves_forward.6} parent=23 // pred_region
          %p142 = scmp.lt.s32.totalorder %s10, 1
          %s143 = scalar_select %p142, %s10, 1
          %s144 = smul.addr %s143, 4
          %s145 = smul.addr %s144, 4
          %s146 = scalar_lea.vmem %s0, %s145
        $region28: #{aves_forward.6} parent=23 // pred_fallthru
          _
      $region24: #{aves_forward.6} parent=5 // pred_fallthru
        _
      %p147 = scmp.le.s32.totalorder 1, %s10
      %p148 = scmp.lt.s32.totalorder %s10, 3
      %p149 = pnand %p147, %p148
      %p150 = pneg %p149
      // Predicated region
      $region29: #{aves_forward.6} parent=5 // pred_check
        _
      $region30: #{aves_forward.6} parent=5 // pred_check_branch
        %152 = sbr.rel (%p149) target = $region32
      $region31: #{aves_forward.6} parent=5 // pred_region
        %s153 = ssub.s32 %s10, 1
        // Predicated region
        $region33: #{aves_forward.6} parent=31 // pred_check
          %p154 = pneg %p57
        $region34: #{aves_forward.6} parent=31 // pred_check_branch
          %156 = sbr.rel (%p154) target = $region36
        $region35: #{aves_forward.6} parent=31 // pred_region
          %157 = dma.done [#allocation3], 4096
        $region36: #{aves_forward.6} parent=31 // pred_fallthru
          _
        %p158 = scmp.lt.s32.totalorder %s15, 1
        %s159 = scalar_select %p158, %s15, 1
        %s160 = smul.addr %s159, 4
        %s161 = smul.addr %s160, 4
        %s162 = scalar_lea.vmem %s0, %s161
        %p163 = pneg %p36
        %p164 = pneg %p33
        %p165 = pneg %p57
        %p166 = pneg %p54
        %p167 = pneg %p78
        %p168 = pneg %p75
        %p169 = pneg %p104
        %p170 = pneg %p101
        %p171 = scmp.lt.s32.totalorder %s15, 1
        %s172 = scalar_select %p171, %s15, 1
        %s173 = smul.addr %s172, 2
        %s174 = smul.addr %s173, 4
        %s175 = scalar_lea.vmem %s3, %s174
        %p176 = scmp.lt.s32.totalorder %s15, 1
        %s177 = scalar_select %p176, %s15, 1
        %s178 = smul.addr %s177, 4
        %s179 = smul.addr %s178, 4
        %s180 = scalar_lea.vmem %s0, %s179
        %p181 = scmp.lt.s32.totalorder %s15, 1
        %s182 = scalar_select %p181, %s15, 1
        %s183 = smul.addr %s182, 2
        %s184 = smul.addr %s183, 4
        %s185 = scalar_lea.vmem %s3, %s184
        %v187 = vld [vmem:[%s180] sm:$0xff]
        %v188 = vld [vmem:[%s180 + $0x8] sm:$0xff]
        %v191 = vunpack.c.l.b16 %v187
        %v192 = vunpack.c.h.b16 %v187
        %v193 = vunpack.c.l.b16 %v188
        %v194 = vunpack.c.h.b16 %v188
        %v195 = vpack.c.b16 %v193, %v191
        %v196 = vpack.c.b16 %v194, %v192
        %v200 = vshrl.u32 %v195, 16
        %v202 = vshll.u32 %v195, 16
        %v204 = vrot.slane %v202, 1
        %v205 = vor.u32 %v200, %v204
        %v207 = vshrl.u32 %v196, 16
        %v209 = vshll.u32 %v196, 16
        %v211 = vrot.slane %v209, 1
        %v212 = vor.u32 %v207, %v211
        %v215 = vld [vmem:[#allocation2] sm:$0xf]
        %v216 = vld [vmem:[#allocation2 + $0x4] sm:$0xf]
        %v217 = vld [vmem:[#allocation2 + $0x8] sm:$0xf]
        %v218 = vld [vmem:[#allocation2 + $0xc] sm:$0xf]
        %v219 = vld [vmem:[#allocation2 + $0x10] sm:$0xf]
        %v220 = vld [vmem:[#allocation2 + $0x14] sm:$0xf]
        %v221 = vld [vmem:[#allocation2 + $0x18] sm:$0xf]
        %v222 = vld [vmem:[#allocation2 + $0x1c] sm:$0xf]
        %v223 = vld [vmem:[#allocation2 + $0x20] sm:$0xf]
        %v224 = vld [vmem:[#allocation2 + $0x24] sm:$0xf]
        %v225 = vld [vmem:[#allocation2 + $0x28] sm:$0xf]
        %v226 = vld [vmem:[#allocation2 + $0x2c] sm:$0xf]
        %v227 = vld [vmem:[#allocation2 + $0x30] sm:$0xf]
        %v228 = vld [vmem:[#allocation2 + $0x34] sm:$0xf]
        %v229 = vld [vmem:[#allocation2 + $0x38] sm:$0xf]
        %v230 = vld [vmem:[#allocation2 + $0x3c] sm:$0xf]
        %v231 = vld [vmem:[#allocation2 + $0x40] sm:$0xf]
        %v232 = vld [vmem:[#allocation2 + $0x44] sm:$0xf]
        %v233 = vld [vmem:[#allocation2 + $0x48] sm:$0xf]
        %v234 = vld [vmem:[#allocation2 + $0x4c] sm:$0xf]
        %v235 = vld [vmem:[#allocation2 + $0x50] sm:$0xf]
        %v236 = vld [vmem:[#allocation2 + $0x54] sm:$0xf]
        %v237 = vld [vmem:[#allocation2 + $0x58] sm:$0xf]
        %v238 = vld [vmem:[#allocation2 + $0x5c] sm:$0xf]
        %v239 = vld [vmem:[#allocation2 + $0x60] sm:$0xf]
        %v240 = vld [vmem:[#allocation2 + $0x64] sm:$0xf]
        %v241 = vld [vmem:[#allocation2 + $0x68] sm:$0xf]
        %v242 = vld [vmem:[#allocation2 + $0x6c] sm:$0xf]
        %v243 = vld [vmem:[#allocation2 + $0x70] sm:$0xf]
        %v244 = vld [vmem:[#allocation2 + $0x74] sm:$0xf]
        %v245 = vld [vmem:[#allocation2 + $0x78] sm:$0xf]
        %v246 = vld [vmem:[#allocation2 + $0x7c] sm:$0xf]
        %v247 = vld [vmem:[#allocation2 + $0x80] sm:$0xf]
        %v248 = vld [vmem:[#allocation2 + $0x84] sm:$0xf]
        %v249 = vld [vmem:[#allocation2 + $0x88] sm:$0xf]
        %v250 = vld [vmem:[#allocation2 + $0x8c] sm:$0xf]
        %v251 = vld [vmem:[#allocation2 + $0x90] sm:$0xf]
        %v252 = vld [vmem:[#allocation2 + $0x94] sm:$0xf]
        %v253 = vld [vmem:[#allocation2 + $0x98] sm:$0xf]
        %v254 = vld [vmem:[#allocation2 + $0x9c] sm:$0xf]
        %v255 = vld [vmem:[#allocation2 + $0xa0] sm:$0xf]
        %v256 = vld [vmem:[#allocation2 + $0xa4] sm:$0xf]
        %v257 = vld [vmem:[#allocation2 + $0xa8] sm:$0xf]
        %v258 = vld [vmem:[#allocation2 + $0xac] sm:$0xf]
        %v259 = vld [vmem:[#allocation2 + $0xb0] sm:$0xf]
        %v260 = vld [vmem:[#allocation2 + $0xb4] sm:$0xf]
        %v261 = vld [vmem:[#allocation2 + $0xb8] sm:$0xf]
        %v262 = vld [vmem:[#allocation2 + $0xbc] sm:$0xf]
        %v263 = vld [vmem:[#allocation2 + $0xc0] sm:$0xf]
        %v264 = vld [vmem:[#allocation2 + $0xc4] sm:$0xf]
        %v265 = vld [vmem:[#allocation2 + $0xc8] sm:$0xf]
        %v266 = vld [vmem:[#allocation2 + $0xcc] sm:$0xf]
        %v267 = vld [vmem:[#allocation2 + $0xd0] sm:$0xf]
        %v268 = vld [vmem:[#allocation2 + $0xd4] sm:$0xf]
        %v269 = vld [vmem:[#allocation2 + $0xd8] sm:$0xf]
        %v270 = vld [vmem:[#allocation2 + $0xdc] sm:$0xf]
        %v271 = vld [vmem:[#allocation2 + $0xe0] sm:$0xf]
        %v272 = vld [vmem:[#allocation2 + $0xe4] sm:$0xf]
        %v273 = vld [vmem:[#allocation2 + $0xe8] sm:$0xf]
        %v274 = vld [vmem:[#allocation2 + $0xec] sm:$0xf]
        %v275 = vld [vmem:[#allocation2 + $0xf0] sm:$0xf]
        %v276 = vld [vmem:[#allocation2 + $0xf4] sm:$0xf]
        %v277 = vld [vmem:[#allocation2 + $0xf8] sm:$0xf]
        %v278 = vld [vmem:[#allocation2 + $0xfc] sm:$0xf]
        %v279 = vld [vmem:[%s2] sm:$0x1]
        %v281 = vlaneseq
        %v282 = vshrl.u32 %v281, 7
        %v283 = vsub.s32 0, %v282
        %v284 = vrot.slane %v279, %v283
        %v350 = vunpack.c.l.b16 %v215
        %v351 = vunpack.c.l.b16 %v216
        %v352 = vunpack.c.l.b16 %v217
        %v353 = vunpack.c.l.b16 %v218
        %v354 = vunpack.c.l.b16 %v219
        %v355 = vunpack.c.l.b16 %v220
        %v356 = vunpack.c.l.b16 %v221
        %v357 = vunpack.c.l.b16 %v222
        %v358 = vunpack.c.l.b16 %v223
        %v359 = vunpack.c.l.b16 %v224
        %v360 = vunpack.c.l.b16 %v225
        %v361 = vunpack.c.l.b16 %v226
        %v362 = vunpack.c.l.b16 %v227
        %v363 = vunpack.c.l.b16 %v228
        %v364 = vunpack.c.l.b16 %v229
        %v365 = vunpack.c.l.b16 %v230
        %v366 = vunpack.c.l.b16 %v231
        %v367 = vunpack.c.l.b16 %v232
        %v368 = vunpack.c.l.b16 %v233
        %v369 = vunpack.c.l.b16 %v234
        %v370 = vunpack.c.l.b16 %v235
        %v371 = vunpack.c.l.b16 %v236
        %v372 = vunpack.c.l.b16 %v237
        %v373 = vunpack.c.l.b16 %v238
        %v374 = vunpack.c.l.b16 %v239
        %v375 = vunpack.c.l.b16 %v240
        %v376 = vunpack.c.l.b16 %v241
        %v377 = vunpack.c.l.b16 %v242
        %v378 = vunpack.c.l.b16 %v243
        %v379 = vunpack.c.l.b16 %v244
        %v380 = vunpack.c.l.b16 %v245
        %v381 = vunpack.c.l.b16 %v246
        %v382 = vunpack.c.l.b16 %v247
        %v383 = vunpack.c.l.b16 %v248
        %v384 = vunpack.c.l.b16 %v249
        %v385 = vunpack.c.l.b16 %v250
        %v386 = vunpack.c.l.b16 %v251
        %v387 = vunpack.c.l.b16 %v252
        %v388 = vunpack.c.l.b16 %v253
        %v389 = vunpack.c.l.b16 %v254
        %v390 = vunpack.c.l.b16 %v255
        %v391 = vunpack.c.l.b16 %v256
        %v392 = vunpack.c.l.b16 %v257
        %v393 = vunpack.c.l.b16 %v258
        %v394 = vunpack.c.l.b16 %v259
        %v395 = vunpack.c.l.b16 %v260
        %v396 = vunpack.c.l.b16 %v261
        %v397 = vunpack.c.l.b16 %v262
        %v398 = vunpack.c.l.b16 %v263
        %v399 = vunpack.c.l.b16 %v264
        %v400 = vunpack.c.l.b16 %v265
        %v401 = vunpack.c.l.b16 %v266
        %v402 = vunpack.c.l.b16 %v267
        %v403 = vunpack.c.l.b16 %v268
        %v404 = vunpack.c.l.b16 %v269
        %v405 = vunpack.c.l.b16 %v270
        %v406 = vunpack.c.l.b16 %v271
        %v407 = vunpack.c.l.b16 %v272
        %v408 = vunpack.c.l.b16 %v273
        %v409 = vunpack.c.l.b16 %v274
        %v410 = vunpack.c.l.b16 %v275
        %v411 = vunpack.c.l.b16 %v276
        %v412 = vunpack.c.l.b16 %v277
        %v413 = vunpack.c.l.b16 %v278
        %v414 = vpack.c.b16 %v351, %v350
        %v415 = vpack.c.b16 %v353, %v352
        %v416 = vpack.c.b16 %v355, %v354
        %v417 = vpack.c.b16 %v357, %v356
        %v418 = vpack.c.b16 %v359, %v358
        %v419 = vpack.c.b16 %v361, %v360
        %v420 = vpack.c.b16 %v363, %v362
        %v421 = vpack.c.b16 %v365, %v364
        %v422 = vpack.c.b16 %v367, %v366
        %v423 = vpack.c.b16 %v369, %v368
        %v424 = vpack.c.b16 %v371, %v370
        %v425 = vpack.c.b16 %v373, %v372
        %v426 = vpack.c.b16 %v375, %v374
        %v427 = vpack.c.b16 %v377, %v376
        %v428 = vpack.c.b16 %v379, %v378
        %v429 = vpack.c.b16 %v381, %v380
        %v430 = vpack.c.b16 %v383, %v382
        %v431 = vpack.c.b16 %v385, %v384
        %v432 = vpack.c.b16 %v387, %v386
        %v433 = vpack.c.b16 %v389, %v388
        %v434 = vpack.c.b16 %v391, %v390
        %v435 = vpack.c.b16 %v393, %v392
        %v436 = vpack.c.b16 %v395, %v394
        %v437 = vpack.c.b16 %v397, %v396
        %v438 = vpack.c.b16 %v399, %v398
        %v439 = vpack.c.b16 %v401, %v400
        %v440 = vpack.c.b16 %v403, %v402
        %v441 = vpack.c.b16 %v405, %v404
        %v442 = vpack.c.b16 %v407, %v406
        %v443 = vpack.c.b16 %v409, %v408
        %v444 = vpack.c.b16 %v411, %v410
        %v445 = vpack.c.b16 %v413, %v412
        %478 = vmatprep.subr.bf16.mxu0 0
        %479 = vmatpush1.bf16.msra.mxu0 %v414
        %480 = vmatprep.subr.bf16.mxu0 0
        %481 = vmatpush1.bf16.msra.mxu0 %v415
        %482 = vmatprep.subr.bf16.mxu0 0
        %483 = vmatpush1.bf16.msra.mxu0 %v416
        %484 = vmatprep.subr.bf16.mxu0 0
        %485 = vmatpush1.bf16.msra.mxu0 %v417
        %486 = vmatprep.subr.bf16.mxu0 0
        %487 = vmatpush1.bf16.msra.mxu0 %v418
        %488 = vmatprep.subr.bf16.mxu0 0
        %489 = vmatpush1.bf16.msra.mxu0 %v419
        %490 = vmatprep.subr.bf16.mxu0 0
        %491 = vmatpush1.bf16.msra.mxu0 %v420
        %492 = vmatprep.subr.bf16.mxu0 0
        %493 = vmatpush1.bf16.msra.mxu0 %v421
        %494 = vmatprep.subr.bf16.mxu0 0
        %495 = vmatpush1.bf16.msra.mxu0 %v422
        %496 = vmatprep.subr.bf16.mxu0 0
        %497 = vmatpush1.bf16.msra.mxu0 %v423
        %498 = vmatprep.subr.bf16.mxu0 0
        %499 = vmatpush1.bf16.msra.mxu0 %v424
        %500 = vmatprep.subr.bf16.mxu0 0
        %501 = vmatpush1.bf16.msra.mxu0 %v425
        %502 = vmatprep.subr.bf16.mxu0 0
        %503 = vmatpush1.bf16.msra.mxu0 %v426
        %504 = vmatprep.subr.bf16.mxu0 0
        %505 = vmatpush1.bf16.msra.mxu0 %v427
        %506 = vmatprep.subr.bf16.mxu0 0
        %507 = vmatpush1.bf16.msra.mxu0 %v428
        %508 = vmatprep.subr.bf16.mxu0 0
        %509 = vmatpush1.bf16.msra.mxu0 %v429
        %510 = vmatprep.mubr.bf16.mxu0 %v196
        %511 = vmatmul.mubr.bf16.gmra.mrb[0].mxu0 %v195
        %v512 = vpop.f32.mrb[0].mxu0
        %v513 = vadd.f32 %v284, %v512
        %v514 = vpop.f32.mrb[0].mxu0
        %v515 = vpop.f32.mrb[0].mxu0
        %v516 = vadd.f32 %v284, %v515
        %v517 = vpop.f32.mrb[0].mxu0
        %518 = vdwg.mxu0
        %519 = vmatprep.subr.bf16.mxu0 0
        %520 = vmatpush1.bf16.msra.mxu0 %v430
        %521 = vmatprep.subr.bf16.mxu0 0
        %522 = vmatpush1.bf16.msra.mxu0 %v431
        %523 = vmatprep.subr.bf16.mxu0 0
        %524 = vmatpush1.bf16.msra.mxu0 %v432
        %525 = vmatprep.subr.bf16.mxu0 0
        %526 = vmatpush1.bf16.msra.mxu0 %v433
        %527 = vmatprep.subr.bf16.mxu0 0
        %528 = vmatpush1.bf16.msra.mxu0 %v434
        %529 = vmatprep.subr.bf16.mxu0 0
        %530 = vmatpush1.bf16.msra.mxu0 %v435
        %531 = vmatprep.subr.bf16.mxu0 0
        %532 = vmatpush1.bf16.msra.mxu0 %v436
        %533 = vmatprep.subr.bf16.mxu0 0
        %534 = vmatpush1.bf16.msra.mxu0 %v437
        %535 = vmatprep.subr.bf16.mxu0 0
        %536 = vmatpush1.bf16.msra.mxu0 %v438
        %537 = vmatprep.subr.bf16.mxu0 0
        %538 = vmatpush1.bf16.msra.mxu0 %v439
        %539 = vmatprep.subr.bf16.mxu0 0
        %540 = vmatpush1.bf16.msra.mxu0 %v440
        %541 = vmatprep.subr.bf16.mxu0 0
        %542 = vmatpush1.bf16.msra.mxu0 %v441
        %543 = vmatprep.subr.bf16.mxu0 0
        %544 = vmatpush1.bf16.msra.mxu0 %v442
        %545 = vmatprep.subr.bf16.mxu0 0
        %546 = vmatpush1.bf16.msra.mxu0 %v443
        %547 = vmatprep.subr.bf16.mxu0 0
        %548 = vmatpush1.bf16.msra.mxu0 %v444
        %549 = vmatprep.subr.bf16.mxu0 0
        %550 = vmatpush1.bf16.msra.mxu0 %v445
        %551 = vmatprep.mubr.bf16.mxu0 %v212
        %552 = vmatmul.mubr.bf16.gmra.mrb[0].mxu0 %v205
        %v553 = vpop.f32.mrb[0].mxu0
        %v554 = vadd.f32 %v513, %v553
        %v555 = vpop.f32.mrb[0].mxu0
        %v556 = vpop.f32.mrb[0].mxu0
        %v557 = vadd.f32 %v516, %v556
        %v558 = vpop.f32.mrb[0].mxu0
        %559 = vdwg.mxu0
        %v560 = vmul.f32 %v554, %v554
        %v561 = vmul.f32 %v557, %v557
        %v562 = vmul.f32 %v554, %v560
        %v563 = vmul.f32 %v557, %v561
        %v564 = vmul.f32 %v562, 0.044715
        %v565 = vmul.f32 %v563, 0.044715
        %v566 = vadd.f32 %v554, %v564
        %v567 = vadd.f32 %v557, %v565
        %v568 = vmul.f32 %v566, 0.7978846
        %v569 = vmul.f32 %v567, 0.7978846
        %v570 = vtanh.pop %v568
        %v571 = vtanh.pop %v569
        %v572 = vadd.f32 %v570, 1.0
        %v573 = vadd.f32 %v571, 1.0
        %v574 = vmul.f32 %v572, 0.5
        %v575 = vmul.f32 %v573, 0.5
        %v576 = vmul.f32 %v554, %v574
        %v577 = vmul.f32 %v557, %v575
        %v578 = vpack.c.bf16 %v577, %v576
        %v580 = vunpack.c.l.b16 %v578
        %v581 = vunpack.c.h.b16 %v578
        %v582 = vpack.c.b16 %v580, %v580
        %v583 = vpack.c.b16 %v581, %v581
        %586 = vst [vmem:[%s185] sm:$0xf] %v582
        %587 = vst [vmem:[%s185 + $0x4] sm:$0x7] %v583
        %p588 = scmp.lt.s32.totalorder %s15, 1
        %s589 = scalar_select %p588, %s15, 1
        %s590 = smul.addr %s589, 2
        %s591 = smul.addr %s590, 4
        %s592 = scalar_lea.vmem %s3, %s591
        // Predicated region
        $region37: #{aves_forward.6} parent=31 // pred_check
          %p593 = pneg %p101
        $region38: #{aves_forward.6} parent=31 // pred_check_branch
          %595 = sbr.rel (%p593) target = $region40
        $region39: #{aves_forward.6} parent=31 // pred_region
          _
        $region40: #{aves_forward.6} parent=31 // pred_fallthru
          _
      $region32: #{aves_forward.6} parent=5 // pred_fallthru
        _
      %p596 = scmp.le.s32.totalorder 2, %s10
      // Predicated region
      $region41: #{aves_forward.6} parent=5 // pred_check
        %p597 = pneg %p596
      $region42: #{aves_forward.6} parent=5 // pred_check_branch
        %599 = sbr.rel (%p597) target = $region44
      $region43: #{aves_forward.6} parent=5 // pred_region
        %s600 = ssub.s32 %s10, 2
        // Predicated region
        $region45: #{aves_forward.6} parent=43 // pred_check
          %p601 = pneg %p107
        $region46: #{aves_forward.6} parent=43 // pred_check_branch
          %603 = sbr.rel (%p601) target = $region48
        $region47: #{aves_forward.6} parent=43 // pred_region
          %p604 = scmp.lt.s32.totalorder %s16, 1
          %s605 = scalar_select %p604, %s16, 1
          %s606 = smul.addr %s605, 2
          %s607 = smul.addr %s606, 4
          %s608 = scalar_lea.vmem %s3, %s607
        $region48: #{aves_forward.6} parent=43 // pred_fallthru
          _
      $region44: #{aves_forward.6} parent=5 // pred_fallthru
        _
    $region6: #{aves_forward.6} parent=1 // loop_footer
      %s14 = sadd.s32 1, %s10
    $region7: #{aves_forward.6} parent=1 // loop_footer_branch
      %9 = sbr.rel target = $region3
    $region8: #{aves_forward.6} parent=1 // loop_exit
      _
    %609 = vsyncpa [#allocation3], 1
    %s610 = scalar_lea.sflag [#allocation3], 1
    %611 = vsyncpa %s610, 1

// kernel: aves_forward.7
$region0: #{aves_forward.7}
  #allocation0 [shape = 'u32[]', space=smem, size = 0x4, offset = 0x4, fixed_abs, tag = 'smem constant byte address 0x4 - core index']
  #allocation1 [shape = 'u32[144,128]{1,0:T(1,128)}', space=vmem, size = 0x12000, scoped, tag = 'internal scratch']
  %s0 = inlined_call_operand.vmem [shape: bf16[2,14,128], index: 0, kind: input, shape index: {}]
  %s1 = inlined_call_operand.vmem [shape: f32[1,128], index: 1, kind: input, shape index: {}]
  %s2 = inlined_call_operand.vmem [shape: f32[1,128], index: 2, kind: input, shape index: {}]
  %s3 = inlined_call_operand.vmem [shape: bf16[128,128], index: 3, kind: input, shape index: {}]
  %s4 = inlined_call_operand.vmem [shape: f32[1,128], index: 4, kind: input, shape index: {}]
  %s5 = inlined_call_operand.vmem [shape: f32[1,128], index: 5, kind: input, shape index: {}]
  %s6 = inlined_call_operand.vmem [shape: f32[1,128], index: 6, kind: input, shape index: {}]
  %s7 = inlined_call_operand.vmem [shape: f32[2,14,128], index: 7, kind: output, shape index: {0}]
  %s8 = inlined_call_operand.vmem [shape: bf16[2,14,128], index: 8, kind: output, shape index: {1}]
  %9 = xla_tuple %s7, %s8
  %s10 = sld [smem:[#allocation0]]
  $region69: #{aves_forward.7} parent=0
    _
  %s12 = ssub.s32 1, %s10
  %s13 = scalar_select 0, %s12, %s10
  loop: start=0, step=1, limit=4
  $region2: #{aves_forward.7} parent=0 // loop_pre_header
    _
  $region3: #{aves_forward.7} parent=0 // loop_header
    %s15 = sphi 0, %s19
    %p16 = scmp.ge.s32.totalorder %s15, 4
    %s25 = sphi 0, %s27
    %s28 = sphi 0, %s25
    %s29 = sphi 0, %s28
    %s45 = sphi 0, %s29
    %s49 = sphi 0, %s49
    %s51 = sphi 0, %s49
    %s52 = sphi 0, %s51
    %s66 = sphi 0, %s52
    %s70 = sphi 0, %s70
    %s72 = sphi 0, %s70
    %s73 = sphi 0, %s72
    %s87 = sphi 0, %s73
    %s91 = sphi 0, %s91
    %s93 = sphi 0, %s91
    %s94 = sphi 0, %s93
    %s108 = sphi 0, %s94
    %s112 = sphi 0, %s112
    %s114 = sphi 0, %s112
    %s115 = sphi 0, %s114
    %s129 = sphi 0, %s115
    %s133 = sphi 0, %s133
    %s135 = sphi 0, %s133
    %s136 = sphi 0, %s135
    %s150 = sphi 0, %s136
    %s154 = sphi 0, %s154
    %s156 = sphi 0, %s154
    %s157 = sphi 0, %s156
    %s171 = sphi 0, %s157
    %s177 = sphi 0, %s179
    %s180 = sphi 0, %s177
    %s181 = sphi 0, %s180
    %s197 = sphi 0, %s181
    %s203 = sphi 0, %s205
    %s206 = sphi 0, %s203
    %s207 = sphi 0, %s206
    %s223 = sphi 0, %s207
  $region4: #{aves_forward.7} parent=0 // loop_header_branch
    %18 = sbr.rel (%p16) target = $region8
  $region5: #{aves_forward.7} parent=0 // loop_body
    %s20 = ssub.s32 %s15, 1
    %s21 = ssub.s32 %s15, 2
    %s22 = sadd.s32 %s15, 1
    %s23 = ssub.s32 %s15, %s22
    %p24 = scmp.eq.s32.totalorder %s23, 0
    %s26 = sadd.s32 %s25, 1
    %s27 = scalar_select %p24, %s25, %s26
    %p30 = pneg %p24
    %p31 = scmp.eq.s32.totalorder %s15, 1
    %p32 = por %p30, %p31
    %p33 = scmp.ne.s32.totalorder %s25, %s28
    %p34 = scmp.eq.s32.totalorder %s15, 0
    %p35 = por %p33, %p34
    %p36 = scmp.ne.s32.totalorder %s25, %s28
    %p37 = scmp.eq.s32.totalorder %s20, 1
    %p38 = por %p36, %p37
    %p39 = scmp.ne.s32.totalorder %s28, %s29
    %p40 = scmp.eq.s32.totalorder %s20, 0
    %p41 = por %p39, %p40
    %p42 = scmp.ne.s32.totalorder %s28, %s29
    %p43 = scmp.eq.s32.totalorder %s21, 1
    %p44 = por %p42, %p43
    %p46 = scmp.ne.s32.totalorder %s29, %s45
    %p47 = scmp.eq.s32.totalorder %s21, 0
    %p48 = por %p46, %p47
    %s50 = sadd.s32 %s49, 1
    %p53 = scmp.eq.s32.totalorder %s15, 1
    %p54 = scmp.ne.s32.totalorder %s49, %s51
    %p55 = scmp.eq.s32.totalorder %s15, 0
    %p56 = por %p54, %p55
    %p57 = scmp.ne.s32.totalorder %s49, %s51
    %p58 = scmp.eq.s32.totalorder %s20, 1
    %p59 = por %p57, %p58
    %p60 = scmp.ne.s32.totalorder %s51, %s52
    %p61 = scmp.eq.s32.totalorder %s20, 0
    %p62 = por %p60, %p61
    %p63 = scmp.ne.s32.totalorder %s51, %s52
    %p64 = scmp.eq.s32.totalorder %s21, 1
    %p65 = por %p63, %p64
    %p67 = scmp.ne.s32.totalorder %s52, %s66
    %p68 = scmp.eq.s32.totalorder %s21, 0
    %p69 = por %p67, %p68
    %s71 = sadd.s32 %s70, 1
    %p74 = scmp.eq.s32.totalorder %s15, 1
    %p75 = scmp.ne.s32.totalorder %s70, %s72
    %p76 = scmp.eq.s32.totalorder %s15, 0
    %p77 = por %p75, %p76
    %p78 = scmp.ne.s32.totalorder %s70, %s72
    %p79 = scmp.eq.s32.totalorder %s20, 1
    %p80 = por %p78, %p79
    %p81 = scmp.ne.s32.totalorder %s72, %s73
    %p82 = scmp.eq.s32.totalorder %s20, 0
    %p83 = por %p81, %p82
    %p84 = scmp.ne.s32.totalorder %s72, %s73
    %p85 = scmp.eq.s32.totalorder %s21, 1
    %p86 = por %p84, %p85
    %p88 = scmp.ne.s32.totalorder %s73, %s87
    %p89 = scmp.eq.s32.totalorder %s21, 0
    %p90 = por %p88, %p89
    %s92 = sadd.s32 %s91, 1
    %p95 = scmp.eq.s32.totalorder %s15, 1
    %p96 = scmp.ne.s32.totalorder %s91, %s93
    %p97 = scmp.eq.s32.totalorder %s15, 0
    %p98 = por %p96, %p97
    %p99 = scmp.ne.s32.totalorder %s91, %s93
    %p100 = scmp.eq.s32.totalorder %s20, 1
    %p101 = por %p99, %p100
    %p102 = scmp.ne.s32.totalorder %s93, %s94
    %p103 = scmp.eq.s32.totalorder %s20, 0
    %p104 = por %p102, %p103
    %p105 = scmp.ne.s32.totalorder %s93, %s94
    %p106 = scmp.eq.s32.totalorder %s21, 1
    %p107 = por %p105, %p106
    %p109 = scmp.ne.s32.totalorder %s94, %s108
    %p110 = scmp.eq.s32.totalorder %s21, 0
    %p111 = por %p109, %p110
    %s113 = sadd.s32 %s112, 1
    %p116 = scmp.eq.s32.totalorder %s15, 1
    %p117 = scmp.ne.s32.totalorder %s112, %s114
    %p118 = scmp.eq.s32.totalorder %s15, 0
    %p119 = por %p117, %p118
    %p120 = scmp.ne.s32.totalorder %s112, %s114
    %p121 = scmp.eq.s32.totalorder %s20, 1
    %p122 = por %p120, %p121
    %p123 = scmp.ne.s32.totalorder %s114, %s115
    %p124 = scmp.eq.s32.totalorder %s20, 0
    %p125 = por %p123, %p124
    %p126 = scmp.ne.s32.totalorder %s114, %s115
    %p127 = scmp.eq.s32.totalorder %s21, 1
    %p128 = por %p126, %p127
    %p130 = scmp.ne.s32.totalorder %s115, %s129
    %p131 = scmp.eq.s32.totalorder %s21, 0
    %p132 = por %p130, %p131
    %s134 = sadd.s32 %s133, 1
    %p137 = scmp.eq.s32.totalorder %s15, 1
    %p138 = scmp.ne.s32.totalorder %s133, %s135
    %p139 = scmp.eq.s32.totalorder %s15, 0
    %p140 = por %p138, %p139
    %p141 = scmp.ne.s32.totalorder %s133, %s135
    %p142 = scmp.eq.s32.totalorder %s20, 1
    %p143 = por %p141, %p142
    %p144 = scmp.ne.s32.totalorder %s135, %s136
    %p145 = scmp.eq.s32.totalorder %s20, 0
    %p146 = por %p144, %p145
    %p147 = scmp.ne.s32.totalorder %s135, %s136
    %p148 = scmp.eq.s32.totalorder %s21, 1
    %p149 = por %p147, %p148
    %p151 = scmp.ne.s32.totalorder %s136, %s150
    %p152 = scmp.eq.s32.totalorder %s21, 0
    %p153 = por %p151, %p152
    %s155 = sadd.s32 %s154, 1
    %p158 = scmp.eq.s32.totalorder %s15, 1
    %p159 = scmp.ne.s32.totalorder %s154, %s156
    %p160 = scmp.eq.s32.totalorder %s15, 0
    %p161 = por %p159, %p160
    %p162 = scmp.ne.s32.totalorder %s154, %s156
    %p163 = scmp.eq.s32.totalorder %s20, 1
    %p164 = por %p162, %p163
    %p165 = scmp.ne.s32.totalorder %s156, %s157
    %p166 = scmp.eq.s32.totalorder %s20, 0
    %p167 = por %p165, %p166
    %p168 = scmp.ne.s32.totalorder %s156, %s157
    %p169 = scmp.eq.s32.totalorder %s21, 1
    %p170 = por %p168, %p169
    %p172 = scmp.ne.s32.totalorder %s157, %s171
    %p173 = scmp.eq.s32.totalorder %s21, 0
    %p174 = por %p172, %p173
    %s175 = ssub.s32 %s15, %s22
    %p176 = scmp.eq.s32.totalorder %s175, 0
    %s178 = sadd.s32 %s177, 1
    %s179 = scalar_select %p176, %s177, %s178
    %p182 = pneg %p176
    %p183 = scmp.eq.s32.totalorder %s15, 1
    %p184 = por %p182, %p183
    %p185 = scmp.ne.s32.totalorder %s177, %s180
    %p186 = scmp.eq.s32.totalorder %s15, 0
    %p187 = por %p185, %p186
    %p188 = scmp.ne.s32.totalorder %s177, %s180
    %p189 = scmp.eq.s32.totalorder %s20, 1
    %p190 = por %p188, %p189
    %p191 = scmp.ne.s32.totalorder %s180, %s181
    %p192 = scmp.eq.s32.totalorder %s20, 0
    %p193 = por %p191, %p192
    %p194 = scmp.ne.s32.totalorder %s180, %s181
    %p195 = scmp.eq.s32.totalorder %s21, 1
    %p196 = por %p194, %p195
    %p198 = scmp.ne.s32.totalorder %s181, %s197
    %p199 = scmp.eq.s32.totalorder %s21, 0
    %p200 = por %p198, %p199
    %s201 = ssub.s32 %s15, %s22
    %p202 = scmp.eq.s32.totalorder %s201, 0
    %s204 = sadd.s32 %s203, 1
    %s205 = scalar_select %p202, %s203, %s204
    %p208 = pneg %p202
    %p209 = scmp.eq.s32.totalorder %s15, 1
    %p210 = por %p208, %p209
    %p211 = scmp.ne.s32.totalorder %s203, %s206
    %p212 = scmp.eq.s32.totalorder %s15, 0
    %p213 = por %p211, %p212
    %p214 = scmp.ne.s32.totalorder %s203, %s206
    %p215 = scmp.eq.s32.totalorder %s20, 1
    %p216 = por %p214, %p215
    %p217 = scmp.ne.s32.totalorder %s206, %s207
    %p218 = scmp.eq.s32.totalorder %s20, 0
    %p219 = por %p217, %p218
    %p220 = scmp.ne.s32.totalorder %s206, %s207
    %p221 = scmp.eq.s32.totalorder %s21, 1
    %p222 = por %p220, %p221
    %p224 = scmp.ne.s32.totalorder %s207, %s223
    %p225 = scmp.eq.s32.totalorder %s21, 0
    %p226 = por %p224, %p225
    %p227 = scmp.le.s32.totalorder 1, %s15
    %p228 = scmp.lt.s32.totalorder %s15, 3
    %p229 = pnand %p227, %p228
    %p230 = pneg %p229
    // Predicated region
    $region9: #{aves_forward.7} parent=5 // pred_check
      _
    $region10: #{aves_forward.7} parent=5 // pred_check_branch
      %232 = sbr.rel (%p229) target = $region12
    $region11: #{aves_forward.7} parent=5 // pred_region
      %s233 = ssub.s32 %s15, 1
      // Predicated region
      $region13: #{aves_forward.7} parent=11 // pred_check
        %p234 = pneg %p62
      $region14: #{aves_forward.7} parent=11 // pred_check_branch
        %236 = sbr.rel (%p234) target = $region16
      $region15: #{aves_forward.7} parent=11 // pred_region
        _
      $region16: #{aves_forward.7} parent=11 // pred_fallthru
        _
      // Predicated region
      $region17: #{aves_forward.7} parent=11 // pred_check
        %p237 = pneg %p83
      $region18: #{aves_forward.7} parent=11 // pred_check_branch
        %239 = sbr.rel (%p237) target = $region20
      $region19: #{aves_forward.7} parent=11 // pred_region
        _
      $region20: #{aves_forward.7} parent=11 // pred_fallthru
        _
      // Predicated region
      $region21: #{aves_forward.7} parent=11 // pred_check
        %p240 = pneg %p104
      $region22: #{aves_forward.7} parent=11 // pred_check_branch
        %242 = sbr.rel (%p240) target = $region24
      $region23: #{aves_forward.7} parent=11 // pred_region
        _
      $region24: #{aves_forward.7} parent=11 // pred_fallthru
        _
      // Predicated region
      $region25: #{aves_forward.7} parent=11 // pred_check
        %p243 = pneg %p125
      $region26: #{aves_forward.7} parent=11 // pred_check_branch
        %245 = sbr.rel (%p243) target = $region28
      $region27: #{aves_forward.7} parent=11 // pred_region
        _
      $region28: #{aves_forward.7} parent=11 // pred_fallthru
        _
      // Predicated region
      $region29: #{aves_forward.7} parent=11 // pred_check
        %p246 = pneg %p146
      $region30: #{aves_forward.7} parent=11 // pred_check_branch
        %248 = sbr.rel (%p246) target = $region32
      $region31: #{aves_forward.7} parent=11 // pred_region
        _
      $region32: #{aves_forward.7} parent=11 // pred_fallthru
        _
      // Predicated region
      $region33: #{aves_forward.7} parent=11 // pred_check
        %p249 = pneg %p167
      $region34: #{aves_forward.7} parent=11 // pred_check_branch
        %251 = sbr.rel (%p249) target = $region36
      $region35: #{aves_forward.7} parent=11 // pred_region
        _
      $region36: #{aves_forward.7} parent=11 // pred_fallthru
        _
    $region12: #{aves_forward.7} parent=5 // pred_fallthru
      _
    %p252 = scmp.lt.s32.totalorder %s15, 2
    // Predicated region
    $region37: #{aves_forward.7} parent=5 // pred_check
      %p253 = pneg %p252
    $region38: #{aves_forward.7} parent=5 // pred_check_branch
      %255 = sbr.rel (%p253) target = $region40
    $region39: #{aves_forward.7} parent=5 // pred_region
      // Predicated region
      $region41: #{aves_forward.7} parent=39 // pred_check
        %p256 = pneg %p35
      $region42: #{aves_forward.7} parent=39 // pred_check_branch
        %258 = sbr.rel (%p256) target = $region44
      $region43: #{aves_forward.7} parent=39 // pred_region
        %p259 = scmp.lt.s32.totalorder %s15, 1
        %s260 = scalar_select %p259, %s15, 1
        %s261 = smul.addr %s260, 2
        %s262 = smul.addr %s261, 4
        %s263 = scalar_lea.vmem %s0, %s262
      $region44: #{aves_forward.7} parent=39 // pred_fallthru
        _
    $region40: #{aves_forward.7} parent=5 // pred_fallthru
      _
    %p264 = scmp.le.s32.totalorder 1, %s15
    %p265 = scmp.lt.s32.totalorder %s15, 3
    %p266 = pnand %p264, %p265
    %p267 = pneg %p266
    // Predicated region
    $region45: #{aves_forward.7} parent=5 // pred_check
      _
    $region46: #{aves_forward.7} parent=5 // pred_check_branch
      %269 = sbr.rel (%p266) target = $region48
    $region47: #{aves_forward.7} parent=5 // pred_region
      %s270 = ssub.s32 %s15, 1
      %p271 = scmp.lt.s32.totalorder %s20, 1
      %s272 = scalar_select %p271, %s20, 1
      %s273 = smul.addr %s272, 2
      %s274 = smul.addr %s273, 4
      %s275 = scalar_lea.vmem %s0, %s274
      %p276 = pneg %p41
      %p277 = pneg %p38
      %p278 = pneg %p62
      %p279 = pneg %p59
      %p280 = pneg %p83
      %p281 = pneg %p80
      %p282 = pneg %p104
      %p283 = pneg %p101
      %p284 = pneg %p125
      %p285 = pneg %p122
      %p286 = pneg %p146
      %p287 = pneg %p143
      %p288 = pneg %p167
      %p289 = pneg %p164
      %p290 = pneg %p193
      %p291 = pneg %p190
      %p292 = scmp.lt.s32.totalorder %s20, 1
      %s293 = scalar_select %p292, %s20, 1
      %s294 = smul.addr %s293, 2
      %s295 = smul.addr %s294, 8
      %s296 = scalar_lea.vmem %s7, %s295
      %p297 = pneg %p219
      %p298 = pneg %p216
      %p299 = scmp.lt.s32.totalorder %s20, 1
      %s300 = scalar_select %p299, %s20, 1
      %s301 = smul.addr %s300, 2
      %s302 = smul.addr %s301, 4
      %s303 = scalar_lea.vmem %s8, %s302
      %p304 = scmp.lt.s32.totalorder %s20, 1
      %s305 = scalar_select %p304, %s20, 1
      %s306 = smul.addr %s305, 2
      %s307 = smul.addr %s306, 4
      %s308 = scalar_lea.vmem %s0, %s307
      %p309 = scmp.lt.s32.totalorder %s20, 1
      %s310 = scalar_select %p309, %s20, 1
      %s311 = smul.addr %s310, 2
      %s312 = smul.addr %s311, 8
      %s313 = scalar_lea.vmem %s7, %s312
      %p314 = scmp.lt.s32.totalorder %s20, 1
      %s315 = scalar_select %p314, %s20, 1
      %s316 = smul.addr %s315, 2
      %s317 = smul.addr %s316, 4
      %s318 = scalar_lea.vmem %s8, %s317
      %v320 = vld [vmem:[%s308] sm:$0xf]
      %v321 = vld [vmem:[%s308 + $0x4] sm:$0x7]
      %v322 = vunpack.c.l.bf16 %v320
      %v323 = vunpack.c.l.bf16 %v321
      %v324 = vld [vmem:[%s1] sm:$0x1]
      %v325 = vld [vmem:[%s2] sm:$0x1]
      %326 = vadd.xlane.f32.xlu0 %v322
      %v327 = vpop.xlane.xlu0 %326
      %vm328 = vcmask 1045504
      %v329 = vsel %vm328, %v323, 0.0
      %330 = vadd.xlane.f32.xlu0 %v329
      %v331 = vpop.xlane.xlu0 %330
      %v332 = vrcp.pop 128.0
      %v333 = vmul.f32 %v327, %v332
      %v334 = vmul.f32 %v331, %v332
      %v335 = vsub.f32 %v322, %v333
      %v336 = vsub.f32 %v323, %v334
      %v337 = vmul.f32 %v335, %v335
      %v338 = vmul.f32 %v336, %v336
      %339 = vadd.xlane.f32.xlu0 %v337
      %v340 = vpop.xlane.xlu0 %339
      %v341 = vsel %vm328, %v338, 0.0
      %342 = vadd.xlane.f32.xlu0 %v341
      %v343 = vpop.xlane.xlu0 %342
      %v344 = vmul.f32 %v340, %v332
      %v345 = vmul.f32 %v343, %v332
      %v346 = vadd.f32 %v344, 1e-05
      %v347 = vadd.f32 %v345, 1e-05
      %v348 = vrsqrt.pop %v346
      %v349 = vrsqrt.pop %v347
      %v350 = vmul.f32 %v335, %v348
      %v351 = vmul.f32 %v336, %v349
      %v353 = vlaneseq
      %v354 = vshrl.u32 %v353, 7
      %v355 = vsub.s32 0, %v354
      %v356 = vrot.slane %v324, %v355
      %v358 = vmul.f32 %v350, %v356
      %v359 = vmul.f32 %v351, %v356
      %v361 = vlaneseq
      %v362 = vshrl.u32 %v361, 7
      %v363 = vsub.s32 0, %v362
      %v364 = vrot.slane %v325, %v363
      %v366 = vadd.f32 %v358, %v364
      %v367 = vadd.f32 %v359, %v364
      %v368 = vpack.c.bf16 %v367, %v366
      %v369 = vld [vmem:[%s3] sm:$0xf]
      %v370 = vld [vmem:[%s3 + $0x4] sm:$0xf]
      %v371 = vld [vmem:[%s3 + $0x8] sm:$0xf]
      %v372 = vld [vmem:[%s3 + $0xc] sm:$0xf]
      %v373 = vld [vmem:[%s3 + $0x10] sm:$0xf]
      %v374 = vld [vmem:[%s3 + $0x14] sm:$0xf]
      %v375 = vld [vmem:[%s3 + $0x18] sm:$0xf]
      %v376 = vld [vmem:[%s3 + $0x1c] sm:$0xf]
      %v377 = vld [vmem:[%s3 + $0x20] sm:$0xf]
      %v378 = vld [vmem:[%s3 + $0x24] sm:$0xf]
      %v379 = vld [vmem:[%s3 + $0x28] sm:$0xf]
      %v380 = vld [vmem:[%s3 + $0x2c] sm:$0xf]
      %v381 = vld [vmem:[%s3 + $0x30] sm:$0xf]
      %v382 = vld [vmem:[%s3 + $0x34] sm:$0xf]
      %v383 = vld [vmem:[%s3 + $0x38] sm:$0xf]
      %v384 = vld [vmem:[%s3 + $0x3c] sm:$0xf]
      %v385 = vld [vmem:[%s4] sm:$0x1]
      %v387 = vlaneseq
      %v388 = vshrl.u32 %v387, 7
      %v389 = vsub.s32 0, %v388
      %v390 = vrot.slane %v385, %v389
      %v408 = vunpack.c.l.b16 %v369
      %v409 = vunpack.c.l.b16 %v370
      %v410 = vunpack.c.l.b16 %v371
      %v411 = vunpack.c.l.b16 %v372
      %v412 = vunpack.c.l.b16 %v373
      %v413 = vunpack.c.l.b16 %v374
      %v414 = vunpack.c.l.b16 %v375
      %v415 = vunpack.c.l.b16 %v376
      %v416 = vunpack.c.l.b16 %v377
      %v417 = vunpack.c.l.b16 %v378
      %v418 = vunpack.c.l.b16 %v379
      %v419 = vunpack.c.l.b16 %v380
      %v420 = vunpack.c.l.b16 %v381
      %v421 = vunpack.c.l.b16 %v382
      %v422 = vunpack.c.l.b16 %v383
      %v423 = vunpack.c.l.b16 %v384
      %v424 = vpack.c.b16 %v409, %v408
      %v425 = vpack.c.b16 %v411, %v410
      %v426 = vpack.c.b16 %v413, %v412
      %v427 = vpack.c.b16 %v415, %v414
      %v428 = vpack.c.b16 %v417, %v416
      %v429 = vpack.c.b16 %v419, %v418
      %v430 = vpack.c.b16 %v421, %v420
      %v431 = vpack.c.b16 %v423, %v422
      %440 = vmatprep.subr.bf16.mxu0 0
      %441 = vmatpush1.bf16.msra.mxu0 %v424
      %442 = vmatprep.subr.bf16.mxu0 0
      %443 = vmatpush1.bf16.msra.mxu0 %v425
      %444 = vmatprep.subr.bf16.mxu0 0
      %445 = vmatpush1.bf16.msra.mxu0 %v426
      %446 = vmatprep.subr.bf16.mxu0 0
      %447 = vmatpush1.bf16.msra.mxu0 %v427
      %448 = vmatprep.subr.bf16.mxu0 0
      %449 = vmatpush1.bf16.msra.mxu0 %v428
      %450 = vmatprep.subr.bf16.mxu0 0
      %451 = vmatpush1.bf16.msra.mxu0 %v429
      %452 = vmatprep.subr.bf16.mxu0 0
      %453 = vmatpush1.bf16.msra.mxu0 %v430
      %454 = vmatprep.subr.bf16.mxu0 0
      %455 = vmatpush1.bf16.msra.mxu0 %v431
      %456 = vmatprep.subr.bf16.mxu0 0
      %457 = vmatpush1.bf16.msra.mxu0 0
      %458 = vmatprep.subr.bf16.mxu0 0
      %459 = vmatpush1.bf16.msra.mxu0 0
      %460 = vmatprep.subr.bf16.mxu0 0
      %461 = vmatpush1.bf16.msra.mxu0 0
      %462 = vmatprep.subr.bf16.mxu0 0
      %463 = vmatpush1.bf16.msra.mxu0 0
      %464 = vmatprep.subr.bf16.mxu0 0
      %465 = vmatpush1.bf16.msra.mxu0 0
      %466 = vmatprep.subr.bf16.mxu0 0
      %467 = vmatpush1.bf16.msra.mxu0 0
      %468 = vmatprep.subr.bf16.mxu0 0
      %469 = vmatpush1.bf16.msra.mxu0 0
      %470 = vmatprep.subr.bf16.mxu0 0
      %471 = vmatpush1.bf16.msra.mxu0 0
      %472 = vmatprep.mubr.bf16.mxu0 0
      %473 = vmatmul.mubr.bf16.gmra.mrb[0].mxu0 %v368
      %v474 = vpop.f32.mrb[0].mxu0
      %v475 = vadd.f32 %v390, %v474
      %v476 = vpop.f32.mrb[0].mxu0
      %v477 = vpop.f32.mrb[0].mxu0
      %v478 = vadd.f32 %v390, %v477
      %v479 = vpop.f32.mrb[0].mxu0
      %480 = vdwg.mxu0
      %481 = vst [vmem:[%s313] sm:$0xff] %v475
      %482 = vst [vmem:[%s313 + $0x8] sm:$0x3f] %v478
      %v483 = vld [vmem:[%s5] sm:$0x1]
      %v484 = vld [vmem:[%s6] sm:$0x1]
      %485 = vadd.xlane.f32.xlu0 %v475
      %v486 = vpop.xlane.xlu0 %485
      %v487 = vsel %vm328, %v478, 0.0
      %488 = vadd.xlane.f32.xlu0 %v487
      %v489 = vpop.xlane.xlu0 %488
      %v490 = vmul.f32 %v486, %v332
      %v491 = vmul.f32 %v489, %v332
      %v492 = vsub.f32 %v475, %v490
      %v493 = vsub.f32 %v478, %v491
      %v494 = vmul.f32 %v492, %v492
      %v495 = vmul.f32 %v493, %v493
      %496 = vadd.xlane.f32.xlu0 %v494
      %v497 = vpop.xlane.xlu0 %496
      %v498 = vsel %vm328, %v495, 0.0
      %499 = vadd.xlane.f32.xlu0 %v498
      %v500 = vpop.xlane.xlu0 %499
      %v501 = vmul.f32 %v497, %v332
      %v502 = vmul.f32 %v500, %v332
      %v503 = vadd.f32 %v501, 1e-05
      %v504 = vadd.f32 %v502, 1e-05
      %v505 = vrsqrt.pop %v503
      %v506 = vrsqrt.pop %v504
      %v507 = vmul.f32 %v492, %v505
      %v508 = vmul.f32 %v493, %v506
      %v510 = vlaneseq
      %v511 = vshrl.u32 %v510, 7
      %v512 = vsub.s32 0, %v511
      %v513 = vrot.slane %v483, %v512
      %v515 = vmul.f32 %v507, %v513
      %v516 = vmul.f32 %v508, %v513
      %v518 = vlaneseq
      %v519 = vshrl.u32 %v518, 7
      %v520 = vsub.s32 0, %v519
      %v521 = vrot.slane %v484, %v520
      %v523 = vadd.f32 %v515, %v521
      %v524 = vadd.f32 %v516, %v521
      %v525 = vpack.c.bf16 %v524, %v523
      %v527 = vunpack.c.l.b16 %v525
      %v528 = vunpack.c.h.b16 %v525
      %v529 = vpack.c.b16 %v527, %v527
      %v530 = vpack.c.b16 %v528, %v528
      %533 = vst [vmem:[%s318] sm:$0xf] %v529
      %534 = vst [vmem:[%s318 + $0x4] sm:$0x7] %v530
      %p535 = scmp.lt.s32.totalorder %s20, 1
      %s536 = scalar_select %p535, %s20, 1
      %s537 = smul.addr %s536, 2
      %s538 = smul.addr %s537, 8
      %s539 = scalar_lea.vmem %s7, %s538
      %p540 = scmp.lt.s32.totalorder %s20, 1
      %s541 = scalar_select %p540, %s20, 1
      %s542 = smul.addr %s541, 2
      %s543 = smul.addr %s542, 4
      %s544 = scalar_lea.vmem %s8, %s543
      // Predicated region
      $region49: #{aves_forward.7} parent=47 // pred_check
        %p545 = pneg %p190
      $region50: #{aves_forward.7} parent=47 // pred_check_branch
        %547 = sbr.rel (%p545) target = $region52
      $region51: #{aves_forward.7} parent=47 // pred_region
        _
      $region52: #{aves_forward.7} parent=47 // pred_fallthru
        _
      // Predicated region
      $region53: #{aves_forward.7} parent=47 // pred_check
        %p548 = pneg %p216
      $region54: #{aves_forward.7} parent=47 // pred_check_branch
        %550 = sbr.rel (%p548) target = $region56
      $region55: #{aves_forward.7} parent=47 // pred_region
        _
      $region56: #{aves_forward.7} parent=47 // pred_fallthru
        _
    $region48: #{aves_forward.7} parent=5 // pred_fallthru
      _
    %p551 = scmp.le.s32.totalorder 2, %s15
    // Predicated region
    $region57: #{aves_forward.7} parent=5 // pred_check
      %p552 = pneg %p551
    $region58: #{aves_forward.7} parent=5 // pred_check_branch
      %554 = sbr.rel (%p552) target = $region60
    $region59: #{aves_forward.7} parent=5 // pred_region
      %s555 = ssub.s32 %s15, 2
      // Predicated region
      $region61: #{aves_forward.7} parent=59 // pred_check
        %p556 = pneg %p196
      $region62: #{aves_forward.7} parent=59 // pred_check_branch
        %558 = sbr.rel (%p556) target = $region64
      $region63: #{aves_forward.7} parent=59 // pred_region
        %p559 = scmp.lt.s32.totalorder %s21, 1
        %s560 = scalar_select %p559, %s21, 1
        %s561 = smul.addr %s560, 2
        %s562 = smul.addr %s561, 8
        %s563 = scalar_lea.vmem %s7, %s562
      $region64: #{aves_forward.7} parent=59 // pred_fallthru
        _
      // Predicated region
      $region65: #{aves_forward.7} parent=59 // pred_check
        %p564 = pneg %p222
      $region66: #{aves_forward.7} parent=59 // pred_check_branch
        %566 = sbr.rel (%p564) target = $region68
      $region67: #{aves_forward.7} parent=59 // pred_region
        %p567 = scmp.lt.s32.totalorder %s21, 1
        %s568 = scalar_select %p567, %s21, 1
        %s569 = smul.addr %s568, 2
        %s570 = smul.addr %s569, 4
        %s571 = scalar_lea.vmem %s8, %s570
      $region68: #{aves_forward.7} parent=59 // pred_fallthru
        _
    $region60: #{aves_forward.7} parent=5 // pred_fallthru
      _
  $region6: #{aves_forward.7} parent=0 // loop_footer
    %s19 = sadd.s32 1, %s15
  $region7: #{aves_forward.7} parent=0 // loop_footer_branch
    %14 = sbr.rel target = $region3
  $region8: #{aves_forward.7} parent=0 // loop_exit
    _

// kernel: aves_forward.8
$region0: #{aves_forward.8}
  #allocation0 [shape = 'u32[]', space=smem, size = 0x4, offset = 0x4, fixed_abs, tag = 'smem constant byte address 0x4 - core index']
  #allocation1 [shape = 'u32[144,128]{1,0:T(1,128)}', space=vmem, size = 0x12000, scoped, tag = 'internal scratch']
  %s0 = inlined_call_operand.vmem [shape: bf16[2,14,128], index: 0, kind: input, shape index: {}]
  %s1 = inlined_call_operand.vmem [shape: bf16[128,384], index: 1, kind: input, shape index: {}]
  %s2 = inlined_call_operand.vmem [shape: f32[1,384], index: 2, kind: input, shape index: {}]
  %s3 = inlined_call_operand.vmem [shape: bf16[128,128], index: 3, kind: input, shape index: {}]
  %s4 = inlined_call_operand.vmem [shape: f32[1,128], index: 4, kind: input, shape index: {}]
  %s5 = inlined_call_operand.vmem [shape: f32[1,128], index: 5, kind: input, shape index: {}]
  %s6 = inlined_call_operand.vmem [shape: f32[1,128], index: 6, kind: input, shape index: {}]
  %s7 = inlined_call_operand.vmem [shape: bf16[128,256], index: 7, kind: input, shape index: {}]
  %s8 = inlined_call_operand.vmem [shape: f32[1,256], index: 8, kind: input, shape index: {}]
  %s9 = inlined_call_operand.vmem [shape: bf16[256,128], index: 9, kind: input, shape index: {}]
  %s10 = inlined_call_operand.vmem [shape: f32[1,128], index: 10, kind: input, shape index: {}]
  %s11 = inlined_call_operand.vmem [shape: f32[1,128], index: 11, kind: input, shape index: {}]
  %s12 = inlined_call_operand.vmem [shape: f32[1,128], index: 12, kind: input, shape index: {}]
  %s13 = inlined_call_operand.vmem [shape: bf16[2,14,128], index: 13, kind: output, shape index: {}]
  %s14 = sld [smem:[#allocation0]]
  $region85: #{aves_forward.8} parent=0
    _
  %s16 = ssub.s32 1, %s14
  %s17 = scalar_select 0, %s16, %s14
  loop: start=0, step=1, limit=4
  $region2: #{aves_forward.8} parent=0 // loop_pre_header
    _
  $region3: #{aves_forward.8} parent=0 // loop_header
    %s19 = sphi 0, %s23
    %p20 = scmp.ge.s32.totalorder %s19, 4
    %s29 = sphi 0, %s31
    %s32 = sphi 0, %s29
    %s33 = sphi 0, %s32
    %s49 = sphi 0, %s33
    %s53 = sphi 0, %s53
    %s55 = sphi 0, %s53
    %s56 = sphi 0, %s55
    %s70 = sphi 0, %s56
    %s74 = sphi 0, %s74
    %s76 = sphi 0, %s74
    %s77 = sphi 0, %s76
    %s91 = sphi 0, %s77
    %s95 = sphi 0, %s95
    %s97 = sphi 0, %s95
    %s98 = sphi 0, %s97
    %s112 = sphi 0, %s98
    %s116 = sphi 0, %s116
    %s118 = sphi 0, %s116
    %s119 = sphi 0, %s118
    %s133 = sphi 0, %s119
    %s137 = sphi 0, %s137
    %s139 = sphi 0, %s137
    %s140 = sphi 0, %s139
    %s154 = sphi 0, %s140
    %s158 = sphi 0, %s158
    %s160 = sphi 0, %s158
    %s161 = sphi 0, %s160
    %s175 = sphi 0, %s161
    %s179 = sphi 0, %s179
    %s181 = sphi 0, %s179
    %s182 = sphi 0, %s181
    %s196 = sphi 0, %s182
    %s200 = sphi 0, %s200
    %s202 = sphi 0, %s200
    %s203 = sphi 0, %s202
    %s217 = sphi 0, %s203
    %s221 = sphi 0, %s221
    %s223 = sphi 0, %s221
    %s224 = sphi 0, %s223
    %s238 = sphi 0, %s224
    %s242 = sphi 0, %s242
    %s244 = sphi 0, %s242
    %s245 = sphi 0, %s244
    %s259 = sphi 0, %s245
    %s263 = sphi 0, %s263
    %s265 = sphi 0, %s263
    %s266 = sphi 0, %s265
    %s280 = sphi 0, %s266
    %s284 = sphi 0, %s284
    %s286 = sphi 0, %s284
    %s287 = sphi 0, %s286
    %s301 = sphi 0, %s287
    %s307 = sphi 0, %s309
    %s310 = sphi 0, %s307
    %s311 = sphi 0, %s310
    %s327 = sphi 0, %s311
  $region4: #{aves_forward.8} parent=0 // loop_header_branch
    %22 = sbr.rel (%p20) target = $region8
  $region5: #{aves_forward.8} parent=0 // loop_body
    %s24 = ssub.s32 %s19, 1
    %s25 = ssub.s32 %s19, 2
    %s26 = sadd.s32 %s19, 1
    %s27 = ssub.s32 %s19, %s26
    %p28 = scmp.eq.s32.totalorder %s27, 0
    %s30 = sadd.s32 %s29, 1
    %s31 = scalar_select %p28, %s29, %s30
    %p34 = pneg %p28
    %p35 = scmp.eq.s32.totalorder %s19, 1
    %p36 = por %p34, %p35
    %p37 = scmp.ne.s32.totalorder %s29, %s32
    %p38 = scmp.eq.s32.totalorder %s19, 0
    %p39 = por %p37, %p38
    %p40 = scmp.ne.s32.totalorder %s29, %s32
    %p41 = scmp.eq.s32.totalorder %s24, 1
    %p42 = por %p40, %p41
    %p43 = scmp.ne.s32.totalorder %s32, %s33
    %p44 = scmp.eq.s32.totalorder %s24, 0
    %p45 = por %p43, %p44
    %p46 = scmp.ne.s32.totalorder %s32, %s33
    %p47 = scmp.eq.s32.totalorder %s25, 1
    %p48 = por %p46, %p47
    %p50 = scmp.ne.s32.totalorder %s33, %s49
    %p51 = scmp.eq.s32.totalorder %s25, 0
    %p52 = por %p50, %p51
    %s54 = sadd.s32 %s53, 1
    %p57 = scmp.eq.s32.totalorder %s19, 1
    %p58 = scmp.ne.s32.totalorder %s53, %s55
    %p59 = scmp.eq.s32.totalorder %s19, 0
    %p60 = por %p58, %p59
    %p61 = scmp.ne.s32.totalorder %s53, %s55
    %p62 = scmp.eq.s32.totalorder %s24, 1
    %p63 = por %p61, %p62
    %p64 = scmp.ne.s32.totalorder %s55, %s56
    %p65 = scmp.eq.s32.totalorder %s24, 0
    %p66 = por %p64, %p65
    %p67 = scmp.ne.s32.totalorder %s55, %s56
    %p68 = scmp.eq.s32.totalorder %s25, 1
    %p69 = por %p67, %p68
    %p71 = scmp.ne.s32.totalorder %s56, %s70
    %p72 = scmp.eq.s32.totalorder %s25, 0
    %p73 = por %p71, %p72
    %s75 = sadd.s32 %s74, 1
    %p78 = scmp.eq.s32.totalorder %s19, 1
    %p79 = scmp.ne.s32.totalorder %s74, %s76
    %p80 = scmp.eq.s32.totalorder %s19, 0
    %p81 = por %p79, %p80
    %p82 = scmp.ne.s32.totalorder %s74, %s76
    %p83 = scmp.eq.s32.totalorder %s24, 1
    %p84 = por %p82, %p83
    %p85 = scmp.ne.s32.totalorder %s76, %s77
    %p86 = scmp.eq.s32.totalorder %s24, 0
    %p87 = por %p85, %p86
    %p88 = scmp.ne.s32.totalorder %s76, %s77
    %p89 = scmp.eq.s32.totalorder %s25, 1
    %p90 = por %p88, %p89
    %p92 = scmp.ne.s32.totalorder %s77, %s91
    %p93 = scmp.eq.s32.totalorder %s25, 0
    %p94 = por %p92, %p93
    %s96 = sadd.s32 %s95, 1
    %p99 = scmp.eq.s32.totalorder %s19, 1
    %p100 = scmp.ne.s32.totalorder %s95, %s97
    %p101 = scmp.eq.s32.totalorder %s19, 0
    %p102 = por %p100, %p101
    %p103 = scmp.ne.s32.totalorder %s95, %s97
    %p104 = scmp.eq.s32.totalorder %s24, 1
    %p105 = por %p103, %p104
    %p106 = scmp.ne.s32.totalorder %s97, %s98
    %p107 = scmp.eq.s32.totalorder %s24, 0
    %p108 = por %p106, %p107
    %p109 = scmp.ne.s32.totalorder %s97, %s98
    %p110 = scmp.eq.s32.totalorder %s25, 1
    %p111 = por %p109, %p110
    %p113 = scmp.ne.s32.totalorder %s98, %s112
    %p114 = scmp.eq.s32.totalorder %s25, 0
    %p115 = por %p113, %p114
    %s117 = sadd.s32 %s116, 1
    %p120 = scmp.eq.s32.totalorder %s19, 1
    %p121 = scmp.ne.s32.totalorder %s116, %s118
    %p122 = scmp.eq.s32.totalorder %s19, 0
    %p123 = por %p121, %p122
    %p124 = scmp.ne.s32.totalorder %s116, %s118
    %p125 = scmp.eq.s32.totalorder %s24, 1
    %p126 = por %p124, %p125
    %p127 = scmp.ne.s32.totalorder %s118, %s119
    %p128 = scmp.eq.s32.totalorder %s24, 0
    %p129 = por %p127, %p128
    %p130 = scmp.ne.s32.totalorder %s118, %s119
    %p131 = scmp.eq.s32.totalorder %s25, 1
    %p132 = por %p130, %p131
    %p134 = scmp.ne.s32.totalorder %s119, %s133
    %p135 = scmp.eq.s32.totalorder %s25, 0
    %p136 = por %p134, %p135
    %s138 = sadd.s32 %s137, 1
    %p141 = scmp.eq.s32.totalorder %s19, 1
    %p142 = scmp.ne.s32.totalorder %s137, %s139
    %p143 = scmp.eq.s32.totalorder %s19, 0
    %p144 = por %p142, %p143
    %p145 = scmp.ne.s32.totalorder %s137, %s139
    %p146 = scmp.eq.s32.totalorder %s24, 1
    %p147 = por %p145, %p146
    %p148 = scmp.ne.s32.totalorder %s139, %s140
    %p149 = scmp.eq.s32.totalorder %s24, 0
    %p150 = por %p148, %p149
    %p151 = scmp.ne.s32.totalorder %s139, %s140
    %p152 = scmp.eq.s32.totalorder %s25, 1
    %p153 = por %p151, %p152
    %p155 = scmp.ne.s32.totalorder %s140, %s154
    %p156 = scmp.eq.s32.totalorder %s25, 0
    %p157 = por %p155, %p156
    %s159 = sadd.s32 %s158, 1
    %p162 = scmp.eq.s32.totalorder %s19, 1
    %p163 = scmp.ne.s32.totalorder %s158, %s160
    %p164 = scmp.eq.s32.totalorder %s19, 0
    %p165 = por %p163, %p164
    %p166 = scmp.ne.s32.totalorder %s158, %s160
    %p167 = scmp.eq.s32.totalorder %s24, 1
    %p168 = por %p166, %p167
    %p169 = scmp.ne.s32.totalorder %s160, %s161
    %p170 = scmp.eq.s32.totalorder %s24, 0
    %p171 = por %p169, %p170
    %p172 = scmp.ne.s32.totalorder %s160, %s161
    %p173 = scmp.eq.s32.totalorder %s25, 1
    %p174 = por %p172, %p173
    %p176 = scmp.ne.s32.totalorder %s161, %s175
    %p177 = scmp.eq.s32.totalorder %s25, 0
    %p178 = por %p176, %p177
    %s180 = sadd.s32 %s179, 1
    %p183 = scmp.eq.s32.totalorder %s19, 1
    %p184 = scmp.ne.s32.totalorder %s179, %s181
    %p185 = scmp.eq.s32.totalorder %s19, 0
    %p186 = por %p184, %p185
    %p187 = scmp.ne.s32.totalorder %s179, %s181
    %p188 = scmp.eq.s32.totalorder %s24, 1
    %p189 = por %p187, %p188
    %p190 = scmp.ne.s32.totalorder %s181, %s182
    %p191 = scmp.eq.s32.totalorder %s24, 0
    %p192 = por %p190, %p191
    %p193 = scmp.ne.s32.totalorder %s181, %s182
    %p194 = scmp.eq.s32.totalorder %s25, 1
    %p195 = por %p193, %p194
    %p197 = scmp.ne.s32.totalorder %s182, %s196
    %p198 = scmp.eq.s32.totalorder %s25, 0
    %p199 = por %p197, %p198
    %s201 = sadd.s32 %s200, 1
    %p204 = scmp.eq.s32.totalorder %s19, 1
    %p205 = scmp.ne.s32.totalorder %s200, %s202
    %p206 = scmp.eq.s32.totalorder %s19, 0
    %p207 = por %p205, %p206
    %p208 = scmp.ne.s32.totalorder %s200, %s202
    %p209 = scmp.eq.s32.totalorder %s24, 1
    %p210 = por %p208, %p209
    %p211 = scmp.ne.s32.totalorder %s202, %s203
    %p212 = scmp.eq.s32.totalorder %s24, 0
    %p213 = por %p211, %p212
    %p214 = scmp.ne.s32.totalorder %s202, %s203
    %p215 = scmp.eq.s32.totalorder %s25, 1
    %p216 = por %p214, %p215
    %p218 = scmp.ne.s32.totalorder %s203, %s217
    %p219 = scmp.eq.s32.totalorder %s25, 0
    %p220 = por %p218, %p219
    %s222 = sadd.s32 %s221, 1
    %p225 = scmp.eq.s32.totalorder %s19, 1
    %p226 = scmp.ne.s32.totalorder %s221, %s223
    %p227 = scmp.eq.s32.totalorder %s19, 0
    %p228 = por %p226, %p227
    %p229 = scmp.ne.s32.totalorder %s221, %s223
    %p230 = scmp.eq.s32.totalorder %s24, 1
    %p231 = por %p229, %p230
    %p232 = scmp.ne.s32.totalorder %s223, %s224
    %p233 = scmp.eq.s32.totalorder %s24, 0
    %p234 = por %p232, %p233
    %p235 = scmp.ne.s32.totalorder %s223, %s224
    %p236 = scmp.eq.s32.totalorder %s25, 1
    %p237 = por %p235, %p236
    %p239 = scmp.ne.s32.totalorder %s224, %s238
    %p240 = scmp.eq.s32.totalorder %s25, 0
    %p241 = por %p239, %p240
    %s243 = sadd.s32 %s242, 1
    %p246 = scmp.eq.s32.totalorder %s19, 1
    %p247 = scmp.ne.s32.totalorder %s242, %s244
    %p248 = scmp.eq.s32.totalorder %s19, 0
    %p249 = por %p247, %p248
    %p250 = scmp.ne.s32.totalorder %s242, %s244
    %p251 = scmp.eq.s32.totalorder %s24, 1
    %p252 = por %p250, %p251
    %p253 = scmp.ne.s32.totalorder %s244, %s245
    %p254 = scmp.eq.s32.totalorder %s24, 0
    %p255 = por %p253, %p254
    %p256 = scmp.ne.s32.totalorder %s244, %s245
    %p257 = scmp.eq.s32.totalorder %s25, 1
    %p258 = por %p256, %p257
    %p260 = scmp.ne.s32.totalorder %s245, %s259
    %p261 = scmp.eq.s32.totalorder %s25, 0
    %p262 = por %p260, %p261
    %s264 = sadd.s32 %s263, 1
    %p267 = scmp.eq.s32.totalorder %s19, 1
    %p268 = scmp.ne.s32.totalorder %s263, %s265
    %p269 = scmp.eq.s32.totalorder %s19, 0
    %p270 = por %p268, %p269
    %p271 = scmp.ne.s32.totalorder %s263, %s265
    %p272 = scmp.eq.s32.totalorder %s24, 1
    %p273 = por %p271, %p272
    %p274 = scmp.ne.s32.totalorder %s265, %s266
    %p275 = scmp.eq.s32.totalorder %s24, 0
    %p276 = por %p274, %p275
    %p277 = scmp.ne.s32.totalorder %s265, %s266
    %p278 = scmp.eq.s32.totalorder %s25, 1
    %p279 = por %p277, %p278
    %p281 = scmp.ne.s32.totalorder %s266, %s280
    %p282 = scmp.eq.s32.totalorder %s25, 0
    %p283 = por %p281, %p282
    %s285 = sadd.s32 %s284, 1
    %p288 = scmp.eq.s32.totalorder %s19, 1
    %p289 = scmp.ne.s32.totalorder %s284, %s286
    %p290 = scmp.eq.s32.totalorder %s19, 0
    %p291 = por %p289, %p290
    %p292 = scmp.ne.s32.totalorder %s284, %s286
    %p293 = scmp.eq.s32.totalorder %s24, 1
    %p294 = por %p292, %p293
    %p295 = scmp.ne.s32.totalorder %s286, %s287
    %p296 = scmp.eq.s32.totalorder %s24, 0
    %p297 = por %p295, %p296
    %p298 = scmp.ne.s32.totalorder %s286, %s287
    %p299 = scmp.eq.s32.totalorder %s25, 1
    %p300 = por %p298, %p299
    %p302 = scmp.ne.s32.totalorder %s287, %s301
    %p303 = scmp.eq.s32.totalorder %s25, 0
    %p304 = por %p302, %p303
    %s305 = ssub.s32 %s19, %s26
    %p306 = scmp.eq.s32.totalorder %s305, 0
    %s308 = sadd.s32 %s307, 1
    %s309 = scalar_select %p306, %s307, %s308
    %p312 = pneg %p306
    %p313 = scmp.eq.s32.totalorder %s19, 1
    %p314 = por %p312, %p313
    %p315 = scmp.ne.s32.totalorder %s307, %s310
    %p316 = scmp.eq.s32.totalorder %s19, 0
    %p317 = por %p315, %p316
    %p318 = scmp.ne.s32.totalorder %s307, %s310
    %p319 = scmp.eq.s32.totalorder %s24, 1
    %p320 = por %p318, %p319
    %p321 = scmp.ne.s32.totalorder %s310, %s311
    %p322 = scmp.eq.s32.totalorder %s24, 0
    %p323 = por %p321, %p322
    %p324 = scmp.ne.s32.totalorder %s310, %s311
    %p325 = scmp.eq.s32.totalorder %s25, 1
    %p326 = por %p324, %p325
    %p328 = scmp.ne.s32.totalorder %s311, %s327
    %p329 = scmp.eq.s32.totalorder %s25, 0
    %p330 = por %p328, %p329
    %p331 = scmp.le.s32.totalorder 1, %s19
    %p332 = scmp.lt.s32.totalorder %s19, 3
    %p333 = pnand %p331, %p332
    %p334 = pneg %p333
    // Predicated region
    $region9: #{aves_forward.8} parent=5 // pred_check
      _
    $region10: #{aves_forward.8} parent=5 // pred_check_branch
      %336 = sbr.rel (%p333) target = $region12
    $region11: #{aves_forward.8} parent=5 // pred_region
      %s337 = ssub.s32 %s19, 1
      // Predicated region
      $region13: #{aves_forward.8} parent=11 // pred_check
        %p338 = pneg %p66
      $region14: #{aves_forward.8} parent=11 // pred_check_branch
        %340 = sbr.rel (%p338) target = $region16
      $region15: #{aves_forward.8} parent=11 // pred_region
        _
      $region16: #{aves_forward.8} parent=11 // pred_fallthru
        _
      // Predicated region
      $region17: #{aves_forward.8} parent=11 // pred_check
        %p341 = pneg %p87
      $region18: #{aves_forward.8} parent=11 // pred_check_branch
        %343 = sbr.rel (%p341) target = $region20
      $region19: #{aves_forward.8} parent=11 // pred_region
        _
      $region20: #{aves_forward.8} parent=11 // pred_fallthru
        _
      // Predicated region
      $region21: #{aves_forward.8} parent=11 // pred_check
        %p344 = pneg %p108
      $region22: #{aves_forward.8} parent=11 // pred_check_branch
        %346 = sbr.rel (%p344) target = $region24
      $region23: #{aves_forward.8} parent=11 // pred_region
        _
      $region24: #{aves_forward.8} parent=11 // pred_fallthru
        _
      // Predicated region
      $region25: #{aves_forward.8} parent=11 // pred_check
        %p347 = pneg %p129
      $region26: #{aves_forward.8} parent=11 // pred_check_branch
        %349 = sbr.rel (%p347) target = $region28
      $region27: #{aves_forward.8} parent=11 // pred_region
        _
      $region28: #{aves_forward.8} parent=11 // pred_fallthru
        _
      // Predicated region
      $region29: #{aves_forward.8} parent=11 // pred_check
        %p350 = pneg %p150
      $region30: #{aves_forward.8} parent=11 // pred_check_branch
        %352 = sbr.rel (%p350) target = $region32
      $region31: #{aves_forward.8} parent=11 // pred_region
        _
      $region32: #{aves_forward.8} parent=11 // pred_fallthru
        _
      // Predicated region
      $region33: #{aves_forward.8} parent=11 // pred_check
        %p353 = pneg %p171
      $region34: #{aves_forward.8} parent=11 // pred_check_branch
        %355 = sbr.rel (%p353) target = $region36
      $region35: #{aves_forward.8} parent=11 // pred_region
        _
      $region36: #{aves_forward.8} parent=11 // pred_fallthru
        _
      // Predicated region
      $region37: #{aves_forward.8} parent=11 // pred_check
        %p356 = pneg %p192
      $region38: #{aves_forward.8} parent=11 // pred_check_branch
        %358 = sbr.rel (%p356) target = $region40
      $region39: #{aves_forward.8} parent=11 // pred_region
        _
      $region40: #{aves_forward.8} parent=11 // pred_fallthru
        _
      // Predicated region
      $region41: #{aves_forward.8} parent=11 // pred_check
        %p359 = pneg %p213
      $region42: #{aves_forward.8} parent=11 // pred_check_branch
        %361 = sbr.rel (%p359) target = $region44
      $region43: #{aves_forward.8} parent=11 // pred_region
        _
      $region44: #{aves_forward.8} parent=11 // pred_fallthru
        _
      // Predicated region
      $region45: #{aves_forward.8} parent=11 // pred_check
        %p362 = pneg %p234
      $region46: #{aves_forward.8} parent=11 // pred_check_branch
        %364 = sbr.rel (%p362) target = $region48
      $region47: #{aves_forward.8} parent=11 // pred_region
        _
      $region48: #{aves_forward.8} parent=11 // pred_fallthru
        _
      // Predicated region
      $region49: #{aves_forward.8} parent=11 // pred_check
        %p365 = pneg %p255
      $region50: #{aves_forward.8} parent=11 // pred_check_branch
        %367 = sbr.rel (%p365) target = $region52
      $region51: #{aves_forward.8} parent=11 // pred_region
        _
      $region52: #{aves_forward.8} parent=11 // pred_fallthru
        _
      // Predicated region
      $region53: #{aves_forward.8} parent=11 // pred_check
        %p368 = pneg %p276
      $region54: #{aves_forward.8} parent=11 // pred_check_branch
        %370 = sbr.rel (%p368) target = $region56
      $region55: #{aves_forward.8} parent=11 // pred_region
        _
      $region56: #{aves_forward.8} parent=11 // pred_fallthru
        _
      // Predicated region
      $region57: #{aves_forward.8} parent=11 // pred_check
        %p371 = pneg %p297
      $region58: #{aves_forward.8} parent=11 // pred_check_branch
        %373 = sbr.rel (%p371) target = $region60
      $region59: #{aves_forward.8} parent=11 // pred_region
        _
      $region60: #{aves_forward.8} parent=11 // pred_fallthru
        _
    $region12: #{aves_forward.8} parent=5 // pred_fallthru
      _
    %p374 = scmp.lt.s32.totalorder %s19, 2
    // Predicated region
    $region61: #{aves_forward.8} parent=5 // pred_check
      %p375 = pneg %p374
    $region62: #{aves_forward.8} parent=5 // pred_check_branch
      %377 = sbr.rel (%p375) target = $region64
    $region63: #{aves_forward.8} parent=5 // pred_region
      // Predicated region
      $region65: #{aves_forward.8} parent=63 // pred_check
        %p378 = pneg %p39
      $region66: #{aves_forward.8} parent=63 // pred_check_branch
        %380 = sbr.rel (%p378) target = $region68
      $region67: #{aves_forward.8} parent=63 // pred_region
        %p381 = scmp.lt.s32.totalorder %s19, 1
        %s382 = scalar_select %p381, %s19, 1
        %s383 = smul.addr %s382, 2
        %s384 = smul.addr %s383, 4
        %s385 = scalar_lea.vmem %s0, %s384
      $region68: #{aves_forward.8} parent=63 // pred_fallthru
        _
    $region64: #{aves_forward.8} parent=5 // pred_fallthru
      _
    %p386 = scmp.le.s32.totalorder 1, %s19
    %p387 = scmp.lt.s32.totalorder %s19, 3
    %p388 = pnand %p386, %p387
    %p389 = pneg %p388
    // Predicated region
    $region69: #{aves_forward.8} parent=5 // pred_check
      _
    $region70: #{aves_forward.8} parent=5 // pred_check_branch
      %391 = sbr.rel (%p388) target = $region72
    $region71: #{aves_forward.8} parent=5 // pred_region
      %s392 = ssub.s32 %s19, 1
      %p393 = scmp.lt.s32.totalorder %s24, 1
      %s394 = scalar_select %p393, %s24, 1
      %s395 = smul.addr %s394, 2
      %s396 = smul.addr %s395, 4
      %s397 = scalar_lea.vmem %s0, %s396
      %p398 = pneg %p45
      %p399 = pneg %p42
      %p400 = pneg %p66
      %p401 = pneg %p63
      %p402 = pneg %p87
      %p403 = pneg %p84
      %p404 = pneg %p108
      %p405 = pneg %p105
      %p406 = pneg %p129
      %p407 = pneg %p126
      %p408 = pneg %p150
      %p409 = pneg %p147
      %p410 = pneg %p171
      %p411 = pneg %p168
      %p412 = pneg %p192
      %p413 = pneg %p189
      %p414 = pneg %p213
      %p415 = pneg %p210
      %p416 = pneg %p234
      %p417 = pneg %p231
      %p418 = pneg %p255
      %p419 = pneg %p252
      %p420 = pneg %p276
      %p421 = pneg %p273
      %p422 = pneg %p297
      %p423 = pneg %p294
      %p424 = pneg %p323
      %p425 = pneg %p320
      %p426 = scmp.lt.s32.totalorder %s24, 1
      %s427 = scalar_select %p426, %s24, 1
      %s428 = smul.addr %s427, 2
      %s429 = smul.addr %s428, 4
      %s430 = scalar_lea.vmem %s13, %s429
      %p431 = scmp.lt.s32.totalorder %s24, 1
      %s432 = scalar_select %p431, %s24, 1
      %s433 = smul.addr %s432, 2
      %s434 = smul.addr %s433, 4
      %s435 = scalar_lea.vmem %s0, %s434
      %p436 = scmp.lt.s32.totalorder %s24, 1
      %s437 = scalar_select %p436, %s24, 1
      %s438 = smul.addr %s437, 2
      %s439 = smul.addr %s438, 4
      %s440 = scalar_lea.vmem %s13, %s439
      %v442 = vld [vmem:[%s435] sm:$0xf]
      %v443 = vld [vmem:[%s435 + $0x4] sm:$0x7]
      %v444 = vld [vmem:[%s1] sm:$0xff]
      %v445 = vld [vmem:[%s1 + $0x8] sm:$0xf]
      %v446 = vld [vmem:[%s1 + $0xc] sm:$0xff]
      %v447 = vld [vmem:[%s1 + $0x14] sm:$0xf]
      %v448 = vld [vmem:[%s1 + $0x18] sm:$0xff]
      %v449 = vld [vmem:[%s1 + $0x20] sm:$0xf]
      %v450 = vld [vmem:[%s1 + $0x24] sm:$0xff]
      %v451 = vld [vmem:[%s1 + $0x2c] sm:$0xf]
      %v452 = vld [vmem:[%s1 + $0x30] sm:$0xff]
      %v453 = vld [vmem:[%s1 + $0x38] sm:$0xf]
      %v454 = vld [vmem:[%s1 + $0x3c] sm:$0xff]
      %v455 = vld [vmem:[%s1 + $0x44] sm:$0xf]
      %v456 = vld [vmem:[%s1 + $0x48] sm:$0xff]
      %v457 = vld [vmem:[%s1 + $0x50] sm:$0xf]
      %v458 = vld [vmem:[%s1 + $0x54] sm:$0xff]
      %v459 = vld [vmem:[%s1 + $0x5c] sm:$0xf]
      %v460 = vld [vmem:[%s1 + $0x60] sm:$0xff]
      %v461 = vld [vmem:[%s1 + $0x68] sm:$0xf]
      %v462 = vld [vmem:[%s1 + $0x6c] sm:$0xff]
      %v463 = vld [vmem:[%s1 + $0x74] sm:$0xf]
      %v464 = vld [vmem:[%s1 + $0x78] sm:$0xff]
      %v465 = vld [vmem:[%s1 + $0x80] sm:$0xf]
      %v466 = vld [vmem:[%s1 + $0x84] sm:$0xff]
      %v467 = vld [vmem:[%s1 + $0x8c] sm:$0xf]
      %v468 = vld [vmem:[%s1 + $0x90] sm:$0xff]
      %v469 = vld [vmem:[%s1 + $0x98] sm:$0xf]
      %v470 = vld [vmem:[%s1 + $0x9c] sm:$0xff]
      %v471 = vld [vmem:[%s1 + $0xa4] sm:$0xf]
      %v472 = vld [vmem:[%s1 + $0xa8] sm:$0xff]
      %v473 = vld [vmem:[%s1 + $0xb0] sm:$0xf]
      %v474 = vld [vmem:[%s1 + $0xb4] sm:$0xff]
      %v475 = vld [vmem:[%s1 + $0xbc] sm:$0xf]
      %v476 = vld [vmem:[%s2] sm:$0x7]
      %v478 = vlaneseq
      %v479 = vshrl.u32 %v478, 7
      %v480 = vsub.s32 0, %v479
      %v481 = vrot.slane %v476, %v480
      %v482 = vlaneseq
      %v483 = vshrl.u32 %v482, 7
      %v484 = vsub.s32 1, %v483
      %v485 = vrot.slane %v476, %v484
      %v486 = vlaneseq
      %v487 = vshrl.u32 %v486, 7
      %v488 = vsub.s32 2, %v487
      %v489 = vrot.slane %v476, %v488
      %v495 = vunpack.c.l.b16 %v442
      %v496 = vunpack.c.l.b16 %v443
      %v497 = vpack.c.b16 %v496, %v495
      %v531 = vunpack.c.l.b16 %v444
      %v532 = vunpack.c.h.b16 %v444
      %v533 = vunpack.c.l.b16 %v445
      %v534 = vunpack.c.l.b16 %v446
      %v535 = vunpack.c.h.b16 %v446
      %v536 = vunpack.c.l.b16 %v447
      %v537 = vunpack.c.l.b16 %v448
      %v538 = vunpack.c.h.b16 %v448
      %v539 = vunpack.c.l.b16 %v449
      %v540 = vunpack.c.l.b16 %v450
      %v541 = vunpack.c.h.b16 %v450
      %v542 = vunpack.c.l.b16 %v451
      %v543 = vunpack.c.l.b16 %v452
      %v544 = vunpack.c.h.b16 %v452
      %v545 = vunpack.c.l.b16 %v453
      %v546 = vunpack.c.l.b16 %v454
      %v547 = vunpack.c.h.b16 %v454
      %v548 = vunpack.c.l.b16 %v455
      %v549 = vunpack.c.l.b16 %v456
      %v550 = vunpack.c.h.b16 %v456
      %v551 = vunpack.c.l.b16 %v457
      %v552 = vunpack.c.l.b16 %v458
      %v553 = vunpack.c.h.b16 %v458
      %v554 = vunpack.c.l.b16 %v459
      %v555 = vunpack.c.l.b16 %v460
      %v556 = vunpack.c.h.b16 %v460
      %v557 = vunpack.c.l.b16 %v461
      %v558 = vunpack.c.l.b16 %v462
      %v559 = vunpack.c.h.b16 %v462
      %v560 = vunpack.c.l.b16 %v463
      %v561 = vunpack.c.l.b16 %v464
      %v562 = vunpack.c.h.b16 %v464
      %v563 = vunpack.c.l.b16 %v465
      %v564 = vunpack.c.l.b16 %v466
      %v565 = vunpack.c.h.b16 %v466
      %v566 = vunpack.c.l.b16 %v467
      %v567 = vunpack.c.l.b16 %v468
      %v568 = vunpack.c.h.b16 %v468
      %v569 = vunpack.c.l.b16 %v469
      %v570 = vunpack.c.l.b16 %v470
      %v571 = vunpack.c.h.b16 %v470
      %v572 = vunpack.c.l.b16 %v471
      %v573 = vunpack.c.l.b16 %v472
      %v574 = vunpack.c.h.b16 %v472
      %v575 = vunpack.c.l.b16 %v473
      %v576 = vunpack.c.l.b16 %v474
      %v577 = vunpack.c.h.b16 %v474
      %v578 = vunpack.c.l.b16 %v475
      %v579 = vpack.c.b16 %v534, %v531
      %v580 = vpack.c.b16 %v535, %v532
      %v581 = vpack.c.b16 %v536, %v533
      %v582 = vpack.c.b16 %v540, %v537
      %v583 = vpack.c.b16 %v541, %v538
      %v584 = vpack.c.b16 %v542, %v539
      %v585 = vpack.c.b16 %v546, %v543
      %v586 = vpack.c.b16 %v547, %v544
      %v587 = vpack.c.b16 %v548, %v545
      %v588 = vpack.c.b16 %v552, %v549
      %v589 = vpack.c.b16 %v553, %v550
      %v590 = vpack.c.b16 %v554, %v551
      %v591 = vpack.c.b16 %v558, %v555
      %v592 = vpack.c.b16 %v559, %v556
      %v593 = vpack.c.b16 %v560, %v557
      %v594 = vpack.c.b16 %v564, %v561
      %v595 = vpack.c.b16 %v565, %v562
      %v596 = vpack.c.b16 %v566, %v563
      %v597 = vpack.c.b16 %v570, %v567
      %v598 = vpack.c.b16 %v571, %v568
      %v599 = vpack.c.b16 %v572, %v569
      %v600 = vpack.c.b16 %v576, %v573
      %v601 = vpack.c.b16 %v577, %v574
      %v602 = vpack.c.b16 %v578, %v575
      %627 = vmatprep.subr.bf16.mxu0 %v580
      %628 = vmatpush1.bf16.msra.mxu0 %v579
      %629 = vmatprep.subr.bf16.mxu0 %v583
      %630 = vmatpush1.bf16.msra.mxu0 %v582
      %631 = vmatprep.subr.bf16.mxu0 %v586
      %632 = vmatpush1.bf16.msra.mxu0 %v585
      %633 = vmatprep.subr.bf16.mxu0 %v589
      %634 = vmatpush1.bf16.msra.mxu0 %v588
      %635 = vmatprep.subr.bf16.mxu0 %v592
      %636 = vmatpush1.bf16.msra.mxu0 %v591
      %637 = vmatprep.subr.bf16.mxu0 %v595
      %638 = vmatpush1.bf16.msra.mxu0 %v594
      %639 = vmatprep.subr.bf16.mxu0 %v598
      %640 = vmatpush1.bf16.msra.mxu0 %v597
      %641 = vmatprep.subr.bf16.mxu0 %v601
      %642 = vmatpush1.bf16.msra.mxu0 %v600
      %643 = vmatprep.subr.bf16.mxu0 0
      %644 = vmatpush1.bf16.msra.mxu0 0
      %645 = vmatprep.subr.bf16.mxu0 0
      %646 = vmatpush1.bf16.msra.mxu0 0
      %647 = vmatprep.subr.bf16.mxu0 0
      %648 = vmatpush1.bf16.msra.mxu0 0
      %649 = vmatprep.subr.bf16.mxu0 0
      %650 = vmatpush1.bf16.msra.mxu0 0
      %651 = vmatprep.subr.bf16.mxu0 0
      %652 = vmatpush1.bf16.msra.mxu0 0
      %653 = vmatprep.subr.bf16.mxu0 0
      %654 = vmatpush1.bf16.msra.mxu0 0
      %655 = vmatprep.subr.bf16.mxu0 0
      %656 = vmatpush1.bf16.msra.mxu0 0
      %657 = vmatprep.subr.bf16.mxu0 0
      %658 = vmatpush1.bf16.msra.mxu0 0
      %659 = vmatprep.mubr.bf16.mxu0 0
      %660 = vmatmul.mubr.bf16.gmra.mrb[0].mxu0 %v497
      %v661 = vpop.f32.mrb[0].mxu0
      %v662 = vadd.f32 %v481, %v661
      %v663 = vpop.f32.mrb[0].mxu0
      %v664 = vadd.f32 %v485, %v663
      %v665 = vpop.f32.mrb[0].mxu0
      %v666 = vadd.f32 %v481, %v665
      %v667 = vpop.f32.mrb[0].mxu0
      %v668 = vadd.f32 %v485, %v667
      %669 = vdwg.mxu0
      %670 = vmatprep.subr.bf16.mxu0 0
      %671 = vmatpush1.bf16.msra.mxu0 %v581
      %672 = vmatprep.subr.bf16.mxu0 0
      %673 = vmatpush1.bf16.msra.mxu0 %v584
      %674 = vmatprep.subr.bf16.mxu0 0
      %675 = vmatpush1.bf16.msra.mxu0 %v587
      %676 = vmatprep.subr.bf16.mxu0 0
      %677 = vmatpush1.bf16.msra.mxu0 %v590
      %678 = vmatprep.subr.bf16.mxu0 0
      %679 = vmatpush1.bf16.msra.mxu0 %v593
      %680 = vmatprep.subr.bf16.mxu0 0
      %681 = vmatpush1.bf16.msra.mxu0 %v596
      %682 = vmatprep.subr.bf16.mxu0 0
      %683 = vmatpush1.bf16.msra.mxu0 %v599
      %684 = vmatprep.subr.bf16.mxu0 0
      %685 = vmatpush1.bf16.msra.mxu0 %v602
      %686 = vmatprep.subr.bf16.mxu0 0
      %687 = vmatpush1.bf16.msra.mxu0 0
      %688 = vmatprep.subr.bf16.mxu0 0
      %689 = vmatpush1.bf16.msra.mxu0 0
      %690 = vmatprep.subr.bf16.mxu0 0
      %691 = vmatpush1.bf16.msra.mxu0 0
      %692 = vmatprep.subr.bf16.mxu0 0
      %693 = vmatpush1.bf16.msra.mxu0 0
      %694 = vmatprep.subr.bf16.mxu0 0
      %695 = vmatpush1.bf16.msra.mxu0 0
      %696 = vmatprep.subr.bf16.mxu0 0
      %697 = vmatpush1.bf16.msra.mxu0 0
      %698 = vmatprep.subr.bf16.mxu0 0
      %699 = vmatpush1.bf16.msra.mxu0 0
      %700 = vmatprep.subr.bf16.mxu0 0
      %701 = vmatpush1.bf16.msra.mxu0 0
      %702 = vmatprep.mubr.bf16.mxu0 0
      %703 = vmatmul.mubr.bf16.gmra.mrb[0].mxu0 %v497
      %v704 = vpop.f32.mrb[0].mxu0
      %v705 = vadd.f32 %v489, %v704
      %v706 = vpop.f32.mrb[0].mxu0
      %v707 = vpop.f32.mrb[0].mxu0
      %v708 = vadd.f32 %v489, %v707
      %v709 = vpop.f32.mrb[0].mxu0
      %710 = vdwg.mxu0
      %713 = vrot.lane.b32.xlu0 %v662, 96
      %v714 = vpop.permute.xlu0 %713
      %715 = vrot.lane.b32.xlu0 %v666, 96
      %v716 = vpop.permute.xlu0 %715
      %719 = vrot.lane.b32.xlu0 %v662, 64
      %v720 = vpop.permute.xlu0 %719
      %721 = vrot.lane.b32.xlu0 %v666, 64
      %v722 = vpop.permute.xlu0 %721
      %725 = vrot.lane.b32.xlu0 %v662, 32
      %v726 = vpop.permute.xlu0 %725
      %727 = vrot.lane.b32.xlu0 %v666, 32
      %v728 = vpop.permute.xlu0 %727
      %v731 = vcombine.low %v662, %v720
      %v732 = vcombine.high %v662, %v720
      %v734 = vunpack.c.l.s4 1983009808
      %v735 = vunpack.c.0.s8 %v734
      %v736 = vlaneseq
      %v737 = vshrl.u32 %v736, 7
      %v738 = vsub.s32 %v735, %v737
      %v739 = vrot.slane %v731, %v738
      %v741 = vunpack.c.l.s4 1983009808
      %v742 = vunpack.c.0.s8 %v741
      %v743 = vlaneseq
      %v744 = vshrl.u32 %v743, 7
      %v745 = vsub.s32 %v742, %v744
      %v746 = vrot.slane %v732, %v745
      %v747 = vcombine.low %v714, %v726
      %v748 = vcombine.high %v714, %v726
      %v750 = vunpack.c.l.s4 1983009808
      %v751 = vunpack.c.0.s8 %v750
      %v752 = vlaneseq
      %v753 = vshrl.u32 %v752, 7
      %v754 = vsub.s32 %v751, %v753
      %v755 = vrot.slane %v747, %v754
      %v757 = vunpack.c.l.s4 1983009808
      %v758 = vunpack.c.0.s8 %v757
      %v759 = vlaneseq
      %v760 = vshrl.u32 %v759, 7
      %v761 = vsub.s32 %v758, %v760
      %v762 = vrot.slane %v748, %v761
      %v763 = vcombine.low %v739, %v755
      %v764 = vcombine.high %v739, %v755
      %v766 = vunpack.c.l.s4 1934713408
      %v767 = vunpack.c.0.s8 %v766
      %v768 = vlaneseq
      %v769 = vshrl.u32 %v768, 7
      %v770 = vsub.s32 %v767, %v769
      %v771 = vrot.slane %v763, %v770
      %v773 = vunpack.c.l.s4 1934713408
      %v774 = vunpack.c.0.s8 %v773
      %v775 = vlaneseq
      %v776 = vshrl.u32 %v775, 7
      %v777 = vsub.s32 %v774, %v776
      %v778 = vrot.slane %v764, %v777
      %v779 = vcombine.low %v746, %v762
      %v780 = vcombine.high %v746, %v762
      %v782 = vunpack.c.l.s4 1934713408
      %v783 = vunpack.c.0.s8 %v782
      %v784 = vlaneseq
      %v785 = vshrl.u32 %v784, 7
      %v786 = vsub.s32 %v783, %v785
      %v787 = vrot.slane %v779, %v786
      %v789 = vunpack.c.l.s4 1934713408
      %v790 = vunpack.c.0.s8 %v789
      %v791 = vlaneseq
      %v792 = vshrl.u32 %v791, 7
      %v793 = vsub.s32 %v790, %v792
      %v794 = vrot.slane %v780, %v793
      %v795 = vcombine.high %v771, 0.0
      %v796 = vcombine.high %v778, 0.0
      %v797 = vcombine.high %v787, 0.0
      %v798 = vcombine.high %v794, 0.0
      %v799 = vcombine.low %v666, %v722
      %v800 = vcombine.high %v666, %v722
      %v802 = vunpack.c.l.s4 1983009808
      %v803 = vunpack.c.0.s8 %v802
      %v804 = vlaneseq
      %v805 = vshrl.u32 %v804, 7
      %v806 = vsub.s32 %v803, %v805
      %v807 = vrot.slane %v799, %v806
      %v809 = vunpack.c.l.s4 1983009808
      %v810 = vunpack.c.0.s8 %v809
      %v811 = vlaneseq
      %v812 = vshrl.u32 %v811, 7
      %v813 = vsub.s32 %v810, %v812
      %v814 = vrot.slane %v800, %v813
      %v815 = vcombine.low %v716, %v728
      %v816 = vcombine.high %v716, %v728
      %v818 = vunpack.c.l.s4 1983009808
      %v819 = vunpack.c.0.s8 %v818
      %v820 = vlaneseq
      %v821 = vshrl.u32 %v820, 7
      %v822 = vsub.s32 %v819, %v821
      %v823 = vrot.slane %v815, %v822
      %v825 = vunpack.c.l.s4 1983009808
      %v826 = vunpack.c.0.s8 %v825
      %v827 = vlaneseq
      %v828 = vshrl.u32 %v827, 7
      %v829 = vsub.s32 %v826, %v828
      %v830 = vrot.slane %v816, %v829
      %v831 = vcombine.low %v807, %v823
      %v832 = vcombine.high %v807, %v823
      %v834 = vunpack.c.l.s4 1934713408
      %v835 = vunpack.c.0.s8 %v834
      %v836 = vlaneseq
      %v837 = vshrl.u32 %v836, 7
      %v838 = vsub.s32 %v835, %v837
      %v839 = vrot.slane %v831, %v838
      %v841 = vunpack.c.l.s4 1934713408
      %v842 = vunpack.c.0.s8 %v841
      %v843 = vlaneseq
      %v844 = vshrl.u32 %v843, 7
      %v845 = vsub.s32 %v842, %v844
      %v846 = vrot.slane %v832, %v845
      %v847 = vcombine.low %v814, %v830
      %v849 = vunpack.c.l.s4 1934713408
      %v850 = vunpack.c.0.s8 %v849
      %v851 = vlaneseq
      %v852 = vshrl.u32 %v851, 7
      %v853 = vsub.s32 %v850, %v852
      %v854 = vrot.slane %v847, %v853
      %v855 = vcombine.high %v839, 0.0
      %v856 = vcombine.high %v846, 0.0
      %v857 = vcombine.low %v771, %v778
      %v859 = vunpack.c.l.s4 1983009808
      %v860 = vunpack.c.0.s8 %v859
      %v861 = vlaneseq
      %v862 = vshrl.u32 %v861, 7
      %v863 = vsub.s32 %v860, %v862
      %v864 = vrot.slane %v857, %v863
      %v865 = vcombine.low %v795, %v796
      %v867 = vunpack.c.l.s4 1983009808
      %v868 = vunpack.c.0.s8 %v867
      %v869 = vlaneseq
      %v870 = vshrl.u32 %v869, 7
      %v871 = vsub.s32 %v868, %v870
      %v872 = vrot.slane %v865, %v871
      %v873 = vcombine.low %v787, %v794
      %v875 = vunpack.c.l.s4 1983009808
      %v876 = vunpack.c.0.s8 %v875
      %v877 = vlaneseq
      %v878 = vshrl.u32 %v877, 7
      %v879 = vsub.s32 %v876, %v878
      %v880 = vrot.slane %v873, %v879
      %v881 = vcombine.low %v797, %v798
      %v883 = vunpack.c.l.s4 1983009808
      %v884 = vunpack.c.0.s8 %v883
      %v885 = vlaneseq
      %v886 = vshrl.u32 %v885, 7
      %v887 = vsub.s32 %v884, %v886
      %v888 = vrot.slane %v881, %v887
      %v889 = vcombine.low %v864, %v872
      %v890 = vcombine.high %v864, %v872
      %v892 = vunpack.c.l.s4 1934713408
      %v893 = vunpack.c.0.s8 %v892
      %v894 = vlaneseq
      %v895 = vshrl.u32 %v894, 7
      %v896 = vsub.s32 %v893, %v895
      %v897 = vrot.slane %v889, %v896
      %v899 = vunpack.c.l.s4 1934713408
      %v900 = vunpack.c.0.s8 %v899
      %v901 = vlaneseq
      %v902 = vshrl.u32 %v901, 7
      %v903 = vsub.s32 %v900, %v902
      %v904 = vrot.slane %v890, %v903
      %v905 = vcombine.low %v880, %v888
      %v906 = vcombine.high %v880, %v888
      %v908 = vunpack.c.l.s4 1934713408
      %v909 = vunpack.c.0.s8 %v908
      %v910 = vlaneseq
      %v911 = vshrl.u32 %v910, 7
      %v912 = vsub.s32 %v909, %v911
      %v913 = vrot.slane %v905, %v912
      %v915 = vunpack.c.l.s4 1934713408
      %v916 = vunpack.c.0.s8 %v915
      %v917 = vlaneseq
      %v918 = vshrl.u32 %v917, 7
      %v919 = vsub.s32 %v916, %v918
      %v920 = vrot.slane %v906, %v919
      %v921 = vcombine.low %v897, %v913
      %v922 = vcombine.high %v897, %v913
      %v923 = vcombine.low %v904, %v920
      %v924 = vcombine.high %v904, %v920
      %v925 = vcombine.low %v839, %v846
      %v927 = vunpack.c.l.s4 1983009808
      %v928 = vunpack.c.0.s8 %v927
      %v929 = vlaneseq
      %v930 = vshrl.u32 %v929, 7
      %v931 = vsub.s32 %v928, %v930
      %v932 = vrot.slane %v925, %v931
      %v933 = vcombine.low %v855, %v856
      %v935 = vunpack.c.l.s4 1983009808
      %v936 = vunpack.c.0.s8 %v935
      %v937 = vlaneseq
      %v938 = vshrl.u32 %v937, 7
      %v939 = vsub.s32 %v936, %v938
      %v940 = vrot.slane %v933, %v939
      %v942 = vunpack.c.l.s4 1983009808
      %v943 = vunpack.c.0.s8 %v942
      %v944 = vlaneseq
      %v945 = vshrl.u32 %v944, 7
      %v946 = vsub.s32 %v943, %v945
      %v947 = vrot.slane %v854, %v946
      %v948 = vcombine.high %v854, 0.0
      %v950 = vunpack.c.l.s4 1983009808
      %v951 = vunpack.c.0.s8 %v950
      %v952 = vlaneseq
      %v953 = vshrl.u32 %v952, 7
      %v954 = vsub.s32 %v951, %v953
      %v955 = vrot.slane %v948, %v954
      %v956 = vcombine.low %v932, %v940
      %v957 = vcombine.high %v932, %v940
      %v959 = vunpack.c.l.s4 1934713408
      %v960 = vunpack.c.0.s8 %v959
      %v961 = vlaneseq
      %v962 = vshrl.u32 %v961, 7
      %v963 = vsub.s32 %v960, %v962
      %v964 = vrot.slane %v956, %v963
      %v966 = vunpack.c.l.s4 1934713408
      %v967 = vunpack.c.0.s8 %v966
      %v968 = vlaneseq
      %v969 = vshrl.u32 %v968, 7
      %v970 = vsub.s32 %v967, %v969
      %v971 = vrot.slane %v957, %v970
      %v972 = vcombine.low %v947, %v955
      %v973 = vcombine.high %v947, %v955
      %v975 = vunpack.c.l.s4 1934713408
      %v976 = vunpack.c.0.s8 %v975
      %v977 = vlaneseq
      %v978 = vshrl.u32 %v977, 7
      %v979 = vsub.s32 %v976, %v978
      %v980 = vrot.slane %v972, %v979
      %v982 = vunpack.c.l.s4 1934713408
      %v983 = vunpack.c.0.s8 %v982
      %v984 = vlaneseq
      %v985 = vshrl.u32 %v984, 7
      %v986 = vsub.s32 %v983, %v985
      %v987 = vrot.slane %v973, %v986
      %v988 = vcombine.low %v964, %v980
      %v989 = vcombine.high %v964, %v980
      %v990 = vcombine.low %v971, %v987
      %v991 = vcombine.high %v971, %v987
      %v992 = vpack.c.bf16 %v988, %v921
      %v993 = vpack.c.bf16 %v989, %v922
      %v994 = vpack.c.bf16 %v990, %v923
      %v995 = vpack.c.bf16 %v991, %v924
      %998 = vrot.lane.b32.xlu0 %v664, 96
      %v999 = vpop.permute.xlu0 %998
      %1000 = vrot.lane.b32.xlu0 %v668, 96
      %v1001 = vpop.permute.xlu0 %1000
      %1004 = vrot.lane.b32.xlu0 %v664, 64
      %v1005 = vpop.permute.xlu0 %1004
      %1006 = vrot.lane.b32.xlu0 %v668, 64
      %v1007 = vpop.permute.xlu0 %1006
      %1010 = vrot.lane.b32.xlu0 %v664, 32
      %v1011 = vpop.permute.xlu0 %1010
      %1012 = vrot.lane.b32.xlu0 %v668, 32
      %v1013 = vpop.permute.xlu0 %1012
      %v1016 = vcombine.low %v664, %v1005
      %v1017 = vcombine.high %v664, %v1005
      %v1019 = vunpack.c.l.s4 1983009808
      %v1020 = vunpack.c.0.s8 %v1019
      %v1021 = vlaneseq
      %v1022 = vshrl.u32 %v1021, 7
      %v1023 = vsub.s32 %v1020, %v1022
      %v1024 = vrot.slane %v1016, %v1023
      %v1026 = vunpack.c.l.s4 1983009808
      %v1027 = vunpack.c.0.s8 %v1026
      %v1028 = vlaneseq
      %v1029 = vshrl.u32 %v1028, 7
      %v1030 = vsub.s32 %v1027, %v1029
      %v1031 = vrot.slane %v1017, %v1030
      %v1032 = vcombine.low %v999, %v1011
      %v1033 = vcombine.high %v999, %v1011
      %v1035 = vunpack.c.l.s4 1983009808
      %v1036 = vunpack.c.0.s8 %v1035
      %v1037 = vlaneseq
      %v1038 = vshrl.u32 %v1037, 7
      %v1039 = vsub.s32 %v1036, %v1038
      %v1040 = vrot.slane %v1032, %v1039
      %v1042 = vunpack.c.l.s4 1983009808
      %v1043 = vunpack.c.0.s8 %v1042
      %v1044 = vlaneseq
      %v1045 = vshrl.u32 %v1044, 7
      %v1046 = vsub.s32 %v1043, %v1045
      %v1047 = vrot.slane %v1033, %v1046
      %v1048 = vcombine.low %v1024, %v1040
      %v1049 = vcombine.high %v1024, %v1040
      %v1051 = vunpack.c.l.s4 1934713408
      %v1052 = vunpack.c.0.s8 %v1051
      %v1053 = vlaneseq
      %v1054 = vshrl.u32 %v1053, 7
      %v1055 = vsub.s32 %v1052, %v1054
      %v1056 = vrot.slane %v1048, %v1055
      %v1058 = vunpack.c.l.s4 1934713408
      %v1059 = vunpack.c.0.s8 %v1058
      %v1060 = vlaneseq
      %v1061 = vshrl.u32 %v1060, 7
      %v1062 = vsub.s32 %v1059, %v1061
      %v1063 = vrot.slane %v1049, %v1062
      %v1064 = vcombine.low %v1031, %v1047
      %v1065 = vcombine.high %v1031, %v1047
      %v1067 = vunpack.c.l.s4 1934713408
      %v1068 = vunpack.c.0.s8 %v1067
      %v1069 = vlaneseq
      %v1070 = vshrl.u32 %v1069, 7
      %v1071 = vsub.s32 %v1068, %v1070
      %v1072 = vrot.slane %v1064, %v1071
      %v1074 = vunpack.c.l.s4 1934713408
      %v1075 = vunpack.c.0.s8 %v1074
      %v1076 = vlaneseq
      %v1077 = vshrl.u32 %v1076, 7
      %v1078 = vsub.s32 %v1075, %v1077
      %v1079 = vrot.slane %v1065, %v1078
      %v1080 = vcombine.high %v1056, 0.0
      %v1081 = vcombine.high %v1063, 0.0
      %v1082 = vcombine.high %v1072, 0.0
      %v1083 = vcombine.high %v1079, 0.0
      %v1084 = vcombine.low %v668, %v1007
      %v1085 = vcombine.high %v668, %v1007
      %v1087 = vunpack.c.l.s4 1983009808
      %v1088 = vunpack.c.0.s8 %v1087
      %v1089 = vlaneseq
      %v1090 = vshrl.u32 %v1089, 7
      %v1091 = vsub.s32 %v1088, %v1090
      %v1092 = vrot.slane %v1084, %v1091
      %v1094 = vunpack.c.l.s4 1983009808
      %v1095 = vunpack.c.0.s8 %v1094
      %v1096 = vlaneseq
      %v1097 = vshrl.u32 %v1096, 7
      %v1098 = vsub.s32 %v1095, %v1097
      %v1099 = vrot.slane %v1085, %v1098
      %v1100 = vcombine.low %v1001, %v1013
      %v1101 = vcombine.high %v1001, %v1013
      %v1103 = vunpack.c.l.s4 1983009808
      %v1104 = vunpack.c.0.s8 %v1103
      %v1105 = vlaneseq
      %v1106 = vshrl.u32 %v1105, 7
      %v1107 = vsub.s32 %v1104, %v1106
      %v1108 = vrot.slane %v1100, %v1107
      %v1110 = vunpack.c.l.s4 1983009808
      %v1111 = vunpack.c.0.s8 %v1110
      %v1112 = vlaneseq
      %v1113 = vshrl.u32 %v1112, 7
      %v1114 = vsub.s32 %v1111, %v1113
      %v1115 = vrot.slane %v1101, %v1114
      %v1116 = vcombine.low %v1092, %v1108
      %v1117 = vcombine.high %v1092, %v1108
      %v1119 = vunpack.c.l.s4 1934713408
      %v1120 = vunpack.c.0.s8 %v1119
      %v1121 = vlaneseq
      %v1122 = vshrl.u32 %v1121, 7
      %v1123 = vsub.s32 %v1120, %v1122
      %v1124 = vrot.slane %v1116, %v1123
      %v1126 = vunpack.c.l.s4 1934713408
      %v1127 = vunpack.c.0.s8 %v1126
      %v1128 = vlaneseq
      %v1129 = vshrl.u32 %v1128, 7
      %v1130 = vsub.s32 %v1127, %v1129
      %v1131 = vrot.slane %v1117, %v1130
      %v1132 = vcombine.low %v1099, %v1115
      %v1134 = vunpack.c.l.s4 1934713408
      %v1135 = vunpack.c.0.s8 %v1134
      %v1136 = vlaneseq
      %v1137 = vshrl.u32 %v1136, 7
      %v1138 = vsub.s32 %v1135, %v1137
      %v1139 = vrot.slane %v1132, %v1138
      %v1140 = vcombine.high %v1124, 0.0
      %v1141 = vcombine.high %v1131, 0.0
      %v1142 = vcombine.low %v1056, %v1063
      %v1144 = vunpack.c.l.s4 1983009808
      %v1145 = vunpack.c.0.s8 %v1144
      %v1146 = vlaneseq
      %v1147 = vshrl.u32 %v1146, 7
      %v1148 = vsub.s32 %v1145, %v1147
      %v1149 = vrot.slane %v1142, %v1148
      %v1150 = vcombine.low %v1080, %v1081
      %v1152 = vunpack.c.l.s4 1983009808
      %v1153 = vunpack.c.0.s8 %v1152
      %v1154 = vlaneseq
      %v1155 = vshrl.u32 %v1154, 7
      %v1156 = vsub.s32 %v1153, %v1155
      %v1157 = vrot.slane %v1150, %v1156
      %v1158 = vcombine.low %v1072, %v1079
      %v1160 = vunpack.c.l.s4 1983009808
      %v1161 = vunpack.c.0.s8 %v1160
      %v1162 = vlaneseq
      %v1163 = vshrl.u32 %v1162, 7
      %v1164 = vsub.s32 %v1161, %v1163
      %v1165 = vrot.slane %v1158, %v1164
      %v1166 = vcombine.low %v1082, %v1083
      %v1168 = vunpack.c.l.s4 1983009808
      %v1169 = vunpack.c.0.s8 %v1168
      %v1170 = vlaneseq
      %v1171 = vshrl.u32 %v1170, 7
      %v1172 = vsub.s32 %v1169, %v1171
      %v1173 = vrot.slane %v1166, %v1172
      %v1174 = vcombine.low %v1149, %v1157
      %v1175 = vcombine.high %v1149, %v1157
      %v1177 = vunpack.c.l.s4 1934713408
      %v1178 = vunpack.c.0.s8 %v1177
      %v1179 = vlaneseq
      %v1180 = vshrl.u32 %v1179, 7
      %v1181 = vsub.s32 %v1178, %v1180
      %v1182 = vrot.slane %v1174, %v1181
      %v1184 = vunpack.c.l.s4 1934713408
      %v1185 = vunpack.c.0.s8 %v1184
      %v1186 = vlaneseq
      %v1187 = vshrl.u32 %v1186, 7
      %v1188 = vsub.s32 %v1185, %v1187
      %v1189 = vrot.slane %v1175, %v1188
      %v1190 = vcombine.low %v1165, %v1173
      %v1191 = vcombine.high %v1165, %v1173
      %v1193 = vunpack.c.l.s4 1934713408
      %v1194 = vunpack.c.0.s8 %v1193
      %v1195 = vlaneseq
      %v1196 = vshrl.u32 %v1195, 7
      %v1197 = vsub.s32 %v1194, %v1196
      %v1198 = vrot.slane %v1190, %v1197
      %v1200 = vunpack.c.l.s4 1934713408
      %v1201 = vunpack.c.0.s8 %v1200
      %v1202 = vlaneseq
      %v1203 = vshrl.u32 %v1202, 7
      %v1204 = vsub.s32 %v1201, %v1203
      %v1205 = vrot.slane %v1191, %v1204
      %v1206 = vcombine.low %v1182, %v1198
      %v1207 = vcombine.high %v1182, %v1198
      %v1208 = vcombine.low %v1189, %v1205
      %v1209 = vcombine.high %v1189, %v1205
      %v1210 = vcombine.low %v1124, %v1131
      %v1212 = vunpack.c.l.s4 1983009808
      %v1213 = vunpack.c.0.s8 %v1212
      %v1214 = vlaneseq
      %v1215 = vshrl.u32 %v1214, 7
      %v1216 = vsub.s32 %v1213, %v1215
      %v1217 = vrot.slane %v1210, %v1216
      %v1218 = vcombine.low %v1140, %v1141
      %v1220 = vunpack.c.l.s4 1983009808
      %v1221 = vunpack.c.0.s8 %v1220
      %v1222 = vlaneseq
      %v1223 = vshrl.u32 %v1222, 7
      %v1224 = vsub.s32 %v1221, %v1223
      %v1225 = vrot.slane %v1218, %v1224
      %v1227 = vunpack.c.l.s4 1983009808
      %v1228 = vunpack.c.0.s8 %v1227
      %v1229 = vlaneseq
      %v1230 = vshrl.u32 %v1229, 7
      %v1231 = vsub.s32 %v1228, %v1230
      %v1232 = vrot.slane %v1139, %v1231
      %v1233 = vcombine.high %v1139, 0.0
      %v1235 = vunpack.c.l.s4 1983009808
      %v1236 = vunpack.c.0.s8 %v1235
      %v1237 = vlaneseq
      %v1238 = vshrl.u32 %v1237, 7
      %v1239 = vsub.s32 %v1236, %v1238
      %v1240 = vrot.slane %v1233, %v1239
      %v1241 = vcombine.low %v1217, %v1225
      %v1242 = vcombine.high %v1217, %v1225
      %v1244 = vunpack.c.l.s4 1934713408
      %v1245 = vunpack.c.0.s8 %v1244
      %v1246 = vlaneseq
      %v1247 = vshrl.u32 %v1246, 7
      %v1248 = vsub.s32 %v1245, %v1247
      %v1249 = vrot.slane %v1241, %v1248
      %v1251 = vunpack.c.l.s4 1934713408
      %v1252 = vunpack.c.0.s8 %v1251
      %v1253 = vlaneseq
      %v1254 = vshrl.u32 %v1253, 7
      %v1255 = vsub.s32 %v1252, %v1254
      %v1256 = vrot.slane %v1242, %v1255
      %v1257 = vcombine.low %v1232, %v1240
      %v1258 = vcombine.high %v1232, %v1240
      %v1260 = vunpack.c.l.s4 1934713408
      %v1261 = vunpack.c.0.s8 %v1260
      %v1262 = vlaneseq
      %v1263 = vshrl.u32 %v1262, 7
      %v1264 = vsub.s32 %v1261, %v1263
      %v1265 = vrot.slane %v1257, %v1264
      %v1267 = vunpack.c.l.s4 1934713408
      %v1268 = vunpack.c.0.s8 %v1267
      %v1269 = vlaneseq
      %v1270 = vshrl.u32 %v1269, 7
      %v1271 = vsub.s32 %v1268, %v1270
      %v1272 = vrot.slane %v1258, %v1271
      %v1273 = vcombine.low %v1249, %v1265
      %v1274 = vcombine.high %v1249, %v1265
      %v1275 = vcombine.low %v1256, %v1272
      %v1276 = vcombine.high %v1256, %v1272
      %v1277 = vpack.c.bf16 %v1273, %v1206
      %v1278 = vpack.c.bf16 %v1274, %v1207
      %v1279 = vpack.c.bf16 %v1275, %v1208
      %v1280 = vpack.c.bf16 %v1276, %v1209
      %1283 = vrot.lane.b32.xlu0 %v705, 96
      %v1284 = vpop.permute.xlu0 %1283
      %1285 = vrot.lane.b32.xlu0 %v708, 96
      %v1286 = vpop.permute.xlu0 %1285
      %1289 = vrot.lane.b32.xlu0 %v705, 64
      %v1290 = vpop.permute.xlu0 %1289
      %1291 = vrot.lane.b32.xlu0 %v708, 64
      %v1292 = vpop.permute.xlu0 %1291
      %1295 = vrot.lane.b32.xlu0 %v705, 32
      %v1296 = vpop.permute.xlu0 %1295
      %1297 = vrot.lane.b32.xlu0 %v708, 32
      %v1298 = vpop.permute.xlu0 %1297
      %v1301 = vcombine.low %v705, %v1290
      %v1302 = vcombine.high %v705, %v1290
      %v1304 = vunpack.c.l.s4 1983009808
      %v1305 = vunpack.c.0.s8 %v1304
      %v1306 = vlaneseq
      %v1307 = vshrl.u32 %v1306, 7
      %v1308 = vsub.s32 %v1305, %v1307
      %v1309 = vrot.slane %v1301, %v1308
      %v1311 = vunpack.c.l.s4 1983009808
      %v1312 = vunpack.c.0.s8 %v1311
      %v1313 = vlaneseq
      %v1314 = vshrl.u32 %v1313, 7
      %v1315 = vsub.s32 %v1312, %v1314
      %v1316 = vrot.slane %v1302, %v1315
      %v1317 = vcombine.low %v1284, %v1296
      %v1318 = vcombine.high %v1284, %v1296
      %v1320 = vunpack.c.l.s4 1983009808
      %v1321 = vunpack.c.0.s8 %v1320
      %v1322 = vlaneseq
      %v1323 = vshrl.u32 %v1322, 7
      %v1324 = vsub.s32 %v1321, %v1323
      %v1325 = vrot.slane %v1317, %v1324
      %v1327 = vunpack.c.l.s4 1983009808
      %v1328 = vunpack.c.0.s8 %v1327
      %v1329 = vlaneseq
      %v1330 = vshrl.u32 %v1329, 7
      %v1331 = vsub.s32 %v1328, %v1330
      %v1332 = vrot.slane %v1318, %v1331
      %v1333 = vcombine.low %v1309, %v1325
      %v1334 = vcombine.high %v1309, %v1325
      %v1336 = vunpack.c.l.s4 1934713408
      %v1337 = vunpack.c.0.s8 %v1336
      %v1338 = vlaneseq
      %v1339 = vshrl.u32 %v1338, 7
      %v1340 = vsub.s32 %v1337, %v1339
      %v1341 = vrot.slane %v1333, %v1340
      %v1343 = vunpack.c.l.s4 1934713408
      %v1344 = vunpack.c.0.s8 %v1343
      %v1345 = vlaneseq
      %v1346 = vshrl.u32 %v1345, 7
      %v1347 = vsub.s32 %v1344, %v1346
      %v1348 = vrot.slane %v1334, %v1347
      %v1349 = vcombine.low %v1316, %v1332
      %v1350 = vcombine.high %v1316, %v1332
      %v1352 = vunpack.c.l.s4 1934713408
      %v1353 = vunpack.c.0.s8 %v1352
      %v1354 = vlaneseq
      %v1355 = vshrl.u32 %v1354, 7
      %v1356 = vsub.s32 %v1353, %v1355
      %v1357 = vrot.slane %v1349, %v1356
      %v1359 = vunpack.c.l.s4 1934713408
      %v1360 = vunpack.c.0.s8 %v1359
      %v1361 = vlaneseq
      %v1362 = vshrl.u32 %v1361, 7
      %v1363 = vsub.s32 %v1360, %v1362
      %v1364 = vrot.slane %v1350, %v1363
      %v1365 = vcombine.high %v1341, 0.0
      %v1366 = vcombine.high %v1348, 0.0
      %v1367 = vcombine.high %v1357, 0.0
      %v1368 = vcombine.high %v1364, 0.0
      %v1369 = vcombine.low %v708, %v1292
      %v1370 = vcombine.high %v708, %v1292
      %v1372 = vunpack.c.l.s4 1983009808
      %v1373 = vunpack.c.0.s8 %v1372
      %v1374 = vlaneseq
      %v1375 = vshrl.u32 %v1374, 7
      %v1376 = vsub.s32 %v1373, %v1375
      %v1377 = vrot.slane %v1369, %v1376
      %v1379 = vunpack.c.l.s4 1983009808
      %v1380 = vunpack.c.0.s8 %v1379
      %v1381 = vlaneseq
      %v1382 = vshrl.u32 %v1381, 7
      %v1383 = vsub.s32 %v1380, %v1382
      %v1384 = vrot.slane %v1370, %v1383
      %v1385 = vcombine.low %v1286, %v1298
      %v1386 = vcombine.high %v1286, %v1298
      %v1388 = vunpack.c.l.s4 1983009808
      %v1389 = vunpack.c.0.s8 %v1388
      %v1390 = vlaneseq
      %v1391 = vshrl.u32 %v1390, 7
      %v1392 = vsub.s32 %v1389, %v1391
      %v1393 = vrot.slane %v1385, %v1392
      %v1395 = vunpack.c.l.s4 1983009808
      %v1396 = vunpack.c.0.s8 %v1395
      %v1397 = vlaneseq
      %v1398 = vshrl.u32 %v1397, 7
      %v1399 = vsub.s32 %v1396, %v1398
      %v1400 = vrot.slane %v1386, %v1399
      %v1401 = vcombine.low %v1377, %v1393
      %v1402 = vcombine.high %v1377, %v1393
      %v1404 = vunpack.c.l.s4 1934713408
      %v1405 = vunpack.c.0.s8 %v1404
      %v1406 = vlaneseq
      %v1407 = vshrl.u32 %v1406, 7
      %v1408 = vsub.s32 %v1405, %v1407
      %v1409 = vrot.slane %v1401, %v1408
      %v1411 = vunpack.c.l.s4 1934713408
      %v1412 = vunpack.c.0.s8 %v1411
      %v1413 = vlaneseq
      %v1414 = vshrl.u32 %v1413, 7
      %v1415 = vsub.s32 %v1412, %v1414
      %v1416 = vrot.slane %v1402, %v1415
      %v1417 = vcombine.low %v1384, %v1400
      %v1419 = vunpack.c.l.s4 1934713408
      %v1420 = vunpack.c.0.s8 %v1419
      %v1421 = vlaneseq
      %v1422 = vshrl.u32 %v1421, 7
      %v1423 = vsub.s32 %v1420, %v1422
      %v1424 = vrot.slane %v1417, %v1423
      %v1425 = vcombine.high %v1409, 0.0
      %v1426 = vcombine.high %v1416, 0.0
      %v1427 = vcombine.low %v1341, %v1348
      %v1429 = vunpack.c.l.s4 1983009808
      %v1430 = vunpack.c.0.s8 %v1429
      %v1431 = vlaneseq
      %v1432 = vshrl.u32 %v1431, 7
      %v1433 = vsub.s32 %v1430, %v1432
      %v1434 = vrot.slane %v1427, %v1433
      %v1435 = vcombine.low %v1365, %v1366
      %v1437 = vunpack.c.l.s4 1983009808
      %v1438 = vunpack.c.0.s8 %v1437
      %v1439 = vlaneseq
      %v1440 = vshrl.u32 %v1439, 7
      %v1441 = vsub.s32 %v1438, %v1440
      %v1442 = vrot.slane %v1435, %v1441
      %v1443 = vcombine.low %v1357, %v1364
      %v1445 = vunpack.c.l.s4 1983009808
      %v1446 = vunpack.c.0.s8 %v1445
      %v1447 = vlaneseq
      %v1448 = vshrl.u32 %v1447, 7
      %v1449 = vsub.s32 %v1446, %v1448
      %v1450 = vrot.slane %v1443, %v1449
      %v1451 = vcombine.low %v1367, %v1368
      %v1453 = vunpack.c.l.s4 1983009808
      %v1454 = vunpack.c.0.s8 %v1453
      %v1455 = vlaneseq
      %v1456 = vshrl.u32 %v1455, 7
      %v1457 = vsub.s32 %v1454, %v1456
      %v1458 = vrot.slane %v1451, %v1457
      %v1459 = vcombine.low %v1434, %v1442
      %v1460 = vcombine.high %v1434, %v1442
      %v1462 = vunpack.c.l.s4 1934713408
      %v1463 = vunpack.c.0.s8 %v1462
      %v1464 = vlaneseq
      %v1465 = vshrl.u32 %v1464, 7
      %v1466 = vsub.s32 %v1463, %v1465
      %v1467 = vrot.slane %v1459, %v1466
      %v1469 = vunpack.c.l.s4 1934713408
      %v1470 = vunpack.c.0.s8 %v1469
      %v1471 = vlaneseq
      %v1472 = vshrl.u32 %v1471, 7
      %v1473 = vsub.s32 %v1470, %v1472
      %v1474 = vrot.slane %v1460, %v1473
      %v1475 = vcombine.low %v1450, %v1458
      %v1476 = vcombine.high %v1450, %v1458
      %v1478 = vunpack.c.l.s4 1934713408
      %v1479 = vunpack.c.0.s8 %v1478
      %v1480 = vlaneseq
      %v1481 = vshrl.u32 %v1480, 7
      %v1482 = vsub.s32 %v1479, %v1481
      %v1483 = vrot.slane %v1475, %v1482
      %v1485 = vunpack.c.l.s4 1934713408
      %v1486 = vunpack.c.0.s8 %v1485
      %v1487 = vlaneseq
      %v1488 = vshrl.u32 %v1487, 7
      %v1489 = vsub.s32 %v1486, %v1488
      %v1490 = vrot.slane %v1476, %v1489
      %v1491 = vcombine.low %v1467, %v1483
      %v1492 = vcombine.high %v1467, %v1483
      %v1493 = vcombine.low %v1474, %v1490
      %v1494 = vcombine.high %v1474, %v1490
      %v1495 = vcombine.low %v1409, %v1416
      %v1497 = vunpack.c.l.s4 1983009808
      %v1498 = vunpack.c.0.s8 %v1497
      %v1499 = vlaneseq
      %v1500 = vshrl.u32 %v1499, 7
      %v1501 = vsub.s32 %v1498, %v1500
      %v1502 = vrot.slane %v1495, %v1501
      %v1503 = vcombine.low %v1425, %v1426
      %v1505 = vunpack.c.l.s4 1983009808
      %v1506 = vunpack.c.0.s8 %v1505
      %v1507 = vlaneseq
      %v1508 = vshrl.u32 %v1507, 7
      %v1509 = vsub.s32 %v1506, %v1508
      %v1510 = vrot.slane %v1503, %v1509
      %v1512 = vunpack.c.l.s4 1983009808
      %v1513 = vunpack.c.0.s8 %v1512
      %v1514 = vlaneseq
      %v1515 = vshrl.u32 %v1514, 7
      %v1516 = vsub.s32 %v1513, %v1515
      %v1517 = vrot.slane %v1424, %v1516
      %v1518 = vcombine.high %v1424, 0.0
      %v1520 = vunpack.c.l.s4 1983009808
      %v1521 = vunpack.c.0.s8 %v1520
      %v1522 = vlaneseq
      %v1523 = vshrl.u32 %v1522, 7
      %v1524 = vsub.s32 %v1521, %v1523
      %v1525 = vrot.slane %v1518, %v1524
      %v1526 = vcombine.low %v1502, %v1510
      %v1527 = vcombine.high %v1502, %v1510
      %v1529 = vunpack.c.l.s4 1934713408
      %v1530 = vunpack.c.0.s8 %v1529
      %v1531 = vlaneseq
      %v1532 = vshrl.u32 %v1531, 7
      %v1533 = vsub.s32 %v1530, %v1532
      %v1534 = vrot.slane %v1526, %v1533
      %v1536 = vunpack.c.l.s4 1934713408
      %v1537 = vunpack.c.0.s8 %v1536
      %v1538 = vlaneseq
      %v1539 = vshrl.u32 %v1538, 7
      %v1540 = vsub.s32 %v1537, %v1539
      %v1541 = vrot.slane %v1527, %v1540
      %v1542 = vcombine.low %v1517, %v1525
      %v1543 = vcombine.high %v1517, %v1525
      %v1545 = vunpack.c.l.s4 1934713408
      %v1546 = vunpack.c.0.s8 %v1545
      %v1547 = vlaneseq
      %v1548 = vshrl.u32 %v1547, 7
      %v1549 = vsub.s32 %v1546, %v1548
      %v1550 = vrot.slane %v1542, %v1549
      %v1552 = vunpack.c.l.s4 1934713408
      %v1553 = vunpack.c.0.s8 %v1552
      %v1554 = vlaneseq
      %v1555 = vshrl.u32 %v1554, 7
      %v1556 = vsub.s32 %v1553, %v1555
      %v1557 = vrot.slane %v1543, %v1556
      %v1558 = vcombine.low %v1534, %v1550
      %v1559 = vcombine.high %v1534, %v1550
      %v1560 = vcombine.low %v1541, %v1557
      %v1561 = vcombine.high %v1541, %v1557
      %v1562 = vpack.c.bf16 %v1558, %v1491
      %v1563 = vpack.c.bf16 %v1559, %v1492
      %v1564 = vpack.c.bf16 %v1560, %v1493
      %v1565 = vpack.c.bf16 %v1561, %v1494
      %vm1566 = vcmask 261120
      %v1568 = vsel %vm1566, %v992, 0
      %v1571 = vsel %vm1566, %v1277, 0
      %1573 = vmatprep.subr.bf16.mxu0 0
      %1574 = vmatpush1.bf16.xpose.msra.mxu0 %v1571
      %1575 = vmatprep.subr.bf16.mxu0 0
      %1576 = vmatpush1.bf16.xpose.msra.mxu0 0
      %1577 = vmatprep.subr.bf16.mxu0 0
      %1578 = vmatpush1.bf16.xpose.msra.mxu0 0
      %1579 = vmatprep.subr.bf16.mxu0 0
      %1580 = vmatpush1.bf16.xpose.msra.mxu0 0
      %1581 = vmatprep.subr.bf16.mxu0 0
      %1582 = vmatpush1.bf16.xpose.msra.mxu0 0
      %1583 = vmatprep.subr.bf16.mxu0 0
      %1584 = vmatpush1.bf16.xpose.msra.mxu0 0
      %1585 = vmatprep.subr.bf16.mxu0 0
      %1586 = vmatpush1.bf16.xpose.msra.mxu0 0
      %1587 = vmatprep.subr.bf16.mxu0 0
      %1588 = vmatpush1.bf16.xpose.msra.mxu0 0
      %1589 = vmatprep.subr.bf16.mxu0 0
      %1590 = vmatpush1.bf16.xpose.msra.mxu0 0
      %1591 = vmatprep.subr.bf16.mxu0 0
      %1592 = vmatpush1.bf16.xpose.msra.mxu0 0
      %1593 = vmatprep.subr.bf16.mxu0 0
      %1594 = vmatpush1.bf16.xpose.msra.mxu0 0
      %1595 = vmatprep.subr.bf16.mxu0 0
      %1596 = vmatpush1.bf16.xpose.msra.mxu0 0
      %1597 = vmatprep.subr.bf16.mxu0 0
      %1598 = vmatpush1.bf16.xpose.msra.mxu0 0
      %1599 = vmatprep.subr.bf16.mxu0 0
      %1600 = vmatpush1.bf16.xpose.msra.mxu0 0
      %1601 = vmatprep.subr.bf16.mxu0 0
      %1602 = vmatpush1.bf16.xpose.msra.mxu0 0
      %1603 = vmatprep.subr.bf16.mxu0 0
      %1604 = vmatpush1.bf16.xpose.msra.mxu0 0
      %1605 = vmatprep.mubr.bf16.mxu0 0
      %1606 = vmatmul.mubr.bf16.gmra.mrb[0].mxu0 %v1568
      %v1607 = vpop.f32.mrb[0].mxu0
      %v1608 = vadd.f32 0.0, %v1607
      %v1609 = vpop.f32.mrb[0].mxu0
      %v1610 = vpop.f32.mrb[0].mxu0
      %v1611 = vadd.f32 0.0, %v1610
      %v1612 = vpop.f32.mrb[0].mxu0
      %1613 = vdwg.mxu0
      %v1615 = vsel %vm1566, %v993, 0
      %v1618 = vsel %vm1566, %v1278, 0
      %1620 = vmatprep.subr.bf16.mxu0 0
      %1621 = vmatpush1.bf16.xpose.msra.mxu0 %v1618
      %1622 = vmatprep.subr.bf16.mxu0 0
      %1623 = vmatpush1.bf16.xpose.msra.mxu0 0
      %1624 = vmatprep.subr.bf16.mxu0 0
      %1625 = vmatpush1.bf16.xpose.msra.mxu0 0
      %1626 = vmatprep.subr.bf16.mxu0 0
      %1627 = vmatpush1.bf16.xpose.msra.mxu0 0
      %1628 = vmatprep.subr.bf16.mxu0 0
      %1629 = vmatpush1.bf16.xpose.msra.mxu0 0
      %1630 = vmatprep.subr.bf16.mxu0 0
      %1631 = vmatpush1.bf16.xpose.msra.mxu0 0
      %1632 = vmatprep.subr.bf16.mxu0 0
      %1633 = vmatpush1.bf16.xpose.msra.mxu0 0
      %1634 = vmatprep.subr.bf16.mxu0 0
      %1635 = vmatpush1.bf16.xpose.msra.mxu0 0
      %1636 = vmatprep.subr.bf16.mxu0 0
      %1637 = vmatpush1.bf16.xpose.msra.mxu0 0
      %1638 = vmatprep.subr.bf16.mxu0 0
      %1639 = vmatpush1.bf16.xpose.msra.mxu0 0
      %1640 = vmatprep.subr.bf16.mxu0 0
      %1641 = vmatpush1.bf16.xpose.msra.mxu0 0
      %1642 = vmatprep.subr.bf16.mxu0 0
      %1643 = vmatpush1.bf16.xpose.msra.mxu0 0
      %1644 = vmatprep.subr.bf16.mxu0 0
      %1645 = vmatpush1.bf16.xpose.msra.mxu0 0
      %1646 = vmatprep.subr.bf16.mxu0 0
      %1647 = vmatpush1.bf16.xpose.msra.mxu0 0
      %1648 = vmatprep.subr.bf16.mxu0 0
      %1649 = vmatpush1.bf16.xpose.msra.mxu0 0
      %1650 = vmatprep.subr.bf16.mxu0 0
      %1651 = vmatpush1.bf16.xpose.msra.mxu0 0
      %1652 = vmatprep.mubr.bf16.mxu0 0
      %1653 = vmatmul.mubr.bf16.gmra.mrb[0].mxu0 %v1615
      %v1654 = vpop.f32.mrb[0].mxu0
      %v1655 = vadd.f32 0.0, %v1654
      %v1656 = vpop.f32.mrb[0].mxu0
      %v1657 = vpop.f32.mrb[0].mxu0
      %v1658 = vadd.f32 0.0, %v1657
      %v1659 = vpop.f32.mrb[0].mxu0
      %1660 = vdwg.mxu0
      %v1662 = vsel %vm1566, %v994, 0
      %v1665 = vsel %vm1566, %v1279, 0
      %1667 = vmatprep.subr.bf16.mxu0 0
      %1668 = vmatpush1.bf16.xpose.msra.mxu0 %v1665
      %1669 = vmatprep.subr.bf16.mxu0 0
      %1670 = vmatpush1.bf16.xpose.msra.mxu0 0
      %1671 = vmatprep.subr.bf16.mxu0 0
      %1672 = vmatpush1.bf16.xpose.msra.mxu0 0
      %1673 = vmatprep.subr.bf16.mxu0 0
      %1674 = vmatpush1.bf16.xpose.msra.mxu0 0
      %1675 = vmatprep.subr.bf16.mxu0 0
      %1676 = vmatpush1.bf16.xpose.msra.mxu0 0
      %1677 = vmatprep.subr.bf16.mxu0 0
      %1678 = vmatpush1.bf16.xpose.msra.mxu0 0
      %1679 = vmatprep.subr.bf16.mxu0 0
      %1680 = vmatpush1.bf16.xpose.msra.mxu0 0
      %1681 = vmatprep.subr.bf16.mxu0 0
      %1682 = vmatpush1.bf16.xpose.msra.mxu0 0
      %1683 = vmatprep.subr.bf16.mxu0 0
      %1684 = vmatpush1.bf16.xpose.msra.mxu0 0
      %1685 = vmatprep.subr.bf16.mxu0 0
      %1686 = vmatpush1.bf16.xpose.msra.mxu0 0
      %1687 = vmatprep.subr.bf16.mxu0 0
      %1688 = vmatpush1.bf16.xpose.msra.mxu0 0
      %1689 = vmatprep.subr.bf16.mxu0 0
      %1690 = vmatpush1.bf16.xpose.msra.mxu0 0
      %1691 = vmatprep.subr.bf16.mxu0 0
      %1692 = vmatpush1.bf16.xpose.msra.mxu0 0
      %1693 = vmatprep.subr.bf16.mxu0 0
      %1694 = vmatpush1.bf16.xpose.msra.mxu0 0
      %1695 = vmatprep.subr.bf16.mxu0 0
      %1696 = vmatpush1.bf16.xpose.msra.mxu0 0
      %1697 = vmatprep.subr.bf16.mxu0 0
      %1698 = vmatpush1.bf16.xpose.msra.mxu0 0
      %1699 = vmatprep.mubr.bf16.mxu0 0
      %1700 = vmatmul.mubr.bf16.gmra.mrb[0].mxu0 %v1662
      %v1701 = vpop.f32.mrb[0].mxu0
      %v1702 = vadd.f32 0.0, %v1701
      %v1703 = vpop.f32.mrb[0].mxu0
      %v1704 = vpop.f32.mrb[0].mxu0
      %v1705 = vadd.f32 0.0, %v1704
      %v1706 = vpop.f32.mrb[0].mxu0
      %1707 = vdwg.mxu0
      %v1709 = vsel %vm1566, %v995, 0
      %v1712 = vsel %vm1566, %v1280, 0
      %1714 = vmatprep.subr.bf16.mxu0 0
      %1715 = vmatpush1.bf16.xpose.msra.mxu0 %v1712
      %1716 = vmatprep.subr.bf16.mxu0 0
      %1717 = vmatpush1.bf16.xpose.msra.mxu0 0
      %1718 = vmatprep.subr.bf16.mxu0 0
      %1719 = vmatpush1.bf16.xpose.msra.mxu0 0
      %1720 = vmatprep.subr.bf16.mxu0 0
      %1721 = vmatpush1.bf16.xpose.msra.mxu0 0
      %1722 = vmatprep.subr.bf16.mxu0 0
      %1723 = vmatpush1.bf16.xpose.msra.mxu0 0
      %1724 = vmatprep.subr.bf16.mxu0 0
      %1725 = vmatpush1.bf16.xpose.msra.mxu0 0
      %1726 = vmatprep.subr.bf16.mxu0 0
      %1727 = vmatpush1.bf16.xpose.msra.mxu0 0
      %1728 = vmatprep.subr.bf16.mxu0 0
      %1729 = vmatpush1.bf16.xpose.msra.mxu0 0
      %1730 = vmatprep.subr.bf16.mxu0 0
      %1731 = vmatpush1.bf16.xpose.msra.mxu0 0
      %1732 = vmatprep.subr.bf16.mxu0 0
      %1733 = vmatpush1.bf16.xpose.msra.mxu0 0
      %1734 = vmatprep.subr.bf16.mxu0 0
      %1735 = vmatpush1.bf16.xpose.msra.mxu0 0
      %1736 = vmatprep.subr.bf16.mxu0 0
      %1737 = vmatpush1.bf16.xpose.msra.mxu0 0
      %1738 = vmatprep.subr.bf16.mxu0 0
      %1739 = vmatpush1.bf16.xpose.msra.mxu0 0
      %1740 = vmatprep.subr.bf16.mxu0 0
      %1741 = vmatpush1.bf16.xpose.msra.mxu0 0
      %1742 = vmatprep.subr.bf16.mxu0 0
      %1743 = vmatpush1.bf16.xpose.msra.mxu0 0
      %1744 = vmatprep.subr.bf16.mxu0 0
      %1745 = vmatpush1.bf16.xpose.msra.mxu0 0
      %1746 = vmatprep.mubr.bf16.mxu0 0
      %1747 = vmatmul.mubr.bf16.gmra.mrb[0].mxu0 %v1709
      %v1748 = vpop.f32.mrb[0].mxu0
      %v1749 = vadd.f32 0.0, %v1748
      %v1750 = vpop.f32.mrb[0].mxu0
      %v1751 = vpop.f32.mrb[0].mxu0
      %v1752 = vadd.f32 0.0, %v1751
      %v1753 = vpop.f32.mrb[0].mxu0
      %1754 = vdwg.mxu0
      %vm1755 = vcmask 113664
      %v1756 = vsel %vm1755, %v1608, -inf
      %1757 = vmax.xlane.f32.xlu0 %v1756
      %v1758 = vpop.xlane.xlu0 %1757
      %vm1759 = vcmask 111616
      %v1760 = vsel %vm1759, %v1611, -inf
      %1761 = vmax.xlane.f32.xlu0 %v1760
      %v1762 = vpop.xlane.xlu0 %1761
      %v1763 = vsel %vm1755, %v1655, -inf
      %1764 = vmax.xlane.f32.xlu0 %v1763
      %v1765 = vpop.xlane.xlu0 %1764
      %v1766 = vsel %vm1759, %v1658, -inf
      %1767 = vmax.xlane.f32.xlu0 %v1766
      %v1768 = vpop.xlane.xlu0 %1767
      %v1769 = vsel %vm1755, %v1702, -inf
      %1770 = vmax.xlane.f32.xlu0 %v1769
      %v1771 = vpop.xlane.xlu0 %1770
      %v1772 = vsel %vm1759, %v1705, -inf
      %1773 = vmax.xlane.f32.xlu0 %v1772
      %v1774 = vpop.xlane.xlu0 %1773
      %v1775 = vsel %vm1755, %v1749, -inf
      %1776 = vmax.xlane.f32.xlu0 %v1775
      %v1777 = vpop.xlane.xlu0 %1776
      %v1778 = vsel %vm1759, %v1752, -inf
      %1779 = vmax.xlane.f32.xlu0 %v1778
      %v1780 = vpop.xlane.xlu0 %1779
      %v1781 = vsub.f32 %v1608, %v1758
      %v1782 = vsub.f32 %v1611, %v1762
      %v1783 = vsub.f32 %v1655, %v1765
      %v1784 = vsub.f32 %v1658, %v1768
      %v1785 = vsub.f32 %v1702, %v1771
      %v1786 = vsub.f32 %v1705, %v1774
      %v1787 = vsub.f32 %v1749, %v1777
      %v1788 = vsub.f32 %v1752, %v1780
      %v1789 = vmul.f32 %v1781, 1.442695
      %v1790 = vpow.pop %v1789
      %v1791 = vmul.f32 %v1782, 1.442695
      %v1792 = vpow.pop %v1791
      %v1793 = vmul.f32 %v1783, 1.442695
      %v1794 = vpow.pop %v1793
      %v1795 = vmul.f32 %v1784, 1.442695
      %v1796 = vpow.pop %v1795
      %v1797 = vmul.f32 %v1785, 1.442695
      %v1798 = vpow.pop %v1797
      %v1799 = vmul.f32 %v1786, 1.442695
      %v1800 = vpow.pop %v1799
      %v1801 = vmul.f32 %v1787, 1.442695
      %v1802 = vpow.pop %v1801
      %v1803 = vmul.f32 %v1788, 1.442695
      %v1804 = vpow.pop %v1803
      %v1805 = vsel %vm1755, %v1790, 0.0
      %1806 = vadd.xlane.f32.xlu0 %v1805
      %v1807 = vpop.xlane.xlu0 %1806
      %v1808 = vsel %vm1759, %v1792, 0.0
      %1809 = vadd.xlane.f32.xlu0 %v1808
      %v1810 = vpop.xlane.xlu0 %1809
      %v1811 = vsel %vm1755, %v1794, 0.0
      %1812 = vadd.xlane.f32.xlu0 %v1811
      %v1813 = vpop.xlane.xlu0 %1812
      %v1814 = vsel %vm1759, %v1796, 0.0
      %1815 = vadd.xlane.f32.xlu0 %v1814
      %v1816 = vpop.xlane.xlu0 %1815
      %v1817 = vsel %vm1755, %v1798, 0.0
      %1818 = vadd.xlane.f32.xlu0 %v1817
      %v1819 = vpop.xlane.xlu0 %1818
      %v1820 = vsel %vm1759, %v1800, 0.0
      %1821 = vadd.xlane.f32.xlu0 %v1820
      %v1822 = vpop.xlane.xlu0 %1821
      %v1823 = vsel %vm1755, %v1802, 0.0
      %1824 = vadd.xlane.f32.xlu0 %v1823
      %v1825 = vpop.xlane.xlu0 %1824
      %v1826 = vsel %vm1759, %v1804, 0.0
      %1827 = vadd.xlane.f32.xlu0 %v1826
      %v1828 = vpop.xlane.xlu0 %1827
      %v1829 = vrcp.pop %v1807
      %v1830 = vrcp.pop %v1810
      %v1831 = vrcp.pop %v1813
      %v1832 = vrcp.pop %v1816
      %v1833 = vrcp.pop %v1819
      %v1834 = vrcp.pop %v1822
      %v1835 = vrcp.pop %v1825
      %v1836 = vrcp.pop %v1828
      %v1837 = vmul.f32 %v1790, %v1829
      %v1838 = vmul.f32 %v1792, %v1830
      %v1839 = vmul.f32 %v1794, %v1831
      %v1840 = vmul.f32 %v1796, %v1832
      %v1841 = vmul.f32 %v1798, %v1833
      %v1842 = vmul.f32 %v1800, %v1834
      %v1843 = vmul.f32 %v1802, %v1835
      %v1844 = vmul.f32 %v1804, %v1836
      %v1845 = vpack.c.bf16 %v1838, %v1837
      %v1846 = vpack.c.bf16 %v1840, %v1839
      %v1847 = vpack.c.bf16 %v1842, %v1841
      %v1848 = vpack.c.bf16 %v1844, %v1843
      %v1850 = vsel %vm1755, %v1845, 0
      %vm1852 = vcmask 1046528
      %v1854 = vsel %vm1852, %v1562, 0
      %1856 = vmatprep.subr.bf16.mxu0 0
      %1857 = vmatpush1.bf16.msra.mxu0 %v1854
      %1858 = vmatprep.subr.bf16.mxu0 0
      %1859 = vmatpush1.bf16.msra.mxu0 0
      %1860 = vmatprep.subr.bf16.mxu0 0
      %1861 = vmatpush1.bf16.msra.mxu0 0
      %1862 = vmatprep.subr.bf16.mxu0 0
      %1863 = vmatpush1.bf16.msra.mxu0 0
      %1864 = vmatprep.subr.bf16.mxu0 0
      %1865 = vmatpush1.bf16.msra.mxu0 0
      %1866 = vmatprep.subr.bf16.mxu0 0
      %1867 = vmatpush1.bf16.msra.mxu0 0
      %1868 = vmatprep.subr.bf16.mxu0 0
      %1869 = vmatpush1.bf16.msra.mxu0 0
      %1870 = vmatprep.subr.bf16.mxu0 0
      %1871 = vmatpush1.bf16.msra.mxu0 0
      %1872 = vmatprep.subr.bf16.mxu0 0
      %1873 = vmatpush1.bf16.msra.mxu0 0
      %1874 = vmatprep.subr.bf16.mxu0 0
      %1875 = vmatpush1.bf16.msra.mxu0 0
      %1876 = vmatprep.subr.bf16.mxu0 0
      %1877 = vmatpush1.bf16.msra.mxu0 0
      %1878 = vmatprep.subr.bf16.mxu0 0
      %1879 = vmatpush1.bf16.msra.mxu0 0
      %1880 = vmatprep.subr.bf16.mxu0 0
      %1881 = vmatpush1.bf16.msra.mxu0 0
      %1882 = vmatprep.subr.bf16.mxu0 0
      %1883 = vmatpush1.bf16.msra.mxu0 0
      %1884 = vmatprep.subr.bf16.mxu0 0
      %1885 = vmatpush1.bf16.msra.mxu0 0
      %1886 = vmatprep.subr.bf16.mxu0 0
      %1887 = vmatpush1.bf16.msra.mxu0 0
      %1888 = vmatprep.mubr.bf16.mxu0 0
      %1889 = vmatmul.mubr.bf16.gmra.mrb[0].mxu0 %v1850
      %v1890 = vpop.f32.mrb[0].mxu0
      %v1891 = vadd.f32 0.0, %v1890
      %v1892 = vpop.f32.mrb[0].mxu0
      %v1893 = vpop.f32.mrb[0].mxu0
      %v1894 = vadd.f32 0.0, %v1893
      %v1895 = vpop.f32.mrb[0].mxu0
      %1896 = vdwg.mxu0
      %v1898 = vsel %vm1755, %v1846, 0
      %v1901 = vsel %vm1852, %v1563, 0
      %1903 = vmatprep.subr.bf16.mxu0 0
      %1904 = vmatpush1.bf16.msra.mxu0 %v1901
      %1905 = vmatprep.subr.bf16.mxu0 0
      %1906 = vmatpush1.bf16.msra.mxu0 0
      %1907 = vmatprep.subr.bf16.mxu0 0
      %1908 = vmatpush1.bf16.msra.mxu0 0
      %1909 = vmatprep.subr.bf16.mxu0 0
      %1910 = vmatpush1.bf16.msra.mxu0 0
      %1911 = vmatprep.subr.bf16.mxu0 0
      %1912 = vmatpush1.bf16.msra.mxu0 0
      %1913 = vmatprep.subr.bf16.mxu0 0
      %1914 = vmatpush1.bf16.msra.mxu0 0
      %1915 = vmatprep.subr.bf16.mxu0 0
      %1916 = vmatpush1.bf16.msra.mxu0 0
      %1917 = vmatprep.subr.bf16.mxu0 0
      %1918 = vmatpush1.bf16.msra.mxu0 0
      %1919 = vmatprep.subr.bf16.mxu0 0
      %1920 = vmatpush1.bf16.msra.mxu0 0
      %1921 = vmatprep.subr.bf16.mxu0 0
      %1922 = vmatpush1.bf16.msra.mxu0 0
      %1923 = vmatprep.subr.bf16.mxu0 0
      %1924 = vmatpush1.bf16.msra.mxu0 0
      %1925 = vmatprep.subr.bf16.mxu0 0
      %1926 = vmatpush1.bf16.msra.mxu0 0
      %1927 = vmatprep.subr.bf16.mxu0 0
      %1928 = vmatpush1.bf16.msra.mxu0 0
      %1929 = vmatprep.subr.bf16.mxu0 0
      %1930 = vmatpush1.bf16.msra.mxu0 0
      %1931 = vmatprep.subr.bf16.mxu0 0
      %1932 = vmatpush1.bf16.msra.mxu0 0
      %1933 = vmatprep.subr.bf16.mxu0 0
      %1934 = vmatpush1.bf16.msra.mxu0 0
      %1935 = vmatprep.mubr.bf16.mxu0 0
      %1936 = vmatmul.mubr.bf16.gmra.mrb[0].mxu0 %v1898
      %v1937 = vpop.f32.mrb[0].mxu0
      %v1938 = vadd.f32 0.0, %v1937
      %v1939 = vpop.f32.mrb[0].mxu0
      %v1940 = vpop.f32.mrb[0].mxu0
      %v1941 = vadd.f32 0.0, %v1940
      %v1942 = vpop.f32.mrb[0].mxu0
      %1943 = vdwg.mxu0
      %v1945 = vsel %vm1755, %v1847, 0
      %v1948 = vsel %vm1852, %v1564, 0
      %1950 = vmatprep.subr.bf16.mxu0 0
      %1951 = vmatpush1.bf16.msra.mxu0 %v1948
      %1952 = vmatprep.subr.bf16.mxu0 0
      %1953 = vmatpush1.bf16.msra.mxu0 0
      %1954 = vmatprep.subr.bf16.mxu0 0
      %1955 = vmatpush1.bf16.msra.mxu0 0
      %1956 = vmatprep.subr.bf16.mxu0 0
      %1957 = vmatpush1.bf16.msra.mxu0 0
      %1958 = vmatprep.subr.bf16.mxu0 0
      %1959 = vmatpush1.bf16.msra.mxu0 0
      %1960 = vmatprep.subr.bf16.mxu0 0
      %1961 = vmatpush1.bf16.msra.mxu0 0
      %1962 = vmatprep.subr.bf16.mxu0 0
      %1963 = vmatpush1.bf16.msra.mxu0 0
      %1964 = vmatprep.subr.bf16.mxu0 0
      %1965 = vmatpush1.bf16.msra.mxu0 0
      %1966 = vmatprep.subr.bf16.mxu0 0
      %1967 = vmatpush1.bf16.msra.mxu0 0
      %1968 = vmatprep.subr.bf16.mxu0 0
      %1969 = vmatpush1.bf16.msra.mxu0 0
      %1970 = vmatprep.subr.bf16.mxu0 0
      %1971 = vmatpush1.bf16.msra.mxu0 0
      %1972 = vmatprep.subr.bf16.mxu0 0
      %1973 = vmatpush1.bf16.msra.mxu0 0
      %1974 = vmatprep.subr.bf16.mxu0 0
      %1975 = vmatpush1.bf16.msra.mxu0 0
      %1976 = vmatprep.subr.bf16.mxu0 0
      %1977 = vmatpush1.bf16.msra.mxu0 0
      %1978 = vmatprep.subr.bf16.mxu0 0
      %1979 = vmatpush1.bf16.msra.mxu0 0
      %1980 = vmatprep.subr.bf16.mxu0 0
      %1981 = vmatpush1.bf16.msra.mxu0 0
      %1982 = vmatprep.mubr.bf16.mxu0 0
      %1983 = vmatmul.mubr.bf16.gmra.mrb[0].mxu0 %v1945
      %v1984 = vpop.f32.mrb[0].mxu0
      %v1985 = vadd.f32 0.0, %v1984
      %v1986 = vpop.f32.mrb[0].mxu0
      %v1987 = vpop.f32.mrb[0].mxu0
      %v1988 = vadd.f32 0.0, %v1987
      %v1989 = vpop.f32.mrb[0].mxu0
      %1990 = vdwg.mxu0
      %v1992 = vsel %vm1755, %v1848, 0
      %v1995 = vsel %vm1852, %v1565, 0
      %1997 = vmatprep.subr.bf16.mxu0 0
      %1998 = vmatpush1.bf16.msra.mxu0 %v1995
      %1999 = vmatprep.subr.bf16.mxu0 0
      %2000 = vmatpush1.bf16.msra.mxu0 0
      %2001 = vmatprep.subr.bf16.mxu0 0
      %2002 = vmatpush1.bf16.msra.mxu0 0
      %2003 = vmatprep.subr.bf16.mxu0 0
      %2004 = vmatpush1.bf16.msra.mxu0 0
      %2005 = vmatprep.subr.bf16.mxu0 0
      %2006 = vmatpush1.bf16.msra.mxu0 0
      %2007 = vmatprep.subr.bf16.mxu0 0
      %2008 = vmatpush1.bf16.msra.mxu0 0
      %2009 = vmatprep.subr.bf16.mxu0 0
      %2010 = vmatpush1.bf16.msra.mxu0 0
      %2011 = vmatprep.subr.bf16.mxu0 0
      %2012 = vmatpush1.bf16.msra.mxu0 0
      %2013 = vmatprep.subr.bf16.mxu0 0
      %2014 = vmatpush1.bf16.msra.mxu0 0
      %2015 = vmatprep.subr.bf16.mxu0 0
      %2016 = vmatpush1.bf16.msra.mxu0 0
      %2017 = vmatprep.subr.bf16.mxu0 0
      %2018 = vmatpush1.bf16.msra.mxu0 0
      %2019 = vmatprep.subr.bf16.mxu0 0
      %2020 = vmatpush1.bf16.msra.mxu0 0
      %2021 = vmatprep.subr.bf16.mxu0 0
      %2022 = vmatpush1.bf16.msra.mxu0 0
      %2023 = vmatprep.subr.bf16.mxu0 0
      %2024 = vmatpush1.bf16.msra.mxu0 0
      %2025 = vmatprep.subr.bf16.mxu0 0
      %2026 = vmatpush1.bf16.msra.mxu0 0
      %2027 = vmatprep.subr.bf16.mxu0 0
      %2028 = vmatpush1.bf16.msra.mxu0 0
      %2029 = vmatprep.mubr.bf16.mxu0 0
      %2030 = vmatmul.mubr.bf16.gmra.mrb[0].mxu0 %v1992
      %v2031 = vpop.f32.mrb[0].mxu0
      %v2032 = vadd.f32 0.0, %v2031
      %v2033 = vpop.f32.mrb[0].mxu0
      %v2034 = vpop.f32.mrb[0].mxu0
      %v2035 = vadd.f32 0.0, %v2034
      %v2036 = vpop.f32.mrb[0].mxu0
      %2037 = vdwg.mxu0
      %v2038 = vcombine.low %v1891, %v1985
      %v2039 = vcombine.high %v1891, %v1985
      %v2041 = vunpack.c.l.s4 1983009808
      %v2042 = vunpack.c.0.s8 %v2041
      %v2043 = vlaneseq
      %v2044 = vshrl.u32 %v2043, 7
      %v2045 = vsub.s32 %v2042, %v2044
      %v2046 = vrot.slane %v2038, %v2045
      %v2048 = vunpack.c.l.s4 1983009808
      %v2049 = vunpack.c.0.s8 %v2048
      %v2050 = vlaneseq
      %v2051 = vshrl.u32 %v2050, 7
      %v2052 = vsub.s32 %v2049, %v2051
      %v2053 = vrot.slane %v2039, %v2052
      %v2054 = vcombine.low %v1938, %v2032
      %v2055 = vcombine.high %v1938, %v2032
      %v2057 = vunpack.c.l.s4 1983009808
      %v2058 = vunpack.c.0.s8 %v2057
      %v2059 = vlaneseq
      %v2060 = vshrl.u32 %v2059, 7
      %v2061 = vsub.s32 %v2058, %v2060
      %v2062 = vrot.slane %v2054, %v2061
      %v2064 = vunpack.c.l.s4 1983009808
      %v2065 = vunpack.c.0.s8 %v2064
      %v2066 = vlaneseq
      %v2067 = vshrl.u32 %v2066, 7
      %v2068 = vsub.s32 %v2065, %v2067
      %v2069 = vrot.slane %v2055, %v2068
      %v2070 = vcombine.low %v2046, %v2062
      %v2071 = vcombine.high %v2046, %v2062
      %v2073 = vunpack.c.l.s4 1934713408
      %v2074 = vunpack.c.0.s8 %v2073
      %v2075 = vlaneseq
      %v2076 = vshrl.u32 %v2075, 7
      %v2077 = vsub.s32 %v2074, %v2076
      %v2078 = vrot.slane %v2070, %v2077
      %v2080 = vunpack.c.l.s4 1934713408
      %v2081 = vunpack.c.0.s8 %v2080
      %v2082 = vlaneseq
      %v2083 = vshrl.u32 %v2082, 7
      %v2084 = vsub.s32 %v2081, %v2083
      %v2085 = vrot.slane %v2071, %v2084
      %v2086 = vcombine.low %v2053, %v2069
      %v2087 = vcombine.high %v2053, %v2069
      %v2089 = vunpack.c.l.s4 1934713408
      %v2090 = vunpack.c.0.s8 %v2089
      %v2091 = vlaneseq
      %v2092 = vshrl.u32 %v2091, 7
      %v2093 = vsub.s32 %v2090, %v2092
      %v2094 = vrot.slane %v2086, %v2093
      %v2096 = vunpack.c.l.s4 1934713408
      %v2097 = vunpack.c.0.s8 %v2096
      %v2098 = vlaneseq
      %v2099 = vshrl.u32 %v2098, 7
      %v2100 = vsub.s32 %v2097, %v2099
      %v2101 = vrot.slane %v2087, %v2100
      %v2102 = vcombine.high %v2078, 0.0
      %v2103 = vcombine.high %v2085, 0.0
      %v2104 = vcombine.high %v2094, 0.0
      %v2105 = vcombine.high %v2101, 0.0
      %v2106 = vcombine.low %v1894, %v1988
      %v2107 = vcombine.high %v1894, %v1988
      %v2109 = vunpack.c.l.s4 1983009808
      %v2110 = vunpack.c.0.s8 %v2109
      %v2111 = vlaneseq
      %v2112 = vshrl.u32 %v2111, 7
      %v2113 = vsub.s32 %v2110, %v2112
      %v2114 = vrot.slane %v2106, %v2113
      %v2116 = vunpack.c.l.s4 1983009808
      %v2117 = vunpack.c.0.s8 %v2116
      %v2118 = vlaneseq
      %v2119 = vshrl.u32 %v2118, 7
      %v2120 = vsub.s32 %v2117, %v2119
      %v2121 = vrot.slane %v2107, %v2120
      %v2122 = vcombine.low %v1941, %v2035
      %v2123 = vcombine.high %v1941, %v2035
      %v2125 = vunpack.c.l.s4 1983009808
      %v2126 = vunpack.c.0.s8 %v2125
      %v2127 = vlaneseq
      %v2128 = vshrl.u32 %v2127, 7
      %v2129 = vsub.s32 %v2126, %v2128
      %v2130 = vrot.slane %v2122, %v2129
      %v2132 = vunpack.c.l.s4 1983009808
      %v2133 = vunpack.c.0.s8 %v2132
      %v2134 = vlaneseq
      %v2135 = vshrl.u32 %v2134, 7
      %v2136 = vsub.s32 %v2133, %v2135
      %v2137 = vrot.slane %v2123, %v2136
      %v2138 = vcombine.low %v2114, %v2130
      %v2139 = vcombine.high %v2114, %v2130
      %v2141 = vunpack.c.l.s4 1934713408
      %v2142 = vunpack.c.0.s8 %v2141
      %v2143 = vlaneseq
      %v2144 = vshrl.u32 %v2143, 7
      %v2145 = vsub.s32 %v2142, %v2144
      %v2146 = vrot.slane %v2138, %v2145
      %v2148 = vunpack.c.l.s4 1934713408
      %v2149 = vunpack.c.0.s8 %v2148
      %v2150 = vlaneseq
      %v2151 = vshrl.u32 %v2150, 7
      %v2152 = vsub.s32 %v2149, %v2151
      %v2153 = vrot.slane %v2139, %v2152
      %v2154 = vcombine.low %v2121, %v2137
      %v2156 = vunpack.c.l.s4 1934713408
      %v2157 = vunpack.c.0.s8 %v2156
      %v2158 = vlaneseq
      %v2159 = vshrl.u32 %v2158, 7
      %v2160 = vsub.s32 %v2157, %v2159
      %v2161 = vrot.slane %v2154, %v2160
      %v2162 = vcombine.high %v2146, 0.0
      %v2163 = vcombine.high %v2153, 0.0
      %v2164 = vcombine.low %v2078, %v2085
      %v2166 = vunpack.c.l.s4 1983009808
      %v2167 = vunpack.c.0.s8 %v2166
      %v2168 = vlaneseq
      %v2169 = vshrl.u32 %v2168, 7
      %v2170 = vsub.s32 %v2167, %v2169
      %v2171 = vrot.slane %v2164, %v2170
      %v2172 = vcombine.low %v2102, %v2103
      %v2174 = vunpack.c.l.s4 1983009808
      %v2175 = vunpack.c.0.s8 %v2174
      %v2176 = vlaneseq
      %v2177 = vshrl.u32 %v2176, 7
      %v2178 = vsub.s32 %v2175, %v2177
      %v2179 = vrot.slane %v2172, %v2178
      %v2180 = vcombine.low %v2094, %v2101
      %v2182 = vunpack.c.l.s4 1983009808
      %v2183 = vunpack.c.0.s8 %v2182
      %v2184 = vlaneseq
      %v2185 = vshrl.u32 %v2184, 7
      %v2186 = vsub.s32 %v2183, %v2185
      %v2187 = vrot.slane %v2180, %v2186
      %v2188 = vcombine.low %v2104, %v2105
      %v2190 = vunpack.c.l.s4 1983009808
      %v2191 = vunpack.c.0.s8 %v2190
      %v2192 = vlaneseq
      %v2193 = vshrl.u32 %v2192, 7
      %v2194 = vsub.s32 %v2191, %v2193
      %v2195 = vrot.slane %v2188, %v2194
      %v2196 = vcombine.low %v2171, %v2179
      %v2197 = vcombine.high %v2171, %v2179
      %v2199 = vunpack.c.l.s4 1934713408
      %v2200 = vunpack.c.0.s8 %v2199
      %v2201 = vlaneseq
      %v2202 = vshrl.u32 %v2201, 7
      %v2203 = vsub.s32 %v2200, %v2202
      %v2204 = vrot.slane %v2196, %v2203
      %v2206 = vunpack.c.l.s4 1934713408
      %v2207 = vunpack.c.0.s8 %v2206
      %v2208 = vlaneseq
      %v2209 = vshrl.u32 %v2208, 7
      %v2210 = vsub.s32 %v2207, %v2209
      %v2211 = vrot.slane %v2197, %v2210
      %v2212 = vcombine.low %v2187, %v2195
      %v2213 = vcombine.high %v2187, %v2195
      %v2215 = vunpack.c.l.s4 1934713408
      %v2216 = vunpack.c.0.s8 %v2215
      %v2217 = vlaneseq
      %v2218 = vshrl.u32 %v2217, 7
      %v2219 = vsub.s32 %v2216, %v2218
      %v2220 = vrot.slane %v2212, %v2219
      %v2222 = vunpack.c.l.s4 1934713408
      %v2223 = vunpack.c.0.s8 %v2222
      %v2224 = vlaneseq
      %v2225 = vshrl.u32 %v2224, 7
      %v2226 = vsub.s32 %v2223, %v2225
      %v2227 = vrot.slane %v2213, %v2226
      %v2228 = vcombine.low %v2204, %v2220
      %v2229 = vcombine.high %v2204, %v2220
      %v2230 = vcombine.low %v2211, %v2227
      %v2231 = vcombine.high %v2211, %v2227
      %v2232 = vcombine.low %v2146, %v2153
      %v2234 = vunpack.c.l.s4 1983009808
      %v2235 = vunpack.c.0.s8 %v2234
      %v2236 = vlaneseq
      %v2237 = vshrl.u32 %v2236, 7
      %v2238 = vsub.s32 %v2235, %v2237
      %v2239 = vrot.slane %v2232, %v2238
      %v2240 = vcombine.low %v2162, %v2163
      %v2242 = vunpack.c.l.s4 1983009808
      %v2243 = vunpack.c.0.s8 %v2242
      %v2244 = vlaneseq
      %v2245 = vshrl.u32 %v2244, 7
      %v2246 = vsub.s32 %v2243, %v2245
      %v2247 = vrot.slane %v2240, %v2246
      %v2249 = vunpack.c.l.s4 1983009808
      %v2250 = vunpack.c.0.s8 %v2249
      %v2251 = vlaneseq
      %v2252 = vshrl.u32 %v2251, 7
      %v2253 = vsub.s32 %v2250, %v2252
      %v2254 = vrot.slane %v2161, %v2253
      %v2255 = vcombine.high %v2161, 0.0
      %v2257 = vunpack.c.l.s4 1983009808
      %v2258 = vunpack.c.0.s8 %v2257
      %v2259 = vlaneseq
      %v2260 = vshrl.u32 %v2259, 7
      %v2261 = vsub.s32 %v2258, %v2260
      %v2262 = vrot.slane %v2255, %v2261
      %v2263 = vcombine.low %v2239, %v2247
      %v2264 = vcombine.high %v2239, %v2247
      %v2266 = vunpack.c.l.s4 1934713408
      %v2267 = vunpack.c.0.s8 %v2266
      %v2268 = vlaneseq
      %v2269 = vshrl.u32 %v2268, 7
      %v2270 = vsub.s32 %v2267, %v2269
      %v2271 = vrot.slane %v2263, %v2270
      %v2273 = vunpack.c.l.s4 1934713408
      %v2274 = vunpack.c.0.s8 %v2273
      %v2275 = vlaneseq
      %v2276 = vshrl.u32 %v2275, 7
      %v2277 = vsub.s32 %v2274, %v2276
      %v2278 = vrot.slane %v2264, %v2277
      %v2279 = vcombine.low %v2254, %v2262
      %v2280 = vcombine.high %v2254, %v2262
      %v2282 = vunpack.c.l.s4 1934713408
      %v2283 = vunpack.c.0.s8 %v2282
      %v2284 = vlaneseq
      %v2285 = vshrl.u32 %v2284, 7
      %v2286 = vsub.s32 %v2283, %v2285
      %v2287 = vrot.slane %v2279, %v2286
      %v2289 = vunpack.c.l.s4 1934713408
      %v2290 = vunpack.c.0.s8 %v2289
      %v2291 = vlaneseq
      %v2292 = vshrl.u32 %v2291, 7
      %v2293 = vsub.s32 %v2290, %v2292
      %v2294 = vrot.slane %v2280, %v2293
      %v2295 = vcombine.low %v2271, %v2287
      %v2296 = vcombine.high %v2271, %v2287
      %v2297 = vcombine.low %v2278, %v2294
      %v2298 = vcombine.high %v2278, %v2294
      %2301 = vrot.lane.b32.xlu0 %v2229, 32
      %v2302 = vpop.permute.xlu0 %2301
      %2303 = vrot.lane.b32.xlu0 %v2296, 32
      %v2304 = vpop.permute.xlu0 %2303
      %2309 = vrot.lane.b32.xlu0 %v2230, 64
      %v2310 = vpop.permute.xlu0 %2309
      %2311 = vrot.lane.b32.xlu0 %v2297, 64
      %v2312 = vpop.permute.xlu0 %2311
      %2317 = vrot.lane.b32.xlu0 %v2231, 96
      %v2318 = vpop.permute.xlu0 %2317
      %2319 = vrot.lane.b32.xlu0 %v2298, 96
      %v2320 = vpop.permute.xlu0 %2319
      %v2323 = vsel %vm1566, %v2228, %v2302
      %v2324 = vsel %vm1566, %v2295, %v2304
      %vm2325 = vcmask 523264
      %v2326 = vsel %vm2325, %v2323, %v2310
      %v2327 = vsel %vm2325, %v2324, %v2312
      %vm2328 = vcmask 785408
      %v2329 = vsel %vm2328, %v2326, %v2318
      %v2330 = vsel %vm2328, %v2327, %v2320
      %v2331 = vpack.c.bf16 %v2330, %v2329
      %v2332 = vld [vmem:[%s3] sm:$0xf]
      %v2333 = vld [vmem:[%s3 + $0x4] sm:$0xf]
      %v2334 = vld [vmem:[%s3 + $0x8] sm:$0xf]
      %v2335 = vld [vmem:[%s3 + $0xc] sm:$0xf]
      %v2336 = vld [vmem:[%s3 + $0x10] sm:$0xf]
      %v2337 = vld [vmem:[%s3 + $0x14] sm:$0xf]
      %v2338 = vld [vmem:[%s3 + $0x18] sm:$0xf]
      %v2339 = vld [vmem:[%s3 + $0x1c] sm:$0xf]
      %v2340 = vld [vmem:[%s3 + $0x20] sm:$0xf]
      %v2341 = vld [vmem:[%s3 + $0x24] sm:$0xf]
      %v2342 = vld [vmem:[%s3 + $0x28] sm:$0xf]
      %v2343 = vld [vmem:[%s3 + $0x2c] sm:$0xf]
      %v2344 = vld [vmem:[%s3 + $0x30] sm:$0xf]
      %v2345 = vld [vmem:[%s3 + $0x34] sm:$0xf]
      %v2346 = vld [vmem:[%s3 + $0x38] sm:$0xf]
      %v2347 = vld [vmem:[%s3 + $0x3c] sm:$0xf]
      %v2348 = vld [vmem:[%s4] sm:$0x1]
      %v2350 = vlaneseq
      %v2351 = vshrl.u32 %v2350, 7
      %v2352 = vsub.s32 0, %v2351
      %v2353 = vrot.slane %v2348, %v2352
      %v2371 = vunpack.c.l.b16 %v2332
      %v2372 = vunpack.c.l.b16 %v2333
      %v2373 = vunpack.c.l.b16 %v2334
      %v2374 = vunpack.c.l.b16 %v2335
      %v2375 = vunpack.c.l.b16 %v2336
      %v2376 = vunpack.c.l.b16 %v2337
      %v2377 = vunpack.c.l.b16 %v2338
      %v2378 = vunpack.c.l.b16 %v2339
      %v2379 = vunpack.c.l.b16 %v2340
      %v2380 = vunpack.c.l.b16 %v2341
      %v2381 = vunpack.c.l.b16 %v2342
      %v2382 = vunpack.c.l.b16 %v2343
      %v2383 = vunpack.c.l.b16 %v2344
      %v2384 = vunpack.c.l.b16 %v2345
      %v2385 = vunpack.c.l.b16 %v2346
      %v2386 = vunpack.c.l.b16 %v2347
      %v2387 = vpack.c.b16 %v2372, %v2371
      %v2388 = vpack.c.b16 %v2374, %v2373
      %v2389 = vpack.c.b16 %v2376, %v2375
      %v2390 = vpack.c.b16 %v2378, %v2377
      %v2391 = vpack.c.b16 %v2380, %v2379
      %v2392 = vpack.c.b16 %v2382, %v2381
      %v2393 = vpack.c.b16 %v2384, %v2383
      %v2394 = vpack.c.b16 %v2386, %v2385
      %2403 = vmatprep.subr.bf16.mxu0 0
      %2404 = vmatpush1.bf16.msra.mxu0 %v2387
      %2405 = vmatprep.subr.bf16.mxu0 0
      %2406 = vmatpush1.bf16.msra.mxu0 %v2388
      %2407 = vmatprep.subr.bf16.mxu0 0
      %2408 = vmatpush1.bf16.msra.mxu0 %v2389
      %2409 = vmatprep.subr.bf16.mxu0 0
      %2410 = vmatpush1.bf16.msra.mxu0 %v2390
      %2411 = vmatprep.subr.bf16.mxu0 0
      %2412 = vmatpush1.bf16.msra.mxu0 %v2391
      %2413 = vmatprep.subr.bf16.mxu0 0
      %2414 = vmatpush1.bf16.msra.mxu0 %v2392
      %2415 = vmatprep.subr.bf16.mxu0 0
      %2416 = vmatpush1.bf16.msra.mxu0 %v2393
      %2417 = vmatprep.subr.bf16.mxu0 0
      %2418 = vmatpush1.bf16.msra.mxu0 %v2394
      %2419 = vmatprep.subr.bf16.mxu0 0
      %2420 = vmatpush1.bf16.msra.mxu0 0
      %2421 = vmatprep.subr.bf16.mxu0 0
      %2422 = vmatpush1.bf16.msra.mxu0 0
      %2423 = vmatprep.subr.bf16.mxu0 0
      %2424 = vmatpush1.bf16.msra.mxu0 0
      %2425 = vmatprep.subr.bf16.mxu0 0
      %2426 = vmatpush1.bf16.msra.mxu0 0
      %2427 = vmatprep.subr.bf16.mxu0 0
      %2428 = vmatpush1.bf16.msra.mxu0 0
      %2429 = vmatprep.subr.bf16.mxu0 0
      %2430 = vmatpush1.bf16.msra.mxu0 0
      %2431 = vmatprep.subr.bf16.mxu0 0
      %2432 = vmatpush1.bf16.msra.mxu0 0
      %2433 = vmatprep.subr.bf16.mxu0 0
      %2434 = vmatpush1.bf16.msra.mxu0 0
      %2435 = vmatprep.mubr.bf16.mxu0 0
      %2436 = vmatmul.mubr.bf16.gmra.mrb[0].mxu0 %v2331
      %v2437 = vpop.f32.mrb[0].mxu0
      %v2438 = vadd.f32 %v2353, %v2437
      %v2439 = vpop.f32.mrb[0].mxu0
      %v2440 = vpop.f32.mrb[0].mxu0
      %v2441 = vadd.f32 %v2353, %v2440
      %v2442 = vpop.f32.mrb[0].mxu0
      %2443 = vdwg.mxu0
      %v2444 = vunpack.c.l.bf16 %v442
      %v2445 = vunpack.c.l.bf16 %v443
      %v2446 = vadd.f32 %v2444, %v2438
      %v2447 = vadd.f32 %v2445, %v2441
      %v2448 = vld [vmem:[%s5] sm:$0x1]
      %v2449 = vld [vmem:[%s6] sm:$0x1]
      %2450 = vadd.xlane.f32.xlu0 %v2446
      %v2451 = vpop.xlane.xlu0 %2450
      %vm2452 = vcmask 1045504
      %v2453 = vsel %vm2452, %v2447, 0.0
      %2454 = vadd.xlane.f32.xlu0 %v2453
      %v2455 = vpop.xlane.xlu0 %2454
      %v2456 = vrcp.pop 128.0
      %v2457 = vmul.f32 %v2451, %v2456
      %v2458 = vmul.f32 %v2455, %v2456
      %v2459 = vsub.f32 %v2446, %v2457
      %v2460 = vsub.f32 %v2447, %v2458
      %v2461 = vmul.f32 %v2459, %v2459
      %v2462 = vmul.f32 %v2460, %v2460
      %2463 = vadd.xlane.f32.xlu0 %v2461
      %v2464 = vpop.xlane.xlu0 %2463
      %v2465 = vsel %vm2452, %v2462, 0.0
      %2466 = vadd.xlane.f32.xlu0 %v2465
      %v2467 = vpop.xlane.xlu0 %2466
      %v2468 = vmul.f32 %v2464, %v2456
      %v2469 = vmul.f32 %v2467, %v2456
      %v2470 = vadd.f32 %v2468, 1e-05
      %v2471 = vadd.f32 %v2469, 1e-05
      %v2472 = vrsqrt.pop %v2470
      %v2473 = vrsqrt.pop %v2471
      %v2474 = vmul.f32 %v2459, %v2472
      %v2475 = vmul.f32 %v2460, %v2473
      %v2477 = vlaneseq
      %v2478 = vshrl.u32 %v2477, 7
      %v2479 = vsub.s32 0, %v2478
      %v2480 = vrot.slane %v2448, %v2479
      %v2482 = vmul.f32 %v2474, %v2480
      %v2483 = vmul.f32 %v2475, %v2480
      %v2485 = vlaneseq
      %v2486 = vshrl.u32 %v2485, 7
      %v2487 = vsub.s32 0, %v2486
      %v2488 = vrot.slane %v2449, %v2487
      %v2490 = vadd.f32 %v2482, %v2488
      %v2491 = vadd.f32 %v2483, %v2488
      %v2492 = vpack.c.bf16 %v2491, %v2490
      %v2493 = vld [vmem:[%s7] sm:$0xff]
      %v2494 = vld [vmem:[%s7 + $0x8] sm:$0xff]
      %v2495 = vld [vmem:[%s7 + $0x10] sm:$0xff]
      %v2496 = vld [vmem:[%s7 + $0x18] sm:$0xff]
      %v2497 = vld [vmem:[%s7 + $0x20] sm:$0xff]
      %v2498 = vld [vmem:[%s7 + $0x28] sm:$0xff]
      %v2499 = vld [vmem:[%s7 + $0x30] sm:$0xff]
      %v2500 = vld [vmem:[%s7 + $0x38] sm:$0xff]
      %v2501 = vld [vmem:[%s7 + $0x40] sm:$0xff]
      %v2502 = vld [vmem:[%s7 + $0x48] sm:$0xff]
      %v2503 = vld [vmem:[%s7 + $0x50] sm:$0xff]
      %v2504 = vld [vmem:[%s7 + $0x58] sm:$0xff]
      %v2505 = vld [vmem:[%s7 + $0x60] sm:$0xff]
      %v2506 = vld [vmem:[%s7 + $0x68] sm:$0xff]
      %v2507 = vld [vmem:[%s7 + $0x70] sm:$0xff]
      %v2508 = vld [vmem:[%s7 + $0x78] sm:$0xff]
      %v2509 = vld [vmem:[%s8] sm:$0x3]
      %v2511 = vlaneseq
      %v2512 = vshrl.u32 %v2511, 7
      %v2513 = vsub.s32 0, %v2512
      %v2514 = vrot.slane %v2509, %v2513
      %v2515 = vlaneseq
      %v2516 = vshrl.u32 %v2515, 7
      %v2517 = vsub.s32 1, %v2516
      %v2518 = vrot.slane %v2509, %v2517
      %v2537 = vunpack.c.l.b16 %v2493
      %v2538 = vunpack.c.h.b16 %v2493
      %v2539 = vunpack.c.l.b16 %v2494
      %v2540 = vunpack.c.h.b16 %v2494
      %v2541 = vunpack.c.l.b16 %v2495
      %v2542 = vunpack.c.h.b16 %v2495
      %v2543 = vunpack.c.l.b16 %v2496
      %v2544 = vunpack.c.h.b16 %v2496
      %v2545 = vunpack.c.l.b16 %v2497
      %v2546 = vunpack.c.h.b16 %v2497
      %v2547 = vunpack.c.l.b16 %v2498
      %v2548 = vunpack.c.h.b16 %v2498
      %v2549 = vunpack.c.l.b16 %v2499
      %v2550 = vunpack.c.h.b16 %v2499
      %v2551 = vunpack.c.l.b16 %v2500
      %v2552 = vunpack.c.h.b16 %v2500
      %v2553 = vunpack.c.l.b16 %v2501
      %v2554 = vunpack.c.h.b16 %v2501
      %v2555 = vunpack.c.l.b16 %v2502
      %v2556 = vunpack.c.h.b16 %v2502
      %v2557 = vunpack.c.l.b16 %v2503
      %v2558 = vunpack.c.h.b16 %v2503
      %v2559 = vunpack.c.l.b16 %v2504
      %v2560 = vunpack.c.h.b16 %v2504
      %v2561 = vunpack.c.l.b16 %v2505
      %v2562 = vunpack.c.h.b16 %v2505
      %v2563 = vunpack.c.l.b16 %v2506
      %v2564 = vunpack.c.h.b16 %v2506
      %v2565 = vunpack.c.l.b16 %v2507
      %v2566 = vunpack.c.h.b16 %v2507
      %v2567 = vunpack.c.l.b16 %v2508
      %v2568 = vunpack.c.h.b16 %v2508
      %v2569 = vpack.c.b16 %v2539, %v2537
      %v2570 = vpack.c.b16 %v2540, %v2538
      %v2571 = vpack.c.b16 %v2543, %v2541
      %v2572 = vpack.c.b16 %v2544, %v2542
      %v2573 = vpack.c.b16 %v2547, %v2545
      %v2574 = vpack.c.b16 %v2548, %v2546
      %v2575 = vpack.c.b16 %v2551, %v2549
      %v2576 = vpack.c.b16 %v2552, %v2550
      %v2577 = vpack.c.b16 %v2555, %v2553
      %v2578 = vpack.c.b16 %v2556, %v2554
      %v2579 = vpack.c.b16 %v2559, %v2557
      %v2580 = vpack.c.b16 %v2560, %v2558
      %v2581 = vpack.c.b16 %v2563, %v2561
      %v2582 = vpack.c.b16 %v2564, %v2562
      %v2583 = vpack.c.b16 %v2567, %v2565
      %v2584 = vpack.c.b16 %v2568, %v2566
      %2601 = vmatprep.subr.bf16.mxu0 %v2570
      %2602 = vmatpush1.bf16.msra.mxu0 %v2569
      %2603 = vmatprep.subr.bf16.mxu0 %v2572
      %2604 = vmatpush1.bf16.msra.mxu0 %v2571
      %2605 = vmatprep.subr.bf16.mxu0 %v2574
      %2606 = vmatpush1.bf16.msra.mxu0 %v2573
      %2607 = vmatprep.subr.bf16.mxu0 %v2576
      %2608 = vmatpush1.bf16.msra.mxu0 %v2575
      %2609 = vmatprep.subr.bf16.mxu0 %v2578
      %2610 = vmatpush1.bf16.msra.mxu0 %v2577
      %2611 = vmatprep.subr.bf16.mxu0 %v2580
      %2612 = vmatpush1.bf16.msra.mxu0 %v2579
      %2613 = vmatprep.subr.bf16.mxu0 %v2582
      %2614 = vmatpush1.bf16.msra.mxu0 %v2581
      %2615 = vmatprep.subr.bf16.mxu0 %v2584
      %2616 = vmatpush1.bf16.msra.mxu0 %v2583
      %2617 = vmatprep.subr.bf16.mxu0 0
      %2618 = vmatpush1.bf16.msra.mxu0 0
      %2619 = vmatprep.subr.bf16.mxu0 0
      %2620 = vmatpush1.bf16.msra.mxu0 0
      %2621 = vmatprep.subr.bf16.mxu0 0
      %2622 = vmatpush1.bf16.msra.mxu0 0
      %2623 = vmatprep.subr.bf16.mxu0 0
      %2624 = vmatpush1.bf16.msra.mxu0 0
      %2625 = vmatprep.subr.bf16.mxu0 0
      %2626 = vmatpush1.bf16.msra.mxu0 0
      %2627 = vmatprep.subr.bf16.mxu0 0
      %2628 = vmatpush1.bf16.msra.mxu0 0
      %2629 = vmatprep.subr.bf16.mxu0 0
      %2630 = vmatpush1.bf16.msra.mxu0 0
      %2631 = vmatprep.subr.bf16.mxu0 0
      %2632 = vmatpush1.bf16.msra.mxu0 0
      %2633 = vmatprep.mubr.bf16.mxu0 0
      %2634 = vmatmul.mubr.bf16.gmra.mrb[0].mxu0 %v2492
      %v2635 = vpop.f32.mrb[0].mxu0
      %v2636 = vadd.f32 %v2514, %v2635
      %v2637 = vpop.f32.mrb[0].mxu0
      %v2638 = vadd.f32 %v2518, %v2637
      %v2639 = vpop.f32.mrb[0].mxu0
      %v2640 = vadd.f32 %v2514, %v2639
      %v2641 = vpop.f32.mrb[0].mxu0
      %v2642 = vadd.f32 %v2518, %v2641
      %2643 = vdwg.mxu0
      %v2644 = vmul.f32 %v2636, %v2636
      %v2645 = vmul.f32 %v2638, %v2638
      %v2646 = vmul.f32 %v2640, %v2640
      %v2647 = vmul.f32 %v2642, %v2642
      %v2648 = vmul.f32 %v2636, %v2644
      %v2649 = vmul.f32 %v2638, %v2645
      %v2650 = vmul.f32 %v2640, %v2646
      %v2651 = vmul.f32 %v2642, %v2647
      %v2652 = vmul.f32 %v2648, 0.044715
      %v2653 = vmul.f32 %v2649, 0.044715
      %v2654 = vmul.f32 %v2650, 0.044715
      %v2655 = vmul.f32 %v2651, 0.044715
      %v2656 = vadd.f32 %v2636, %v2652
      %v2657 = vadd.f32 %v2638, %v2653
      %v2658 = vadd.f32 %v2640, %v2654
      %v2659 = vadd.f32 %v2642, %v2655
      %v2660 = vmul.f32 %v2656, 0.7978846
      %v2661 = vmul.f32 %v2657, 0.7978846
      %v2662 = vmul.f32 %v2658, 0.7978846
      %v2663 = vmul.f32 %v2659, 0.7978846
      %v2664 = vtanh.pop %v2660
      %v2665 = vtanh.pop %v2661
      %v2666 = vtanh.pop %v2662
      %v2667 = vtanh.pop %v2663
      %v2668 = vadd.f32 %v2664, 1.0
      %v2669 = vadd.f32 %v2665, 1.0
      %v2670 = vadd.f32 %v2666, 1.0
      %v2671 = vadd.f32 %v2667, 1.0
      %v2672 = vmul.f32 %v2668, 0.5
      %v2673 = vmul.f32 %v2669, 0.5
      %v2674 = vmul.f32 %v2670, 0.5
      %v2675 = vmul.f32 %v2671, 0.5
      %v2676 = vmul.f32 %v2636, %v2672
      %v2677 = vmul.f32 %v2638, %v2673
      %v2678 = vmul.f32 %v2640, %v2674
      %v2679 = vmul.f32 %v2642, %v2675
      %v2680 = vpack.c.bf16 %v2678, %v2676
      %v2681 = vpack.c.bf16 %v2679, %v2677
      %v2682 = vld [vmem:[%s9] sm:$0xf]
      %v2683 = vld [vmem:[%s9 + $0x4] sm:$0xf]
      %v2684 = vld [vmem:[%s9 + $0x8] sm:$0xf]
      %v2685 = vld [vmem:[%s9 + $0xc] sm:$0xf]
      %v2686 = vld [vmem:[%s9 + $0x10] sm:$0xf]
      %v2687 = vld [vmem:[%s9 + $0x14] sm:$0xf]
      %v2688 = vld [vmem:[%s9 + $0x18] sm:$0xf]
      %v2689 = vld [vmem:[%s9 + $0x1c] sm:$0xf]
      %v2690 = vld [vmem:[%s9 + $0x20] sm:$0xf]
      %v2691 = vld [vmem:[%s9 + $0x24] sm:$0xf]
      %v2692 = vld [vmem:[%s9 + $0x28] sm:$0xf]
      %v2693 = vld [vmem:[%s9 + $0x2c] sm:$0xf]
      %v2694 = vld [vmem:[%s9 + $0x30] sm:$0xf]
      %v2695 = vld [vmem:[%s9 + $0x34] sm:$0xf]
      %v2696 = vld [vmem:[%s9 + $0x38] sm:$0xf]
      %v2697 = vld [vmem:[%s9 + $0x3c] sm:$0xf]
      %v2698 = vld [vmem:[%s9 + $0x40] sm:$0xf]
      %v2699 = vld [vmem:[%s9 + $0x44] sm:$0xf]
      %v2700 = vld [vmem:[%s9 + $0x48] sm:$0xf]
      %v2701 = vld [vmem:[%s9 + $0x4c] sm:$0xf]
      %v2702 = vld [vmem:[%s9 + $0x50] sm:$0xf]
      %v2703 = vld [vmem:[%s9 + $0x54] sm:$0xf]
      %v2704 = vld [vmem:[%s9 + $0x58] sm:$0xf]
      %v2705 = vld [vmem:[%s9 + $0x5c] sm:$0xf]
      %v2706 = vld [vmem:[%s9 + $0x60] sm:$0xf]
      %v2707 = vld [vmem:[%s9 + $0x64] sm:$0xf]
      %v2708 = vld [vmem:[%s9 + $0x68] sm:$0xf]
      %v2709 = vld [vmem:[%s9 + $0x6c] sm:$0xf]
      %v2710 = vld [vmem:[%s9 + $0x70] sm:$0xf]
      %v2711 = vld [vmem:[%s9 + $0x74] sm:$0xf]
      %v2712 = vld [vmem:[%s9 + $0x78] sm:$0xf]
      %v2713 = vld [vmem:[%s9 + $0x7c] sm:$0xf]
      %v2714 = vld [vmem:[%s10] sm:$0x1]
      %v2716 = vlaneseq
      %v2717 = vshrl.u32 %v2716, 7
      %v2718 = vsub.s32 0, %v2717
      %v2719 = vrot.slane %v2714, %v2718
      %v2753 = vunpack.c.l.b16 %v2682
      %v2754 = vunpack.c.l.b16 %v2683
      %v2755 = vunpack.c.l.b16 %v2684
      %v2756 = vunpack.c.l.b16 %v2685
      %v2757 = vunpack.c.l.b16 %v2686
      %v2758 = vunpack.c.l.b16 %v2687
      %v2759 = vunpack.c.l.b16 %v2688
      %v2760 = vunpack.c.l.b16 %v2689
      %v2761 = vunpack.c.l.b16 %v2690
      %v2762 = vunpack.c.l.b16 %v2691
      %v2763 = vunpack.c.l.b16 %v2692
      %v2764 = vunpack.c.l.b16 %v2693
      %v2765 = vunpack.c.l.b16 %v2694
      %v2766 = vunpack.c.l.b16 %v2695
      %v2767 = vunpack.c.l.b16 %v2696
      %v2768 = vunpack.c.l.b16 %v2697
      %v2769 = vunpack.c.l.b16 %v2698
      %v2770 = vunpack.c.l.b16 %v2699
      %v2771 = vunpack.c.l.b16 %v2700
      %v2772 = vunpack.c.l.b16 %v2701
      %v2773 = vunpack.c.l.b16 %v2702
      %v2774 = vunpack.c.l.b16 %v2703
      %v2775 = vunpack.c.l.b16 %v2704
      %v2776 = vunpack.c.l.b16 %v2705
      %v2777 = vunpack.c.l.b16 %v2706
      %v2778 = vunpack.c.l.b16 %v2707
      %v2779 = vunpack.c.l.b16 %v2708
      %v2780 = vunpack.c.l.b16 %v2709
      %v2781 = vunpack.c.l.b16 %v2710
      %v2782 = vunpack.c.l.b16 %v2711
      %v2783 = vunpack.c.l.b16 %v2712
      %v2784 = vunpack.c.l.b16 %v2713
      %v2785 = vpack.c.b16 %v2754, %v2753
      %v2786 = vpack.c.b16 %v2756, %v2755
      %v2787 = vpack.c.b16 %v2758, %v2757
      %v2788 = vpack.c.b16 %v2760, %v2759
      %v2789 = vpack.c.b16 %v2762, %v2761
      %v2790 = vpack.c.b16 %v2764, %v2763
      %v2791 = vpack.c.b16 %v2766, %v2765
      %v2792 = vpack.c.b16 %v2768, %v2767
      %v2793 = vpack.c.b16 %v2770, %v2769
      %v2794 = vpack.c.b16 %v2772, %v2771
      %v2795 = vpack.c.b16 %v2774, %v2773
      %v2796 = vpack.c.b16 %v2776, %v2775
      %v2797 = vpack.c.b16 %v2778, %v2777
      %v2798 = vpack.c.b16 %v2780, %v2779
      %v2799 = vpack.c.b16 %v2782, %v2781
      %v2800 = vpack.c.b16 %v2784, %v2783
      %2817 = vmatprep.subr.bf16.mxu0 0
      %2818 = vmatpush1.bf16.msra.mxu0 %v2785
      %2819 = vmatprep.subr.bf16.mxu0 0
      %2820 = vmatpush1.bf16.msra.mxu0 %v2786
      %2821 = vmatprep.subr.bf16.mxu0 0
      %2822 = vmatpush1.bf16.msra.mxu0 %v2787
      %2823 = vmatprep.subr.bf16.mxu0 0
      %2824 = vmatpush1.bf16.msra.mxu0 %v2788
      %2825 = vmatprep.subr.bf16.mxu0 0
      %2826 = vmatpush1.bf16.msra.mxu0 %v2789
      %2827 = vmatprep.subr.bf16.mxu0 0
      %2828 = vmatpush1.bf16.msra.mxu0 %v2790
      %2829 = vmatprep.subr.bf16.mxu0 0
      %2830 = vmatpush1.bf16.msra.mxu0 %v2791
      %2831 = vmatprep.subr.bf16.mxu0 0
      %2832 = vmatpush1.bf16.msra.mxu0 %v2792
      %2833 = vmatprep.subr.bf16.mxu0 0
      %2834 = vmatpush1.bf16.msra.mxu0 %v2793
      %2835 = vmatprep.subr.bf16.mxu0 0
      %2836 = vmatpush1.bf16.msra.mxu0 %v2794
      %2837 = vmatprep.subr.bf16.mxu0 0
      %2838 = vmatpush1.bf16.msra.mxu0 %v2795
      %2839 = vmatprep.subr.bf16.mxu0 0
      %2840 = vmatpush1.bf16.msra.mxu0 %v2796
      %2841 = vmatprep.subr.bf16.mxu0 0
      %2842 = vmatpush1.bf16.msra.mxu0 %v2797
      %2843 = vmatprep.subr.bf16.mxu0 0
      %2844 = vmatpush1.bf16.msra.mxu0 %v2798
      %2845 = vmatprep.subr.bf16.mxu0 0
      %2846 = vmatpush1.bf16.msra.mxu0 %v2799
      %2847 = vmatprep.subr.bf16.mxu0 0
      %2848 = vmatpush1.bf16.msra.mxu0 %v2800
      %2849 = vmatprep.mubr.bf16.mxu0 %v2681
      %2850 = vmatmul.mubr.bf16.gmra.mrb[0].mxu0 %v2680
      %v2851 = vpop.f32.mrb[0].mxu0
      %v2852 = vadd.f32 %v2719, %v2851
      %v2853 = vpop.f32.mrb[0].mxu0
      %v2854 = vpop.f32.mrb[0].mxu0
      %v2855 = vadd.f32 %v2719, %v2854
      %v2856 = vpop.f32.mrb[0].mxu0
      %2857 = vdwg.mxu0
      %v2858 = vadd.f32 %v2490, %v2852
      %v2859 = vadd.f32 %v2491, %v2855
      %v2860 = vld [vmem:[%s11] sm:$0x1]
      %v2861 = vld [vmem:[%s12] sm:$0x1]
      %2862 = vadd.xlane.f32.xlu0 %v2858
      %v2863 = vpop.xlane.xlu0 %2862
      %v2864 = vsel %vm2452, %v2859, 0.0
      %2865 = vadd.xlane.f32.xlu0 %v2864
      %v2866 = vpop.xlane.xlu0 %2865
      %v2867 = vmul.f32 %v2863, %v2456
      %v2868 = vmul.f32 %v2866, %v2456
      %v2869 = vsub.f32 %v2858, %v2867
      %v2870 = vsub.f32 %v2859, %v2868
      %v2871 = vmul.f32 %v2869, %v2869
      %v2872 = vmul.f32 %v2870, %v2870
      %2873 = vadd.xlane.f32.xlu0 %v2871
      %v2874 = vpop.xlane.xlu0 %2873
      %v2875 = vsel %vm2452, %v2872, 0.0
      %2876 = vadd.xlane.f32.xlu0 %v2875
      %v2877 = vpop.xlane.xlu0 %2876
      %v2878 = vmul.f32 %v2874, %v2456
      %v2879 = vmul.f32 %v2877, %v2456
      %v2880 = vadd.f32 %v2878, 1e-05
      %v2881 = vadd.f32 %v2879, 1e-05
      %v2882 = vrsqrt.pop %v2880
      %v2883 = vrsqrt.pop %v2881
      %v2884 = vmul.f32 %v2869, %v2882
      %v2885 = vmul.f32 %v2870, %v2883
      %v2887 = vlaneseq
      %v2888 = vshrl.u32 %v2887, 7
      %v2889 = vsub.s32 0, %v2888
      %v2890 = vrot.slane %v2860, %v2889
      %v2892 = vmul.f32 %v2884, %v2890
      %v2893 = vmul.f32 %v2885, %v2890
      %v2895 = vlaneseq
      %v2896 = vshrl.u32 %v2895, 7
      %v2897 = vsub.s32 0, %v2896
      %v2898 = vrot.slane %v2861, %v2897
      %v2900 = vadd.f32 %v2892, %v2898
      %v2901 = vadd.f32 %v2893, %v2898
      %v2902 = vpack.c.bf16 %v2901, %v2900
      %v2904 = vunpack.c.l.b16 %v2902
      %v2905 = vunpack.c.h.b16 %v2902
      %v2906 = vpack.c.b16 %v2904, %v2904
      %v2907 = vpack.c.b16 %v2905, %v2905
      %2910 = vst [vmem:[%s440] sm:$0xf] %v2906
      %2911 = vst [vmem:[%s440 + $0x4] sm:$0x7] %v2907
      %p2912 = scmp.lt.s32.totalorder %s24, 1
      %s2913 = scalar_select %p2912, %s24, 1
      %s2914 = smul.addr %s2913, 2
      %s2915 = smul.addr %s2914, 4
      %s2916 = scalar_lea.vmem %s13, %s2915
      // Predicated region
      $region73: #{aves_forward.8} parent=71 // pred_check
        %p2917 = pneg %p320
      $region74: #{aves_forward.8} parent=71 // pred_check_branch
        %2919 = sbr.rel (%p2917) target = $region76
      $region75: #{aves_forward.8} parent=71 // pred_region
        _
      $region76: #{aves_forward.8} parent=71 // pred_fallthru
        _
    $region72: #{aves_forward.8} parent=5 // pred_fallthru
      _
    %p2920 = scmp.le.s32.totalorder 2, %s19
    // Predicated region
    $region77: #{aves_forward.8} parent=5 // pred_check
      %p2921 = pneg %p2920
    $region78: #{aves_forward.8} parent=5 // pred_check_branch
      %2923 = sbr.rel (%p2921) target = $region80
    $region79: #{aves_forward.8} parent=5 // pred_region
      %s2924 = ssub.s32 %s19, 2
      // Predicated region
      $region81: #{aves_forward.8} parent=79 // pred_check
        %p2925 = pneg %p326
      $region82: #{aves_forward.8} parent=79 // pred_check_branch
        %2927 = sbr.rel (%p2925) target = $region84
      $region83: #{aves_forward.8} parent=79 // pred_region
        %p2928 = scmp.lt.s32.totalorder %s25, 1
        %s2929 = scalar_select %p2928, %s25, 1
        %s2930 = smul.addr %s2929, 2
        %s2931 = smul.addr %s2930, 4
        %s2932 = scalar_lea.vmem %s13, %s2931
      $region84: #{aves_forward.8} parent=79 // pred_fallthru
        _
    $region80: #{aves_forward.8} parent=5 // pred_fallthru
      _
  $region6: #{aves_forward.8} parent=0 // loop_footer
    %s23 = sadd.s32 1, %s19
  $region7: #{aves_forward.8} parent=0 // loop_footer_branch
    %18 = sbr.rel target = $region3
  $region8: #{aves_forward.8} parent=0 // loop_exit
    _

</llo_original>
